<compile_context>
chip_gen: v7x
topology: tpu7x:2x2x1
jax: 0.10.0
libtpu: 0.0.40
codegen_flags: <defaults>
</compile_context>

<pallas_src>
import numpy as np
import jax
import jax.numpy as jnp
from jax import lax
from jax.experimental import pallas as pl
from jax.experimental.pallas import tpu as pltpu

_BIG = 1e30      # sentinel: relu(a - _BIG) == 0 for non-"sim" (i, s) pairs
_ROW_BLK = 8     # rows of `i` processed per block in the hinge reduction


def _hinge_loss_kernel(ids_col_ref, ids_row_ref, feats_ref, o_ref):
    feats = feats_ref[...]                       # [B, Fp] (Fp lane-aligned)
    if feats.dtype != jnp.float32:
        feats = feats.astype(jnp.float32)
    id_col = ids_col_ref[...]                    # [B, 1] f32 (exact for |id| < 2^24)
    id_row = ids_row_ref[...]                    # [1, B] f32
    B = feats.shape[0]

    # --- cosine matrix: normalize rows first, then one MXU Gram matmul -------
    sq = jnp.sum(feats * feats, axis=1, keepdims=True)             # [B, 1]
    feats_n = feats * lax.rsqrt(sq + 1e-8)                         # rsqrt -> EUP
    cosine = lax.dot_general(
        feats_n, feats_n, (((1,), (1,)), ((), ())),
        preferred_element_type=jnp.float32)                        # [B, B], symmetric

    # --- pair masks / margin (one-time full-tile VPU work) --------------------
    same = id_col == id_row                                        # [B, B]
    row_i = lax.broadcasted_iota(jnp.int32, (B, B), 0)
    col_i = lax.broadcasted_iota(jnp.int32, (B, B), 1)
    sim = jnp.logical_and(same, row_i != col_i)                    # same id, s != i
    dif_f = jnp.logical_not(same).astype(jnp.float32)              # diag auto-excluded
    margin = 0.15 * jnp.abs(id_col - id_row)                       # [B, B]

    # --- per-row constants, hoisted out of the loop ---------------------------
    sim_n = jnp.sum(sim.astype(jnp.float32), axis=1, keepdims=True)   # [B, 1]
    dif_n = jnp.sum(dif_f, axis=1, keepdims=True)                      # [B, 1]
    valid = jnp.logical_and(sim_n > 0.0, dif_n > 0.0)                  # [B, 1]
    inv_denom = jnp.where(valid, 1.0 / jnp.maximum(sim_n * dif_n, 1.0), 0.0)
    cnt = jnp.sum(valid.astype(jnp.float32))

    a_mat = margin + cosine            # a_mat[i, d] = margin(i,d) + cos(i,d)
    w_mat = dif_f * inv_denom          # w_mat[i, d] = dif(i,d) / (sim_n*dif_n), 0 if invalid
    # cm[i, s] = cos(i, s) if sim(i, s) else +BIG; both factors are symmetric,
    # so cm is symmetric and the "column" slab for rows i0..i0+blk is just
    # cm[i0:i0+blk, :] -- no transpose / per-i lane extraction needed.
    cm = jnp.where(sim, cosine, _BIG)

    # --- blocked hinge reduction: 8 rows of i at a time ------------------------
    acc = jnp.zeros((1, B), jnp.float32)                           # d on lanes
    for i0 in range(0, B, _ROW_BLK):
        blk = min(_ROW_BLK, B - i0)
        cm_blk = cm[i0:i0 + blk, :]      # [blk, B]  cm_blk[b, s]
        a_blk = a_mat[i0:i0 + blk, :]    # [blk, B]  a_blk[b, d]
        w_blk = w_mat[i0:i0 + blk, :]    # [blk, B]
        # hinge[b, s, d] = relu(margin(i,d) + cos(i,d) - cos(i,s)), 0 off the sim set
        hinge = jnp.maximum(a_blk[:, None, :] - cm_blk[:, :, None], 0.0)  # [blk, B, B]
        contrib = jnp.sum(hinge, axis=1) * w_blk                           # [blk, B]
        acc = acc + jnp.sum(contrib, axis=0, keepdims=True)                # [1, B]
    # Single lane reduce at the very end.
    o_ref[0, 0] = jnp.sum(acc) / jnp.maximum(cnt, 1.0)


@jax.jit
def hinge_loss(ids, feats):
    """ids: [B, 1] integer-valued class ids, feats: [B, F]. Returns scalar f32 loss."""
    B, F = feats.shape
    ids_f = ids.reshape(-1).astype(jnp.float32)     # tiny [B] vector
    # Lane-align the feature (contraction) dim; zeros don't change norms or dots.
    F_pad = ((F + 127) // 128) * 128
    feats_p = feats if F_pad == F else jnp.pad(feats, ((0, 0), (0, F_pad - F)))
    out = pl.pallas_call(
        _hinge_loss_kernel,
        out_shape=jax.ShapeDtypeStruct((1, 1), jnp.float32),
        in_specs=[
            pl.BlockSpec(memory_space=pltpu.MemorySpace.VMEM),  # ids as [B, 1]
            pl.BlockSpec(memory_space=pltpu.MemorySpace.VMEM),  # ids as [1, B]
            pl.BlockSpec(memory_space=pltpu.MemorySpace.VMEM),  # feats [B, F_pad]
        ],
        out_specs=pl.BlockSpec(memory_space=pltpu.MemorySpace.SMEM),
    )(ids_f.reshape(B, 1), ids_f.reshape(1, B), feats_p)
    return out[0, 0]


def _reference_hinge_loss(ids, feats):
    """Pure numpy mirror of the PyTorch forward (sanity check)."""
    ids = np.asarray(ids, np.float64).reshape(-1)
    feats = np.asarray(feats, np.float64)
    B, _ = feats.shape
    norms = np.maximum(np.sqrt((feats ** 2).sum(1) + 1e-8), 1e-8)
    cos = (feats @ feats.T) / np.outer(norms, norms)
    loss = 0.0
    loss_num = 0
    for i in range(B):
        sim = [j for j in range(B) if j != i and ids[j] == ids[i]]
        dif = [j for j in range(B) if j != i and ids[j] != ids[i]]
        if not sim or not dif:
            continue
        vals = []
        for s in sim:
            for d in dif:
                m = 0.15 * abs(ids[i] - ids[d])
                vals.append(max(0.0, m - cos[i, s] + cos[i, d]))
        loss += float(np.mean(vals))
        loss_num += 1
    return np.float32(loss / max(loss_num, 1))


if __name__ == "__main__":
    # Shapes matching the module's forward docstring: ids [48, 1], feats [48, 100].
    B, F = 48, 100
    key = jax.random.PRNGKey(0)
    k_ids, k_feats = jax.random.split(key)
    ids = jax.random.randint(k_ids, (B, 1), 0, 3).astype(jnp.int32)   # a few classes
    feats = jax.random.normal(k_feats, (B, F), dtype=jnp.float32)

    loss = hinge_loss(ids, feats)
    loss = jax.block_until_ready(loss)

    ref = _reference_hinge_loss(np.asarray(ids), np.asarray(feats))
    np.testing.assert_allclose(np.asarray(loss), ref, rtol=1e-3, atol=1e-5)

    print("KERNEL_OK")
</pallas_src>

<mosaic_0001>
module attributes {stable_mosaic.version = 11 : i64} {
  func.func @_hinge_loss_kernel(%arg0: memref<48x1xf32, #tpu.memory_space<vmem>>, %arg1: memref<1x48xf32, #tpu.memory_space<vmem>>, %arg2: memref<48x128xf32, #tpu.memory_space<vmem>>, %arg3: memref<1x1xf32, #tpu.memory_space<smem>>) attributes {dimension_semantics = [], scalar_prefetch = 0 : i64, scratch_operands = 0 : i64, tpu.core_type = #tpu.core_type<tc>} {
    %c0 = arith.constant 0 : index
    %c0_0 = arith.constant 0 : index
    %0 = vector.load %arg2[%c0, %c0_0] : memref<48x128xf32, #tpu.memory_space<vmem>>, vector<48x128xf32>
    %c0_1 = arith.constant 0 : index
    %c0_2 = arith.constant 0 : index
    %1 = vector.load %arg0[%c0_1, %c0_2] : memref<48x1xf32, #tpu.memory_space<vmem>>, vector<48x1xf32>
    %c0_3 = arith.constant 0 : index
    %c0_4 = arith.constant 0 : index
    %2 = vector.load %arg1[%c0_3, %c0_4] : memref<1x48xf32, #tpu.memory_space<vmem>>, vector<1x48xf32>
    %3 = arith.mulf %0, %0 : vector<48x128xf32>
    %cst = arith.constant dense<0.000000e+00> : vector<48xf32>
    %4 = vector.multi_reduction <add>, %3, %cst [1] : vector<48x128xf32> to vector<48xf32>
    %5 = vector.shape_cast %4 : vector<48xf32> to vector<48x1xf32>
    %cst_5 = arith.constant 9.99999993E-9 : f32
    %6 = vector.broadcast %cst_5 : f32 to vector<48x1xf32>
    %7 = arith.addf %5, %6 : vector<48x1xf32>
    %8 = math.rsqrt %7 : vector<48x1xf32>
    %9 = vector.broadcast %8 : vector<48x1xf32> to vector<48x128xf32>
    %10 = arith.mulf %0, %9 : vector<48x128xf32>
    %cst_6 = arith.constant dense<0.000000e+00> : vector<48x48xf32>
    %11 = tpu.matmul %10, %10, %cst_6 {dimension_numbers = #tpu.dot_dimension_numbers<[1], [1], [0], [0], [0, 0, 1, 0], [], []>} : vector<48x128xf32>, vector<48x128xf32>, vector<48x48xf32> -> vector<48x48xf32>
    %12 = vector.broadcast %1 : vector<48x1xf32> to vector<48x48xf32>
    %13 = vector.broadcast %2 : vector<1x48xf32> to vector<48x48xf32>
    %14 = arith.cmpf oeq, %12, %13 : vector<48x48xf32>
    %15 = tpu.iota {dimensions = array<i32: 0>} : vector<48x48xi32>
    %16 = tpu.iota {dimensions = array<i32: 1>} : vector<48x48xi32>
    %17 = arith.cmpi ne, %15, %16 : vector<48x48xi32>
    %18 = arith.andi %14, %17 : vector<48x48xi1>
    %cst_7 = arith.constant dense<true> : vector<48x48xi1>
    %19 = arith.xori %14, %cst_7 : vector<48x48xi1>
    %20 = arith.extui %19 : vector<48x48xi1> to vector<48x48xi32>
    %21 = arith.sitofp %20 : vector<48x48xi32> to vector<48x48xf32>
    %22 = vector.broadcast %1 : vector<48x1xf32> to vector<48x48xf32>
    %23 = vector.broadcast %2 : vector<1x48xf32> to vector<48x48xf32>
    %24 = arith.subf %22, %23 : vector<48x48xf32>
    %25 = math.absf %24 : vector<48x48xf32>
    %cst_8 = arith.constant 1.500000e-01 : f32
    %26 = vector.broadcast %cst_8 : f32 to vector<48x48xf32>
    %27 = arith.mulf %26, %25 : vector<48x48xf32>
    %28 = arith.extui %18 : vector<48x48xi1> to vector<48x48xi32>
    %29 = arith.sitofp %28 : vector<48x48xi32> to vector<48x48xf32>
    %cst_9 = arith.constant dense<0.000000e+00> : vector<48xf32>
    %30 = vector.multi_reduction <add>, %29, %cst_9 [1] : vector<48x48xf32> to vector<48xf32>
    %31 = vector.shape_cast %30 : vector<48xf32> to vector<48x1xf32>
    %cst_10 = arith.constant dense<0.000000e+00> : vector<48xf32>
    %32 = vector.multi_reduction <add>, %21, %cst_10 [1] : vector<48x48xf32> to vector<48xf32>
    %33 = vector.shape_cast %32 : vector<48xf32> to vector<48x1xf32>
    %cst_11 = arith.constant 0.000000e+00 : f32
    %34 = vector.broadcast %cst_11 : f32 to vector<48x1xf32>
    %35 = arith.cmpf ogt, %31, %34 : vector<48x1xf32>
    %cst_12 = arith.constant 0.000000e+00 : f32
    %36 = vector.broadcast %cst_12 : f32 to vector<48x1xf32>
    %37 = arith.cmpf ogt, %33, %36 : vector<48x1xf32>
    %38 = arith.andi %35, %37 : vector<48x1xi1>
    %39 = arith.mulf %31, %33 : vector<48x1xf32>
    %cst_13 = arith.constant 1.000000e+00 : f32
    %40 = vector.broadcast %cst_13 : f32 to vector<48x1xf32>
    %41 = arith.maximumf %39, %40 : vector<48x1xf32>
    %cst_14 = arith.constant 1.000000e+00 : f32
    %42 = vector.broadcast %cst_14 : f32 to vector<48x1xf32>
    %43 = arith.divf %42, %41 : vector<48x1xf32>
    %cst_15 = arith.constant 0.000000e+00 : f32
    %44 = vector.broadcast %cst_15 : f32 to vector<48x1xf32>
    %45 = arith.select %38, %43, %44 : vector<48x1xi1>, vector<48x1xf32>
    %46 = arith.extui %38 : vector<48x1xi1> to vector<48x1xi32>
    %47 = arith.sitofp %46 : vector<48x1xi32> to vector<48x1xf32>
    %48 = vector.shape_cast %47 : vector<48x1xf32> to vector<1x48x1xf32>
    %cst_16 = arith.constant dense<0.000000e+00> : vector<1xf32>
    %49 = vector.multi_reduction <add>, %48, %cst_16 [1, 2] : vector<1x48x1xf32> to vector<1xf32>
    %50 = vector.shape_cast %49 : vector<1xf32> to vector<1x1x1xf32>
    %51 = vector.extract %50[0, 0, 0] : f32 from vector<1x1x1xf32>
    %52 = arith.addf %27, %11 : vector<48x48xf32>
    %53 = vector.broadcast %45 : vector<48x1xf32> to vector<48x48xf32>
    %54 = arith.mulf %21, %53 : vector<48x48xf32>
    %cst_17 = arith.constant 1.000000e+30 : f32
    %55 = vector.broadcast %cst_17 : f32 to vector<48x48xf32>
    %56 = arith.select %18, %11, %55 : vector<48x48xi1>, vector<48x48xf32>
    %cst_18 = arith.constant 0.000000e+00 : f32
    %57 = vector.broadcast %cst_18 : f32 to vector<1x48xf32>
    %58 = vector.extract_strided_slice %56 {offsets = [0, 0], sizes = [8, 48], strides = [1, 1]} : vector<48x48xf32> to vector<8x48xf32>
    %59 = vector.extract_strided_slice %52 {offsets = [0, 0], sizes = [8, 48], strides = [1, 1]} : vector<48x48xf32> to vector<8x48xf32>
    %60 = vector.extract_strided_slice %54 {offsets = [0, 0], sizes = [8, 48], strides = [1, 1]} : vector<48x48xf32> to vector<8x48xf32>
    %61 = vector.shape_cast %59 : vector<8x48xf32> to vector<8x1x48xf32>
    %62 = vector.shape_cast %58 : vector<8x48xf32> to vector<8x48x1xf32>
    %63 = vector.broadcast %61 : vector<8x1x48xf32> to vector<8x48x48xf32>
    %64 = vector.broadcast %62 : vector<8x48x1xf32> to vector<8x48x48xf32>
    %65 = arith.subf %63, %64 : vector<8x48x48xf32>
    %cst_19 = arith.constant 0.000000e+00 : f32
    %66 = vector.broadcast %cst_19 : f32 to vector<8x48x48xf32>
    %67 = arith.maximumf %65, %66 : vector<8x48x48xf32>
    %cst_20 = arith.constant dense<0.000000e+00> : vector<8x48xf32>
    %68 = vector.multi_reduction <add>, %67, %cst_20 [1] : vector<8x48x48xf32> to vector<8x48xf32>
    %69 = arith.mulf %68, %60 : vector<8x48xf32>
    %cst_21 = arith.constant dense<0.000000e+00> : vector<48xf32>
    %70 = vector.multi_reduction <add>, %69, %cst_21 [0] : vector<8x48xf32> to vector<48xf32>
    %71 = vector.shape_cast %70 : vector<48xf32> to vector<1x48xf32>
    %72 = arith.addf %57, %71 : vector<1x48xf32>
    %73 = vector.extract_strided_slice %56 {offsets = [8, 0], sizes = [8, 48], strides = [1, 1]} : vector<48x48xf32> to vector<8x48xf32>
    %74 = vector.extract_strided_slice %52 {offsets = [8, 0], sizes = [8, 48], strides = [1, 1]} : vector<48x48xf32> to vector<8x48xf32>
    %75 = vector.extract_strided_slice %54 {offsets = [8, 0], sizes = [8, 48], strides = [1, 1]} : vector<48x48xf32> to vector<8x48xf32>
    %76 = vector.shape_cast %74 : vector<8x48xf32> to vector<8x1x48xf32>
    %77 = vector.shape_cast %73 : vector<8x48xf32> to vector<8x48x1xf32>
    %78 = vector.broadcast %76 : vector<8x1x48xf32> to vector<8x48x48xf32>
    %79 = vector.broadcast %77 : vector<8x48x1xf32> to vector<8x48x48xf32>
    %80 = arith.subf %78, %79 : vector<8x48x48xf32>
    %cst_22 = arith.constant 0.000000e+00 : f32
    %81 = vector.broadcast %cst_22 : f32 to vector<8x48x48xf32>
    %82 = arith.maximumf %80, %81 : vector<8x48x48xf32>
    %cst_23 = arith.constant dense<0.000000e+00> : vector<8x48xf32>
    %83 = vector.multi_reduction <add>, %82, %cst_23 [1] : vector<8x48x48xf32> to vector<8x48xf32>
    %84 = arith.mulf %83, %75 : vector<8x48xf32>
    %cst_24 = arith.constant dense<0.000000e+00> : vector<48xf32>
    %85 = vector.multi_reduction <add>, %84, %cst_24 [0] : vector<8x48xf32> to vector<48xf32>
    %86 = vector.shape_cast %85 : vector<48xf32> to vector<1x48xf32>
    %87 = arith.addf %72, %86 : vector<1x48xf32>
    %88 = vector.extract_strided_slice %56 {offsets = [16, 0], sizes = [8, 48], strides = [1, 1]} : vector<48x48xf32> to vector<8x48xf32>
    %89 = vector.extract_strided_slice %52 {offsets = [16, 0], sizes = [8, 48], strides = [1, 1]} : vector<48x48xf32> to vector<8x48xf32>
    %90 = vector.extract_strided_slice %54 {offsets = [16, 0], sizes = [8, 48], strides = [1, 1]} : vector<48x48xf32> to vector<8x48xf32>
    %91 = vector.shape_cast %89 : vector<8x48xf32> to vector<8x1x48xf32>
    %92 = vector.shape_cast %88 : vector<8x48xf32> to vector<8x48x1xf32>
    %93 = vector.broadcast %91 : vector<8x1x48xf32> to vector<8x48x48xf32>
    %94 = vector.broadcast %92 : vector<8x48x1xf32> to vector<8x48x48xf32>
    %95 = arith.subf %93, %94 : vector<8x48x48xf32>
    %cst_25 = arith.constant 0.000000e+00 : f32
    %96 = vector.broadcast %cst_25 : f32 to vector<8x48x48xf32>
    %97 = arith.maximumf %95, %96 : vector<8x48x48xf32>
    %cst_26 = arith.constant dense<0.000000e+00> : vector<8x48xf32>
    %98 = vector.multi_reduction <add>, %97, %cst_26 [1] : vector<8x48x48xf32> to vector<8x48xf32>
    %99 = arith.mulf %98, %90 : vector<8x48xf32>
    %cst_27 = arith.constant dense<0.000000e+00> : vector<48xf32>
    %100 = vector.multi_reduction <add>, %99, %cst_27 [0] : vector<8x48xf32> to vector<48xf32>
    %101 = vector.shape_cast %100 : vector<48xf32> to vector<1x48xf32>
    %102 = arith.addf %87, %101 : vector<1x48xf32>
    %103 = vector.extract_strided_slice %56 {offsets = [24, 0], sizes = [8, 48], strides = [1, 1]} : vector<48x48xf32> to vector<8x48xf32>
    %104 = vector.extract_strided_slice %52 {offsets = [24, 0], sizes = [8, 48], strides = [1, 1]} : vector<48x48xf32> to vector<8x48xf32>
    %105 = vector.extract_strided_slice %54 {offsets = [24, 0], sizes = [8, 48], strides = [1, 1]} : vector<48x48xf32> to vector<8x48xf32>
    %106 = vector.shape_cast %104 : vector<8x48xf32> to vector<8x1x48xf32>
    %107 = vector.shape_cast %103 : vector<8x48xf32> to vector<8x48x1xf32>
    %108 = vector.broadcast %106 : vector<8x1x48xf32> to vector<8x48x48xf32>
    %109 = vector.broadcast %107 : vector<8x48x1xf32> to vector<8x48x48xf32>
    %110 = arith.subf %108, %109 : vector<8x48x48xf32>
    %cst_28 = arith.constant 0.000000e+00 : f32
    %111 = vector.broadcast %cst_28 : f32 to vector<8x48x48xf32>
    %112 = arith.maximumf %110, %111 : vector<8x48x48xf32>
    %cst_29 = arith.constant dense<0.000000e+00> : vector<8x48xf32>
    %113 = vector.multi_reduction <add>, %112, %cst_29 [1] : vector<8x48x48xf32> to vector<8x48xf32>
    %114 = arith.mulf %113, %105 : vector<8x48xf32>
    %cst_30 = arith.constant dense<0.000000e+00> : vector<48xf32>
    %115 = vector.multi_reduction <add>, %114, %cst_30 [0] : vector<8x48xf32> to vector<48xf32>
    %116 = vector.shape_cast %115 : vector<48xf32> to vector<1x48xf32>
    %117 = arith.addf %102, %116 : vector<1x48xf32>
    %118 = vector.extract_strided_slice %56 {offsets = [32, 0], sizes = [8, 48], strides = [1, 1]} : vector<48x48xf32> to vector<8x48xf32>
    %119 = vector.extract_strided_slice %52 {offsets = [32, 0], sizes = [8, 48], strides = [1, 1]} : vector<48x48xf32> to vector<8x48xf32>
    %120 = vector.extract_strided_slice %54 {offsets = [32, 0], sizes = [8, 48], strides = [1, 1]} : vector<48x48xf32> to vector<8x48xf32>
    %121 = vector.shape_cast %119 : vector<8x48xf32> to vector<8x1x48xf32>
    %122 = vector.shape_cast %118 : vector<8x48xf32> to vector<8x48x1xf32>
    %123 = vector.broadcast %121 : vector<8x1x48xf32> to vector<8x48x48xf32>
    %124 = vector.broadcast %122 : vector<8x48x1xf32> to vector<8x48x48xf32>
    %125 = arith.subf %123, %124 : vector<8x48x48xf32>
    %cst_31 = arith.constant 0.000000e+00 : f32
    %126 = vector.broadcast %cst_31 : f32 to vector<8x48x48xf32>
    %127 = arith.maximumf %125, %126 : vector<8x48x48xf32>
    %cst_32 = arith.constant dense<0.000000e+00> : vector<8x48xf32>
    %128 = vector.multi_reduction <add>, %127, %cst_32 [1] : vector<8x48x48xf32> to vector<8x48xf32>
    %129 = arith.mulf %128, %120 : vector<8x48xf32>
    %cst_33 = arith.constant dense<0.000000e+00> : vector<48xf32>
    %130 = vector.multi_reduction <add>, %129, %cst_33 [0] : vector<8x48xf32> to vector<48xf32>
    %131 = vector.shape_cast %130 : vector<48xf32> to vector<1x48xf32>
    %132 = arith.addf %117, %131 : vector<1x48xf32>
    %133 = vector.extract_strided_slice %56 {offsets = [40, 0], sizes = [8, 48], strides = [1, 1]} : vector<48x48xf32> to vector<8x48xf32>
    %134 = vector.extract_strided_slice %52 {offsets = [40, 0], sizes = [8, 48], strides = [1, 1]} : vector<48x48xf32> to vector<8x48xf32>
    %135 = vector.extract_strided_slice %54 {offsets = [40, 0], sizes = [8, 48], strides = [1, 1]} : vector<48x48xf32> to vector<8x48xf32>
    %136 = vector.shape_cast %134 : vector<8x48xf32> to vector<8x1x48xf32>
    %137 = vector.shape_cast %133 : vector<8x48xf32> to vector<8x48x1xf32>
    %138 = vector.broadcast %136 : vector<8x1x48xf32> to vector<8x48x48xf32>
    %139 = vector.broadcast %137 : vector<8x48x1xf32> to vector<8x48x48xf32>
    %140 = arith.subf %138, %139 : vector<8x48x48xf32>
    %cst_34 = arith.constant 0.000000e+00 : f32
    %141 = vector.broadcast %cst_34 : f32 to vector<8x48x48xf32>
    %142 = arith.maximumf %140, %141 : vector<8x48x48xf32>
    %cst_35 = arith.constant dense<0.000000e+00> : vector<8x48xf32>
    %143 = vector.multi_reduction <add>, %142, %cst_35 [1] : vector<8x48x48xf32> to vector<8x48xf32>
    %144 = arith.mulf %143, %135 : vector<8x48xf32>
    %cst_36 = arith.constant dense<0.000000e+00> : vector<48xf32>
    %145 = vector.multi_reduction <add>, %144, %cst_36 [0] : vector<8x48xf32> to vector<48xf32>
    %146 = vector.shape_cast %145 : vector<48xf32> to vector<1x48xf32>
    %147 = arith.addf %132, %146 : vector<1x48xf32>
    %148 = vector.shape_cast %147 : vector<1x48xf32> to vector<1x1x48xf32>
    %cst_37 = arith.constant dense<0.000000e+00> : vector<1xf32>
    %149 = vector.multi_reduction <add>, %148, %cst_37 [1, 2] : vector<1x1x48xf32> to vector<1xf32>
    %150 = vector.shape_cast %149 : vector<1xf32> to vector<1x1x1xf32>
    %151 = vector.extract %150[0, 0, 0] : f32 from vector<1x1x1xf32>
    %cst_38 = arith.constant 1.000000e+00 : f32
    %152 = arith.maximumf %51, %cst_38 : f32
    %153 = arith.divf %151, %152 : f32
    %c0_39 = arith.constant 0 : index
    %c0_40 = arith.constant 0 : index
    %154 = memref.load %arg3[%c0_39, %c0_40] : memref<1x1xf32, #tpu.memory_space<smem>>
    memref.store %153, %arg3[%c0_39, %c0_40] : memref<1x1xf32, #tpu.memory_space<smem>>
    return
  }
}

</mosaic_0001>

<llo_original>
// kernel: hinge_loss.1
$region0: #{hinge_loss.1}
  #allocation0 [shape = 'u32[]', space=smem, size = 0x4, offset = 0x4, fixed_abs, tag = 'smem constant byte address 0x4 - core index']
  #allocation1 [shape = 'u32[144,128]{1,0:T(1,128)}', space=vmem, size = 0x12000, scoped, tag = 'internal scratch']
  %s0 = inlined_call_operand.vmem [shape: f32[48,1], index: 0, kind: input, shape index: {}]
  %s1 = inlined_call_operand.vmem [shape: f32[1,48], index: 1, kind: input, shape index: {}]
  %s2 = inlined_call_operand.vmem [shape: f32[48,128], index: 2, kind: input, shape index: {}]
  %s3 = inlined_call_operand.hbm [shape: f32[1,1], index: 3, kind: output, shape index: {}]
  %s4 = sld [smem:[#allocation0]]
  $region22: #{hinge_loss.1} parent=0
    _
  %s6 = ssub.s32 1, %s4
  %s7 = scalar_select 0, %s6, %s4
  $region1: #{hinge_loss.1} parent=0
    #allocation2 [shape = 'u8[512]{0}', space=smem, size = 0x200, scoped, tag = 'output window, operand 0, single buffered']
    #allocation3 [shape = 's32[1]{0}', space=sflag, size = 0x4, scoped, tag = 'scoped memory for hinge_loss.1']
    %8 = vsyncpa [#allocation3], 0
    // Predicated region
    $region2: #{hinge_loss.1} parent=1 // pred_check
      _
    $region3: #{hinge_loss.1} parent=1 // pred_check_branch
      %10 = sbr.rel (0) target = $region5
    $region4: #{hinge_loss.1} parent=1 // pred_region
      _
    $region5: #{hinge_loss.1} parent=1 // pred_fallthru
      _
    // Predicated region
    $region6: #{hinge_loss.1} parent=1 // pred_check
      _
    $region7: #{hinge_loss.1} parent=1 // pred_check_branch
      %12 = sbr.rel (0) target = $region9
    $region8: #{hinge_loss.1} parent=1 // pred_region
      _
    $region9: #{hinge_loss.1} parent=1 // pred_fallthru
      _
    // Predicated region
    $region10: #{hinge_loss.1} parent=1 // pred_check
      _
    $region11: #{hinge_loss.1} parent=1 // pred_check_branch
      %14 = sbr.rel (0) target = $region13
    $region12: #{hinge_loss.1} parent=1 // pred_region
      _
    $region13: #{hinge_loss.1} parent=1 // pred_fallthru
      _
    %v15 = vld [vmem:[%s2] sm:$0xff]
    %v16 = vld [vmem:[%s2 + $0x8] sm:$0xff]
    %v17 = vld [vmem:[%s2 + $0x10] sm:$0xff]
    %v18 = vld [vmem:[%s2 + $0x18] sm:$0xff]
    %v19 = vld [vmem:[%s2 + $0x20] sm:$0xff]
    %v20 = vld [vmem:[%s2 + $0x28] sm:$0xff]
    %v21 = vld [vmem:[%s0] sm:$0xff]
    %v22 = vld [vmem:[%s0 + $0x8] sm:$0xff]
    %v23 = vld [vmem:[%s0 + $0x10] sm:$0xff]
    %v24 = vld [vmem:[%s0 + $0x18] sm:$0xff]
    %v25 = vld [vmem:[%s0 + $0x20] sm:$0xff]
    %v26 = vld [vmem:[%s0 + $0x28] sm:$0xff]
    %v27 = vld [vmem:[%s1] sm:$0x1]
    %v28 = vmul.f32 %v15, %v15
    %v29 = vmul.f32 %v16, %v16
    %v30 = vmul.f32 %v17, %v17
    %v31 = vmul.f32 %v18, %v18
    %v32 = vmul.f32 %v19, %v19
    %v33 = vmul.f32 %v20, %v20
    %34 = vadd.xlane.f32.xlu0 %v28
    %v35 = vpop.xlane.xlu0 %34
    %36 = vadd.xlane.f32.xlu0 %v29
    %v37 = vpop.xlane.xlu0 %36
    %38 = vadd.xlane.f32.xlu0 %v30
    %v39 = vpop.xlane.xlu0 %38
    %40 = vadd.xlane.f32.xlu0 %v31
    %v41 = vpop.xlane.xlu0 %40
    %42 = vadd.xlane.f32.xlu0 %v32
    %v43 = vpop.xlane.xlu0 %42
    %44 = vadd.xlane.f32.xlu0 %v33
    %v45 = vpop.xlane.xlu0 %44
    %v46 = vadd.f32 %v35, 1e-08
    %v47 = vadd.f32 %v37, 1e-08
    %v48 = vadd.f32 %v39, 1e-08
    %v49 = vadd.f32 %v41, 1e-08
    %v50 = vadd.f32 %v43, 1e-08
    %v51 = vadd.f32 %v45, 1e-08
    %v52 = vrsqrt.pop %v46
    %v53 = vrsqrt.pop %v47
    %v54 = vrsqrt.pop %v48
    %v55 = vrsqrt.pop %v49
    %v56 = vrsqrt.pop %v50
    %v57 = vrsqrt.pop %v51
    %v58 = vmul.f32 %v15, %v52
    %v59 = vmul.f32 %v16, %v53
    %v60 = vmul.f32 %v17, %v54
    %v61 = vmul.f32 %v18, %v55
    %v62 = vmul.f32 %v19, %v56
    %v63 = vmul.f32 %v20, %v57
    %64 = vmatprep.subr.mxu0 0.0
    %65 = vmatpush1.xpose.msra.mxu0 %v58
    %66 = vmatprep.subr.mxu0 0.0
    %67 = vmatpush1.xpose.msra.mxu0 %v59
    %68 = vmatprep.subr.mxu0 0.0
    %69 = vmatpush1.xpose.msra.mxu0 %v60
    %70 = vmatprep.subr.mxu0 0.0
    %71 = vmatpush1.xpose.msra.mxu0 %v61
    %72 = vmatprep.subr.mxu0 0.0
    %73 = vmatpush1.xpose.msra.mxu0 %v62
    %74 = vmatprep.subr.mxu0 0.0
    %75 = vmatpush1.xpose.msra.mxu0 %v63
    %76 = vmatprep.subr.mxu0 0.0
    %77 = vmatpush1.xpose.msra.mxu0 0.0
    %78 = vmatprep.subr.mxu0 0.0
    %79 = vmatpush1.xpose.msra.mxu0 0.0
    %80 = vmatprep.subr.mxu0 0.0
    %81 = vmatpush1.xpose.msra.mxu0 0.0
    %82 = vmatprep.subr.mxu0 0.0
    %83 = vmatpush1.xpose.msra.mxu0 0.0
    %84 = vmatprep.subr.mxu0 0.0
    %85 = vmatpush1.xpose.msra.mxu0 0.0
    %86 = vmatprep.subr.mxu0 0.0
    %87 = vmatpush1.xpose.msra.mxu0 0.0
    %88 = vmatprep.subr.mxu0 0.0
    %89 = vmatpush1.xpose.msra.mxu0 0.0
    %90 = vmatprep.subr.mxu0 0.0
    %91 = vmatpush1.xpose.msra.mxu0 0.0
    %92 = vmatprep.subr.mxu0 0.0
    %93 = vmatpush1.xpose.msra.mxu0 0.0
    %94 = vmatprep.subr.mxu0 0.0
    %95 = vmatpush1.xpose.msra.mxu0 0.0
    %96 = vmatprep.subr.mxu0 0.0
    %97 = vmatpush1.xpose.msra.mxu0 0.0
    %98 = vmatprep.subr.mxu0 0.0
    %99 = vmatpush1.xpose.msra.mxu0 0.0
    %100 = vmatprep.subr.mxu0 0.0
    %101 = vmatpush1.xpose.msra.mxu0 0.0
    %102 = vmatprep.subr.mxu0 0.0
    %103 = vmatpush1.xpose.msra.mxu0 0.0
    %104 = vmatprep.subr.mxu0 0.0
    %105 = vmatpush1.xpose.msra.mxu0 0.0
    %106 = vmatprep.subr.mxu0 0.0
    %107 = vmatpush1.xpose.msra.mxu0 0.0
    %108 = vmatprep.subr.mxu0 0.0
    %109 = vmatpush1.xpose.msra.mxu0 0.0
    %110 = vmatprep.subr.mxu0 0.0
    %111 = vmatpush1.xpose.msra.mxu0 0.0
    %112 = vmatprep.subr.mxu0 0.0
    %113 = vmatpush1.xpose.msra.mxu0 0.0
    %114 = vmatprep.subr.mxu0 0.0
    %115 = vmatpush1.xpose.msra.mxu0 0.0
    %116 = vmatprep.subr.mxu0 0.0
    %117 = vmatpush1.xpose.msra.mxu0 0.0
    %118 = vmatprep.subr.mxu0 0.0
    %119 = vmatpush1.xpose.msra.mxu0 0.0
    %120 = vmatprep.subr.mxu0 0.0
    %121 = vmatpush1.xpose.msra.mxu0 0.0
    %122 = vmatprep.subr.mxu0 0.0
    %123 = vmatpush1.xpose.msra.mxu0 0.0
    %124 = vmatprep.subr.mxu0 0.0
    %125 = vmatpush1.xpose.msra.mxu0 0.0
    %126 = vmatprep.subr.mxu0 0.0
    %127 = vmatpush1.xpose.msra.mxu0 0.0
    %128 = vmatprep.mubr.f32.mxu0 0.0
    %129 = vmatmul.mubr.f32.gmra.mrb[0].mxu0 %v58
    %v130 = vpop.f32.mrb[0].mxu0
    %v131 = vadd.f32 0.0, %v130
    %v132 = vpop.f32.mrb[0].mxu0
    %133 = vmatprep.mubr.f32.mxu0 0.0
    %134 = vmatmul.mubr.f32.gmra.mrb[0].mxu0 %v59
    %v135 = vpop.f32.mrb[0].mxu0
    %v136 = vadd.f32 0.0, %v135
    %v137 = vpop.f32.mrb[0].mxu0
    %138 = vmatprep.mubr.f32.mxu0 0.0
    %139 = vmatmul.mubr.f32.gmra.mrb[0].mxu0 %v60
    %v140 = vpop.f32.mrb[0].mxu0
    %v141 = vadd.f32 0.0, %v140
    %v142 = vpop.f32.mrb[0].mxu0
    %143 = vmatprep.mubr.f32.mxu0 0.0
    %144 = vmatmul.mubr.f32.gmra.mrb[0].mxu0 %v61
    %v145 = vpop.f32.mrb[0].mxu0
    %v146 = vadd.f32 0.0, %v145
    %v147 = vpop.f32.mrb[0].mxu0
    %148 = vmatprep.mubr.f32.mxu0 0.0
    %149 = vmatmul.mubr.f32.gmra.mrb[0].mxu0 %v62
    %v150 = vpop.f32.mrb[0].mxu0
    %v151 = vadd.f32 0.0, %v150
    %v152 = vpop.f32.mrb[0].mxu0
    %153 = vmatprep.mubr.f32.mxu0 0.0
    %154 = vmatmul.mubr.f32.gmra.mrb[0].mxu0 %v63
    %v155 = vpop.f32.mrb[0].mxu0
    %v156 = vadd.f32 0.0, %v155
    %v157 = vpop.f32.mrb[0].mxu0
    %158 = vdwg.mxu0
    %160 = vset.pattern.permute.xlu0 0
    %161 = vperm.xlu0 %160, %v21
    %v162 = vpop.permute.xlu0 %161
    %165 = vset.pattern.permute.xlu0 0
    %166 = vperm.xlu0 %165, %v22
    %v167 = vpop.permute.xlu0 %166
    %170 = vset.pattern.permute.xlu0 0
    %171 = vperm.xlu0 %170, %v23
    %v172 = vpop.permute.xlu0 %171
    %175 = vset.pattern.permute.xlu0 0
    %176 = vperm.xlu0 %175, %v24
    %v177 = vpop.permute.xlu0 %176
    %180 = vset.pattern.permute.xlu0 0
    %181 = vperm.xlu0 %180, %v25
    %v182 = vpop.permute.xlu0 %181
    %185 = vset.pattern.permute.xlu0 0
    %186 = vperm.xlu0 %185, %v26
    %v187 = vpop.permute.xlu0 %186
    %v190 = vlaneseq
    %v191 = vshrl.u32 %v190, 7
    %v192 = vsub.s32 0, %v191
    %v193 = vrot.slane %v27, %v192
    %vm195 = vcmp.eq.f32.partialorder %v162, %v193
    %vm196 = vcmp.eq.f32.partialorder %v167, %v193
    %vm197 = vcmp.eq.f32.partialorder %v172, %v193
    %vm198 = vcmp.eq.f32.partialorder %v177, %v193
    %vm199 = vcmp.eq.f32.partialorder %v182, %v193
    %vm200 = vcmp.eq.f32.partialorder %v187, %v193
    %v201 = vlaneseq
    %v202 = vshrl.u32 %v201, 7
    %v203 = vadd.s32 %v202, 8
    %v204 = vadd.s32 %v202, 16
    %v205 = vadd.s32 %v202, 24
    %v206 = vadd.s32 %v202, 32
    %v207 = vadd.s32 %v202, 40
    %v208 = vlaneseq
    %v209 = vand.u32 %v208, 127
    %vm210 = vcmp.ne.s32.totalorder %v202, %v209
    %vm211 = vcmp.ne.s32.totalorder %v203, %v209
    %vm212 = vcmp.ne.s32.totalorder %v204, %v209
    %vm213 = vcmp.ne.s32.totalorder %v205, %v209
    %vm214 = vcmp.ne.s32.totalorder %v206, %v209
    %vm215 = vcmp.ne.s32.totalorder %v207, %v209
    %vm216 = vmand %vm195, %vm210
    %vm217 = vmand %vm196, %vm211
    %vm218 = vmand %vm197, %vm212
    %vm219 = vmand %vm198, %vm213
    %vm220 = vmand %vm199, %vm214
    %vm221 = vmand %vm200, %vm215
    %vm222 = vmxor %vm195, 1
    %vm223 = vmxor %vm196, 1
    %vm224 = vmxor %vm197, 1
    %vm225 = vmxor %vm198, 1
    %vm226 = vmxor %vm199, 1
    %vm227 = vmxor %vm200, 1
    %v228 = vsel %vm222, 1, 0
    %v229 = vsel %vm223, 1, 0
    %v230 = vsel %vm224, 1, 0
    %v231 = vsel %vm225, 1, 0
    %v232 = vsel %vm226, 1, 0
    %v233 = vsel %vm227, 1, 0
    %v234 = vcvt.s32.f32 %v228
    %v235 = vcvt.s32.f32 %v229
    %v236 = vcvt.s32.f32 %v230
    %v237 = vcvt.s32.f32 %v231
    %v238 = vcvt.s32.f32 %v232
    %v239 = vcvt.s32.f32 %v233
    %v240 = vsub.f32 %v162, %v193
    %v241 = vsub.f32 %v167, %v193
    %v242 = vsub.f32 %v172, %v193
    %v243 = vsub.f32 %v177, %v193
    %v244 = vsub.f32 %v182, %v193
    %v245 = vsub.f32 %v187, %v193
    %v246 = vand.u32 2147483647, %v240
    %v247 = vand.u32 2147483647, %v241
    %v248 = vand.u32 2147483647, %v242
    %v249 = vand.u32 2147483647, %v243
    %v250 = vand.u32 2147483647, %v244
    %v251 = vand.u32 2147483647, %v245
    %v252 = vmul.f32 %v246, 0.15
    %v253 = vmul.f32 %v247, 0.15
    %v254 = vmul.f32 %v248, 0.15
    %v255 = vmul.f32 %v249, 0.15
    %v256 = vmul.f32 %v250, 0.15
    %v257 = vmul.f32 %v251, 0.15
    %v258 = vsel %vm216, 1, 0
    %v259 = vsel %vm217, 1, 0
    %v260 = vsel %vm218, 1, 0
    %v261 = vsel %vm219, 1, 0
    %v262 = vsel %vm220, 1, 0
    %v263 = vsel %vm221, 1, 0
    %v264 = vcvt.s32.f32 %v258
    %v265 = vcvt.s32.f32 %v259
    %v266 = vcvt.s32.f32 %v260
    %v267 = vcvt.s32.f32 %v261
    %v268 = vcvt.s32.f32 %v262
    %v269 = vcvt.s32.f32 %v263
    %vm270 = vcmask 392192
    %v271 = vsel %vm270, %v264, 0.0
    %272 = vadd.xlane.f32.xlu0 %v271
    %v273 = vpop.xlane.xlu0 %272
    %v274 = vsel %vm270, %v265, 0.0
    %275 = vadd.xlane.f32.xlu0 %v274
    %v276 = vpop.xlane.xlu0 %275
    %v277 = vsel %vm270, %v266, 0.0
    %278 = vadd.xlane.f32.xlu0 %v277
    %v279 = vpop.xlane.xlu0 %278
    %v280 = vsel %vm270, %v267, 0.0
    %281 = vadd.xlane.f32.xlu0 %v280
    %v282 = vpop.xlane.xlu0 %281
    %v283 = vsel %vm270, %v268, 0.0
    %284 = vadd.xlane.f32.xlu0 %v283
    %v285 = vpop.xlane.xlu0 %284
    %v286 = vsel %vm270, %v269, 0.0
    %287 = vadd.xlane.f32.xlu0 %v286
    %v288 = vpop.xlane.xlu0 %287
    %v289 = vsel %vm270, %v234, 0.0
    %290 = vadd.xlane.f32.xlu0 %v289
    %v291 = vpop.xlane.xlu0 %290
    %v292 = vsel %vm270, %v235, 0.0
    %293 = vadd.xlane.f32.xlu0 %v292
    %v294 = vpop.xlane.xlu0 %293
    %v295 = vsel %vm270, %v236, 0.0
    %296 = vadd.xlane.f32.xlu0 %v295
    %v297 = vpop.xlane.xlu0 %296
    %v298 = vsel %vm270, %v237, 0.0
    %299 = vadd.xlane.f32.xlu0 %v298
    %v300 = vpop.xlane.xlu0 %299
    %v301 = vsel %vm270, %v238, 0.0
    %302 = vadd.xlane.f32.xlu0 %v301
    %v303 = vpop.xlane.xlu0 %302
    %v304 = vsel %vm270, %v239, 0.0
    %305 = vadd.xlane.f32.xlu0 %v304
    %v306 = vpop.xlane.xlu0 %305
    %vm307 = vcmp.gt.f32.partialorder %v273, 0.0
    %vm308 = vcmp.gt.f32.partialorder %v276, 0.0
    %vm309 = vcmp.gt.f32.partialorder %v279, 0.0
    %vm310 = vcmp.gt.f32.partialorder %v282, 0.0
    %vm311 = vcmp.gt.f32.partialorder %v285, 0.0
    %vm312 = vcmp.gt.f32.partialorder %v288, 0.0
    %vm313 = vcmp.gt.f32.partialorder %v291, 0.0
    %vm314 = vcmp.gt.f32.partialorder %v294, 0.0
    %vm315 = vcmp.gt.f32.partialorder %v297, 0.0
    %vm316 = vcmp.gt.f32.partialorder %v300, 0.0
    %vm317 = vcmp.gt.f32.partialorder %v303, 0.0
    %vm318 = vcmp.gt.f32.partialorder %v306, 0.0
    %vm319 = vmand %vm307, %vm313
    %vm320 = vmand %vm308, %vm314
    %vm321 = vmand %vm309, %vm315
    %vm322 = vmand %vm310, %vm316
    %vm323 = vmand %vm311, %vm317
    %vm324 = vmand %vm312, %vm318
    %v325 = vmul.f32 %v273, %v291
    %v326 = vmul.f32 %v276, %v294
    %v327 = vmul.f32 %v279, %v297
    %v328 = vmul.f32 %v282, %v300
    %v329 = vmul.f32 %v285, %v303
    %v330 = vmul.f32 %v288, %v306
    %v331 = vmax.f32 %v325, 1.0
    %v332 = vmax.f32 %v326, 1.0
    %v333 = vmax.f32 %v327, 1.0
    %v334 = vmax.f32 %v328, 1.0
    %v335 = vmax.f32 %v329, 1.0
    %v336 = vmax.f32 %v330, 1.0
    %v337 = vrcp.pop %v331
    %v338 = vmul.f32 1.0, %v337
    %v339 = vrcp.pop %v332
    %v340 = vmul.f32 1.0, %v339
    %v341 = vrcp.pop %v333
    %v342 = vmul.f32 1.0, %v341
    %v343 = vrcp.pop %v334
    %v344 = vmul.f32 1.0, %v343
    %v345 = vrcp.pop %v335
    %v346 = vmul.f32 1.0, %v345
    %v347 = vrcp.pop %v336
    %v348 = vmul.f32 1.0, %v347
    %v349 = vsel %vm319, %v338, 0.0
    %v350 = vsel %vm320, %v340, 0.0
    %v351 = vsel %vm321, %v342, 0.0
    %v352 = vsel %vm322, %v344, 0.0
    %v353 = vsel %vm323, %v346, 0.0
    %v354 = vsel %vm324, %v348, 0.0
    %v355 = vsel %vm319, 1, 0
    %v356 = vsel %vm320, 1, 0
    %v357 = vsel %vm321, 1, 0
    %v358 = vsel %vm322, 1, 0
    %v359 = vsel %vm323, 1, 0
    %v360 = vsel %vm324, 1, 0
    %v361 = vcvt.s32.f32 %v355
    %v362 = vcvt.s32.f32 %v356
    %v363 = vcvt.s32.f32 %v357
    %v364 = vcvt.s32.f32 %v358
    %v365 = vcvt.s32.f32 %v359
    %v366 = vcvt.s32.f32 %v360
    %vm367 = vcmask 7168
    %v368 = vsel %vm367, %v361, 0.0
    %v369 = vsel %vm367, %v362, 0.0
    %v370 = vadd.f32 %v368, %v369
    %v371 = vsel %vm367, %v363, 0.0
    %v372 = vadd.f32 %v370, %v371
    %v373 = vsel %vm367, %v364, 0.0
    %v374 = vadd.f32 %v372, %v373
    %v375 = vsel %vm367, %v365, 0.0
    %v376 = vadd.f32 %v374, %v375
    %v377 = vsel %vm367, %v366, 0.0
    %v378 = vadd.f32 %v376, %v377
    %379 = vadd.xlane.f32.xlu0 %v378
    %v380 = vpop.xlane.xlu0 %379
    %v381 = vrot.slane %v380, 4
    %v382 = vadd.f32 %v380, %v381
    %v383 = vrot.slane %v382, 2
    %v384 = vadd.f32 %v382, %v383
    %v385 = vrot.slane %v384, 1
    %v386 = vadd.f32 %v384, %v385
    %s387 = vtos %v386
    %v388 = vadd.f32 %v252, %v131
    %v389 = vadd.f32 %v253, %v136
    %v390 = vadd.f32 %v254, %v141
    %v391 = vadd.f32 %v255, %v146
    %v392 = vadd.f32 %v256, %v151
    %v393 = vadd.f32 %v257, %v156
    %v394 = vmul.f32 %v234, %v349
    %v395 = vmul.f32 %v235, %v350
    %v396 = vmul.f32 %v236, %v351
    %v397 = vmul.f32 %v237, %v352
    %v398 = vmul.f32 %v238, %v353
    %v399 = vmul.f32 %v239, %v354
    %v400 = vsel %vm216, %v131, 1e+30
    %v401 = vsel %vm217, %v136, 1e+30
    %v402 = vsel %vm218, %v141, 1e+30
    %v403 = vsel %vm219, %v146, 1e+30
    %v404 = vsel %vm220, %v151, 1e+30
    %v405 = vsel %vm221, %v156, 1e+30
    %v407 = vcombine.high %v388, %v388
    %v409 = vunpack.c.l.s4 1966171168
    %v410 = vunpack.c.0.s8 %v409
    %v411 = vlaneseq
    %v412 = vshrl.u32 %v411, 7
    %v413 = vsub.s32 %v410, %v412
    %v414 = vrot.slane %v388, %v413
    %v416 = vunpack.c.l.s4 1966171168
    %v417 = vunpack.c.0.s8 %v416
    %v418 = vlaneseq
    %v419 = vshrl.u32 %v418, 7
    %v420 = vsub.s32 %v417, %v419
    %v421 = vrot.slane %v407, %v420
    %v422 = vcombine.high %v414, %v414
    %v423 = vcombine.high %v421, %v421
    %v425 = vunpack.c.l.s4 1966171168
    %v426 = vunpack.c.0.s8 %v425
    %v427 = vlaneseq
    %v428 = vshrl.u32 %v427, 7
    %v429 = vsub.s32 %v426, %v428
    %v430 = vrot.slane %v414, %v429
    %v432 = vunpack.c.l.s4 1966171168
    %v433 = vunpack.c.0.s8 %v432
    %v434 = vlaneseq
    %v435 = vshrl.u32 %v434, 7
    %v436 = vsub.s32 %v433, %v435
    %v437 = vrot.slane %v421, %v436
    %v439 = vunpack.c.l.s4 1966171168
    %v440 = vunpack.c.0.s8 %v439
    %v441 = vlaneseq
    %v442 = vshrl.u32 %v441, 7
    %v443 = vsub.s32 %v440, %v442
    %v444 = vrot.slane %v422, %v443
    %v446 = vunpack.c.l.s4 1966171168
    %v447 = vunpack.c.0.s8 %v446
    %v448 = vlaneseq
    %v449 = vshrl.u32 %v448, 7
    %v450 = vsub.s32 %v447, %v449
    %v451 = vrot.slane %v423, %v450
    %v452 = vcombine.high %v430, %v430
    %v453 = vcombine.high %v437, %v437
    %v454 = vcombine.high %v444, %v444
    %v455 = vcombine.high %v451, %v451
    %v456 = vlaneseq
    %v457 = vshrl.u32 %v456, 7
    %v458 = vsub.s32 0, %v457
    %v459 = vrot.slane %v400, %v458
    %461 = vbcast.lane.b32.xlu0 %v459, 256
    %v462 = vpop.permute.xlu0 %461
    %s464 = sor.u32 256, 8
    %465 = vbcast.lane.b32.xlu0 %v459, %s464
    %v466 = vpop.permute.xlu0 %465
    %s468 = sor.u32 256, 16
    %469 = vbcast.lane.b32.xlu0 %v459, %s468
    %v470 = vpop.permute.xlu0 %469
    %s472 = sor.u32 256, 24
    %473 = vbcast.lane.b32.xlu0 %v459, %s472
    %v474 = vpop.permute.xlu0 %473
    %s476 = sor.u32 256, 32
    %477 = vbcast.lane.b32.xlu0 %v459, %s476
    %v478 = vpop.permute.xlu0 %477
    %s480 = sor.u32 256, 40
    %481 = vbcast.lane.b32.xlu0 %v459, %s480
    %v482 = vpop.permute.xlu0 %481
    %v483 = vlaneseq
    %v484 = vshrl.u32 %v483, 7
    %v485 = vsub.s32 1, %v484
    %v486 = vrot.slane %v400, %v485
    %488 = vbcast.lane.b32.xlu0 %v486, 256
    %v489 = vpop.permute.xlu0 %488
    %s491 = sor.u32 256, 8
    %492 = vbcast.lane.b32.xlu0 %v486, %s491
    %v493 = vpop.permute.xlu0 %492
    %s495 = sor.u32 256, 16
    %496 = vbcast.lane.b32.xlu0 %v486, %s495
    %v497 = vpop.permute.xlu0 %496
    %s499 = sor.u32 256, 24
    %500 = vbcast.lane.b32.xlu0 %v486, %s499
    %v501 = vpop.permute.xlu0 %500
    %s503 = sor.u32 256, 32
    %504 = vbcast.lane.b32.xlu0 %v486, %s503
    %v505 = vpop.permute.xlu0 %504
    %s507 = sor.u32 256, 40
    %508 = vbcast.lane.b32.xlu0 %v486, %s507
    %v509 = vpop.permute.xlu0 %508
    %v510 = vlaneseq
    %v511 = vshrl.u32 %v510, 7
    %v512 = vsub.s32 2, %v511
    %v513 = vrot.slane %v400, %v512
    %515 = vbcast.lane.b32.xlu0 %v513, 256
    %v516 = vpop.permute.xlu0 %515
    %s518 = sor.u32 256, 8
    %519 = vbcast.lane.b32.xlu0 %v513, %s518
    %v520 = vpop.permute.xlu0 %519
    %s522 = sor.u32 256, 16
    %523 = vbcast.lane.b32.xlu0 %v513, %s522
    %v524 = vpop.permute.xlu0 %523
    %s526 = sor.u32 256, 24
    %527 = vbcast.lane.b32.xlu0 %v513, %s526
    %v528 = vpop.permute.xlu0 %527
    %s530 = sor.u32 256, 32
    %531 = vbcast.lane.b32.xlu0 %v513, %s530
    %v532 = vpop.permute.xlu0 %531
    %s534 = sor.u32 256, 40
    %535 = vbcast.lane.b32.xlu0 %v513, %s534
    %v536 = vpop.permute.xlu0 %535
    %v537 = vlaneseq
    %v538 = vshrl.u32 %v537, 7
    %v539 = vsub.s32 3, %v538
    %v540 = vrot.slane %v400, %v539
    %542 = vbcast.lane.b32.xlu0 %v540, 256
    %v543 = vpop.permute.xlu0 %542
    %s545 = sor.u32 256, 8
    %546 = vbcast.lane.b32.xlu0 %v540, %s545
    %v547 = vpop.permute.xlu0 %546
    %s549 = sor.u32 256, 16
    %550 = vbcast.lane.b32.xlu0 %v540, %s549
    %v551 = vpop.permute.xlu0 %550
    %s553 = sor.u32 256, 24
    %554 = vbcast.lane.b32.xlu0 %v540, %s553
    %v555 = vpop.permute.xlu0 %554
    %s557 = sor.u32 256, 32
    %558 = vbcast.lane.b32.xlu0 %v540, %s557
    %v559 = vpop.permute.xlu0 %558
    %s561 = sor.u32 256, 40
    %562 = vbcast.lane.b32.xlu0 %v540, %s561
    %v563 = vpop.permute.xlu0 %562
    %v564 = vlaneseq
    %v565 = vshrl.u32 %v564, 7
    %v566 = vsub.s32 4, %v565
    %v567 = vrot.slane %v400, %v566
    %569 = vbcast.lane.b32.xlu0 %v567, 256
    %v570 = vpop.permute.xlu0 %569
    %s572 = sor.u32 256, 8
    %573 = vbcast.lane.b32.xlu0 %v567, %s572
    %v574 = vpop.permute.xlu0 %573
    %s576 = sor.u32 256, 16
    %577 = vbcast.lane.b32.xlu0 %v567, %s576
    %v578 = vpop.permute.xlu0 %577
    %s580 = sor.u32 256, 24
    %581 = vbcast.lane.b32.xlu0 %v567, %s580
    %v582 = vpop.permute.xlu0 %581
    %s584 = sor.u32 256, 32
    %585 = vbcast.lane.b32.xlu0 %v567, %s584
    %v586 = vpop.permute.xlu0 %585
    %s588 = sor.u32 256, 40
    %589 = vbcast.lane.b32.xlu0 %v567, %s588
    %v590 = vpop.permute.xlu0 %589
    %v591 = vlaneseq
    %v592 = vshrl.u32 %v591, 7
    %v593 = vsub.s32 5, %v592
    %v594 = vrot.slane %v400, %v593
    %596 = vbcast.lane.b32.xlu0 %v594, 256
    %v597 = vpop.permute.xlu0 %596
    %s599 = sor.u32 256, 8
    %600 = vbcast.lane.b32.xlu0 %v594, %s599
    %v601 = vpop.permute.xlu0 %600
    %s603 = sor.u32 256, 16
    %604 = vbcast.lane.b32.xlu0 %v594, %s603
    %v605 = vpop.permute.xlu0 %604
    %s607 = sor.u32 256, 24
    %608 = vbcast.lane.b32.xlu0 %v594, %s607
    %v609 = vpop.permute.xlu0 %608
    %s611 = sor.u32 256, 32
    %612 = vbcast.lane.b32.xlu0 %v594, %s611
    %v613 = vpop.permute.xlu0 %612
    %s615 = sor.u32 256, 40
    %616 = vbcast.lane.b32.xlu0 %v594, %s615
    %v617 = vpop.permute.xlu0 %616
    %v618 = vlaneseq
    %v619 = vshrl.u32 %v618, 7
    %v620 = vsub.s32 6, %v619
    %v621 = vrot.slane %v400, %v620
    %623 = vbcast.lane.b32.xlu0 %v621, 256
    %v624 = vpop.permute.xlu0 %623
    %s626 = sor.u32 256, 8
    %627 = vbcast.lane.b32.xlu0 %v621, %s626
    %v628 = vpop.permute.xlu0 %627
    %s630 = sor.u32 256, 16
    %631 = vbcast.lane.b32.xlu0 %v621, %s630
    %v632 = vpop.permute.xlu0 %631
    %s634 = sor.u32 256, 24
    %635 = vbcast.lane.b32.xlu0 %v621, %s634
    %v636 = vpop.permute.xlu0 %635
    %s638 = sor.u32 256, 32
    %639 = vbcast.lane.b32.xlu0 %v621, %s638
    %v640 = vpop.permute.xlu0 %639
    %s642 = sor.u32 256, 40
    %643 = vbcast.lane.b32.xlu0 %v621, %s642
    %v644 = vpop.permute.xlu0 %643
    %v645 = vlaneseq
    %v646 = vshrl.u32 %v645, 7
    %v647 = vsub.s32 7, %v646
    %v648 = vrot.slane %v400, %v647
    %650 = vbcast.lane.b32.xlu0 %v648, 256
    %v651 = vpop.permute.xlu0 %650
    %s653 = sor.u32 256, 8
    %654 = vbcast.lane.b32.xlu0 %v648, %s653
    %v655 = vpop.permute.xlu0 %654
    %s657 = sor.u32 256, 16
    %658 = vbcast.lane.b32.xlu0 %v648, %s657
    %v659 = vpop.permute.xlu0 %658
    %s661 = sor.u32 256, 24
    %662 = vbcast.lane.b32.xlu0 %v648, %s661
    %v663 = vpop.permute.xlu0 %662
    %s665 = sor.u32 256, 32
    %666 = vbcast.lane.b32.xlu0 %v648, %s665
    %v667 = vpop.permute.xlu0 %666
    %s669 = sor.u32 256, 40
    %670 = vbcast.lane.b32.xlu0 %v648, %s669
    %v671 = vpop.permute.xlu0 %670
    %v672 = vlaneseq
    %v673 = vshrl.u32 %v672, 7
    %v674 = vsub.s32 0, %v673
    %v675 = vrot.slane %v430, %v674
    %v676 = vlaneseq
    %v677 = vshrl.u32 %v676, 7
    %v678 = vsub.s32 0, %v677
    %v679 = vrot.slane %v444, %v678
    %v680 = vlaneseq
    %v681 = vshrl.u32 %v680, 7
    %v682 = vsub.s32 0, %v681
    %v683 = vrot.slane %v452, %v682
    %v684 = vlaneseq
    %v685 = vshrl.u32 %v684, 7
    %v686 = vsub.s32 0, %v685
    %v687 = vrot.slane %v454, %v686
    %v688 = vlaneseq
    %v689 = vshrl.u32 %v688, 7
    %v690 = vsub.s32 0, %v689
    %v691 = vrot.slane %v437, %v690
    %v692 = vlaneseq
    %v693 = vshrl.u32 %v692, 7
    %v694 = vsub.s32 0, %v693
    %v695 = vrot.slane %v451, %v694
    %v696 = vlaneseq
    %v697 = vshrl.u32 %v696, 7
    %v698 = vsub.s32 0, %v697
    %v699 = vrot.slane %v453, %v698
    %v700 = vlaneseq
    %v701 = vshrl.u32 %v700, 7
    %v702 = vsub.s32 0, %v701
    %v703 = vrot.slane %v455, %v702
    %v712 = vsub.f32 %v675, %v462
    %v713 = vsub.f32 %v675, %v466
    %v714 = vsub.f32 %v675, %v470
    %v715 = vsub.f32 %v675, %v474
    %v716 = vsub.f32 %v675, %v478
    %v717 = vsub.f32 %v675, %v482
    %v718 = vsub.f32 %v679, %v489
    %v719 = vsub.f32 %v679, %v493
    %v720 = vsub.f32 %v679, %v497
    %v721 = vsub.f32 %v679, %v501
    %v722 = vsub.f32 %v679, %v505
    %v723 = vsub.f32 %v679, %v509
    %v724 = vsub.f32 %v683, %v516
    %v725 = vsub.f32 %v683, %v520
    %v726 = vsub.f32 %v683, %v524
    %v727 = vsub.f32 %v683, %v528
    %v728 = vsub.f32 %v683, %v532
    %v729 = vsub.f32 %v683, %v536
    %v730 = vsub.f32 %v687, %v543
    %v731 = vsub.f32 %v687, %v547
    %v732 = vsub.f32 %v687, %v551
    %v733 = vsub.f32 %v687, %v555
    %v734 = vsub.f32 %v687, %v559
    %v735 = vsub.f32 %v687, %v563
    %v736 = vsub.f32 %v691, %v570
    %v737 = vsub.f32 %v691, %v574
    %v738 = vsub.f32 %v691, %v578
    %v739 = vsub.f32 %v691, %v582
    %v740 = vsub.f32 %v691, %v586
    %v741 = vsub.f32 %v691, %v590
    %v742 = vsub.f32 %v695, %v597
    %v743 = vsub.f32 %v695, %v601
    %v744 = vsub.f32 %v695, %v605
    %v745 = vsub.f32 %v695, %v609
    %v746 = vsub.f32 %v695, %v613
    %v747 = vsub.f32 %v695, %v617
    %v748 = vsub.f32 %v699, %v624
    %v749 = vsub.f32 %v699, %v628
    %v750 = vsub.f32 %v699, %v632
    %v751 = vsub.f32 %v699, %v636
    %v752 = vsub.f32 %v699, %v640
    %v753 = vsub.f32 %v699, %v644
    %v754 = vsub.f32 %v703, %v651
    %v755 = vsub.f32 %v703, %v655
    %v756 = vsub.f32 %v703, %v659
    %v757 = vsub.f32 %v703, %v663
    %v758 = vsub.f32 %v703, %v667
    %v759 = vsub.f32 %v703, %v671
    %v760 = vmax.f32 %v712, 0.0
    %v761 = vmax.f32 %v713, 0.0
    %v762 = vmax.f32 %v714, 0.0
    %v763 = vmax.f32 %v715, 0.0
    %v764 = vmax.f32 %v716, 0.0
    %v765 = vmax.f32 %v717, 0.0
    %v766 = vmax.f32 %v718, 0.0
    %v767 = vmax.f32 %v719, 0.0
    %v768 = vmax.f32 %v720, 0.0
    %v769 = vmax.f32 %v721, 0.0
    %v770 = vmax.f32 %v722, 0.0
    %v771 = vmax.f32 %v723, 0.0
    %v772 = vmax.f32 %v724, 0.0
    %v773 = vmax.f32 %v725, 0.0
    %v774 = vmax.f32 %v726, 0.0
    %v775 = vmax.f32 %v727, 0.0
    %v776 = vmax.f32 %v728, 0.0
    %v777 = vmax.f32 %v729, 0.0
    %v778 = vmax.f32 %v730, 0.0
    %v779 = vmax.f32 %v731, 0.0
    %v780 = vmax.f32 %v732, 0.0
    %v781 = vmax.f32 %v733, 0.0
    %v782 = vmax.f32 %v734, 0.0
    %v783 = vmax.f32 %v735, 0.0
    %v784 = vmax.f32 %v736, 0.0
    %v785 = vmax.f32 %v737, 0.0
    %v786 = vmax.f32 %v738, 0.0
    %v787 = vmax.f32 %v739, 0.0
    %v788 = vmax.f32 %v740, 0.0
    %v789 = vmax.f32 %v741, 0.0
    %v790 = vmax.f32 %v742, 0.0
    %v791 = vmax.f32 %v743, 0.0
    %v792 = vmax.f32 %v744, 0.0
    %v793 = vmax.f32 %v745, 0.0
    %v794 = vmax.f32 %v746, 0.0
    %v795 = vmax.f32 %v747, 0.0
    %v796 = vmax.f32 %v748, 0.0
    %v797 = vmax.f32 %v749, 0.0
    %v798 = vmax.f32 %v750, 0.0
    %v799 = vmax.f32 %v751, 0.0
    %v800 = vmax.f32 %v752, 0.0
    %v801 = vmax.f32 %v753, 0.0
    %v802 = vmax.f32 %v754, 0.0
    %v803 = vmax.f32 %v755, 0.0
    %v804 = vmax.f32 %v756, 0.0
    %v805 = vmax.f32 %v757, 0.0
    %v806 = vmax.f32 %v758, 0.0
    %v807 = vmax.f32 %v759, 0.0
    %v808 = vsel %vm270, %v760, 0.0
    %v809 = vsel %vm270, %v761, 0.0
    %v810 = vadd.f32 %v808, %v809
    %v811 = vsel %vm270, %v762, 0.0
    %v812 = vadd.f32 %v810, %v811
    %v813 = vsel %vm270, %v763, 0.0
    %v814 = vadd.f32 %v812, %v813
    %v815 = vsel %vm270, %v764, 0.0
    %v816 = vadd.f32 %v814, %v815
    %v817 = vsel %vm270, %v765, 0.0
    %v818 = vadd.f32 %v816, %v817
    %v819 = vrot.slane %v818, 4
    %v820 = vadd.f32 %v818, %v819
    %v821 = vrot.slane %v820, 2
    %v822 = vadd.f32 %v820, %v821
    %v823 = vrot.slane %v822, 1
    %v824 = vadd.f32 %v822, %v823
    %v825 = vsel %vm270, %v766, 0.0
    %v826 = vsel %vm270, %v767, 0.0
    %v827 = vadd.f32 %v825, %v826
    %v828 = vsel %vm270, %v768, 0.0
    %v829 = vadd.f32 %v827, %v828
    %v830 = vsel %vm270, %v769, 0.0
    %v831 = vadd.f32 %v829, %v830
    %v832 = vsel %vm270, %v770, 0.0
    %v833 = vadd.f32 %v831, %v832
    %v834 = vsel %vm270, %v771, 0.0
    %v835 = vadd.f32 %v833, %v834
    %v836 = vrot.slane %v835, 4
    %v837 = vadd.f32 %v835, %v836
    %v838 = vrot.slane %v837, 2
    %v839 = vadd.f32 %v837, %v838
    %v840 = vrot.slane %v839, 1
    %v841 = vadd.f32 %v839, %v840
    %v842 = vsel %vm270, %v772, 0.0
    %v843 = vsel %vm270, %v773, 0.0
    %v844 = vadd.f32 %v842, %v843
    %v845 = vsel %vm270, %v774, 0.0
    %v846 = vadd.f32 %v844, %v845
    %v847 = vsel %vm270, %v775, 0.0
    %v848 = vadd.f32 %v846, %v847
    %v849 = vsel %vm270, %v776, 0.0
    %v850 = vadd.f32 %v848, %v849
    %v851 = vsel %vm270, %v777, 0.0
    %v852 = vadd.f32 %v850, %v851
    %v853 = vrot.slane %v852, 4
    %v854 = vadd.f32 %v852, %v853
    %v855 = vrot.slane %v854, 2
    %v856 = vadd.f32 %v854, %v855
    %v857 = vrot.slane %v856, 1
    %v858 = vadd.f32 %v856, %v857
    %v859 = vsel %vm270, %v778, 0.0
    %v860 = vsel %vm270, %v779, 0.0
    %v861 = vadd.f32 %v859, %v860
    %v862 = vsel %vm270, %v780, 0.0
    %v863 = vadd.f32 %v861, %v862
    %v864 = vsel %vm270, %v781, 0.0
    %v865 = vadd.f32 %v863, %v864
    %v866 = vsel %vm270, %v782, 0.0
    %v867 = vadd.f32 %v865, %v866
    %v868 = vsel %vm270, %v783, 0.0
    %v869 = vadd.f32 %v867, %v868
    %v870 = vrot.slane %v869, 4
    %v871 = vadd.f32 %v869, %v870
    %v872 = vrot.slane %v871, 2
    %v873 = vadd.f32 %v871, %v872
    %v874 = vrot.slane %v873, 1
    %v875 = vadd.f32 %v873, %v874
    %v876 = vsel %vm270, %v784, 0.0
    %v877 = vsel %vm270, %v785, 0.0
    %v878 = vadd.f32 %v876, %v877
    %v879 = vsel %vm270, %v786, 0.0
    %v880 = vadd.f32 %v878, %v879
    %v881 = vsel %vm270, %v787, 0.0
    %v882 = vadd.f32 %v880, %v881
    %v883 = vsel %vm270, %v788, 0.0
    %v884 = vadd.f32 %v882, %v883
    %v885 = vsel %vm270, %v789, 0.0
    %v886 = vadd.f32 %v884, %v885
    %v887 = vrot.slane %v886, 4
    %v888 = vadd.f32 %v886, %v887
    %v889 = vrot.slane %v888, 2
    %v890 = vadd.f32 %v888, %v889
    %v891 = vrot.slane %v890, 1
    %v892 = vadd.f32 %v890, %v891
    %v893 = vsel %vm270, %v790, 0.0
    %v894 = vsel %vm270, %v791, 0.0
    %v895 = vadd.f32 %v893, %v894
    %v896 = vsel %vm270, %v792, 0.0
    %v897 = vadd.f32 %v895, %v896
    %v898 = vsel %vm270, %v793, 0.0
    %v899 = vadd.f32 %v897, %v898
    %v900 = vsel %vm270, %v794, 0.0
    %v901 = vadd.f32 %v899, %v900
    %v902 = vsel %vm270, %v795, 0.0
    %v903 = vadd.f32 %v901, %v902
    %v904 = vrot.slane %v903, 4
    %v905 = vadd.f32 %v903, %v904
    %v906 = vrot.slane %v905, 2
    %v907 = vadd.f32 %v905, %v906
    %v908 = vrot.slane %v907, 1
    %v909 = vadd.f32 %v907, %v908
    %v910 = vsel %vm270, %v796, 0.0
    %v911 = vsel %vm270, %v797, 0.0
    %v912 = vadd.f32 %v910, %v911
    %v913 = vsel %vm270, %v798, 0.0
    %v914 = vadd.f32 %v912, %v913
    %v915 = vsel %vm270, %v799, 0.0
    %v916 = vadd.f32 %v914, %v915
    %v917 = vsel %vm270, %v800, 0.0
    %v918 = vadd.f32 %v916, %v917
    %v919 = vsel %vm270, %v801, 0.0
    %v920 = vadd.f32 %v918, %v919
    %v921 = vrot.slane %v920, 4
    %v922 = vadd.f32 %v920, %v921
    %v923 = vrot.slane %v922, 2
    %v924 = vadd.f32 %v922, %v923
    %v925 = vrot.slane %v924, 1
    %v926 = vadd.f32 %v924, %v925
    %v927 = vsel %vm270, %v802, 0.0
    %v928 = vsel %vm270, %v803, 0.0
    %v929 = vadd.f32 %v927, %v928
    %v930 = vsel %vm270, %v804, 0.0
    %v931 = vadd.f32 %v929, %v930
    %v932 = vsel %vm270, %v805, 0.0
    %v933 = vadd.f32 %v931, %v932
    %v934 = vsel %vm270, %v806, 0.0
    %v935 = vadd.f32 %v933, %v934
    %v936 = vsel %vm270, %v807, 0.0
    %v937 = vadd.f32 %v935, %v936
    %v938 = vrot.slane %v937, 4
    %v939 = vadd.f32 %v937, %v938
    %v940 = vrot.slane %v939, 2
    %v941 = vadd.f32 %v939, %v940
    %v942 = vrot.slane %v941, 1
    %v943 = vadd.f32 %v941, %v942
    %v945 = vrot.slane %v394, 1
    %v946 = vrot.slane %v394, 2
    %v947 = vrot.slane %v394, 3
    %v948 = vrot.slane %v394, 4
    %v949 = vrot.slane %v394, 5
    %v950 = vrot.slane %v394, 6
    %v951 = vrot.slane %v394, 7
    %v960 = vmul.f32 %v824, %v394
    %v961 = vmul.f32 %v841, %v945
    %v962 = vmul.f32 %v858, %v946
    %v963 = vmul.f32 %v875, %v947
    %v964 = vmul.f32 %v892, %v948
    %v965 = vmul.f32 %v909, %v949
    %v966 = vmul.f32 %v926, %v950
    %v967 = vmul.f32 %v943, %v951
    %v976 = vrot.slane %v961, 7
    %vm977 = vcmask 1041409
    %v978 = vsel %vm977, %v976, %v960
    %v979 = vrot.slane %v962, 6
    %vm980 = vcmask 1042434
    %v981 = vsel %vm980, %v979, %v978
    %v982 = vrot.slane %v963, 5
    %vm983 = vcmask 1043459
    %v984 = vsel %vm983, %v982, %v981
    %v985 = vrot.slane %v964, 4
    %vm986 = vcmask 1044484
    %v987 = vsel %vm986, %v985, %v984
    %v988 = vrot.slane %v965, 3
    %vm989 = vcmask 1045509
    %v990 = vsel %vm989, %v988, %v987
    %v991 = vrot.slane %v966, 2
    %vm992 = vcmask 1046534
    %v993 = vsel %vm992, %v991, %v990
    %v994 = vrot.slane %v967, 1
    %vm995 = vcmask 1047559
    %v996 = vsel %vm995, %v994, %v993
    %v998 = vsel %vm270, %v996, 0.0
    %v999 = vrot.slane %v998, 4
    %v1000 = vadd.f32 %v998, %v999
    %v1001 = vrot.slane %v1000, 2
    %v1002 = vadd.f32 %v1000, %v1001
    %v1003 = vrot.slane %v1002, 1
    %v1004 = vadd.f32 %v1002, %v1003
    %v1005 = vadd.f32 %v1004, 0.0
    %v1007 = vcombine.high %v389, %v389
    %v1009 = vunpack.c.l.s4 1966171168
    %v1010 = vunpack.c.0.s8 %v1009
    %v1011 = vlaneseq
    %v1012 = vshrl.u32 %v1011, 7
    %v1013 = vsub.s32 %v1010, %v1012
    %v1014 = vrot.slane %v389, %v1013
    %v1016 = vunpack.c.l.s4 1966171168
    %v1017 = vunpack.c.0.s8 %v1016
    %v1018 = vlaneseq
    %v1019 = vshrl.u32 %v1018, 7
    %v1020 = vsub.s32 %v1017, %v1019
    %v1021 = vrot.slane %v1007, %v1020
    %v1022 = vcombine.high %v1014, %v1014
    %v1023 = vcombine.high %v1021, %v1021
    %v1025 = vunpack.c.l.s4 1966171168
    %v1026 = vunpack.c.0.s8 %v1025
    %v1027 = vlaneseq
    %v1028 = vshrl.u32 %v1027, 7
    %v1029 = vsub.s32 %v1026, %v1028
    %v1030 = vrot.slane %v1014, %v1029
    %v1032 = vunpack.c.l.s4 1966171168
    %v1033 = vunpack.c.0.s8 %v1032
    %v1034 = vlaneseq
    %v1035 = vshrl.u32 %v1034, 7
    %v1036 = vsub.s32 %v1033, %v1035
    %v1037 = vrot.slane %v1021, %v1036
    %v1039 = vunpack.c.l.s4 1966171168
    %v1040 = vunpack.c.0.s8 %v1039
    %v1041 = vlaneseq
    %v1042 = vshrl.u32 %v1041, 7
    %v1043 = vsub.s32 %v1040, %v1042
    %v1044 = vrot.slane %v1022, %v1043
    %v1046 = vunpack.c.l.s4 1966171168
    %v1047 = vunpack.c.0.s8 %v1046
    %v1048 = vlaneseq
    %v1049 = vshrl.u32 %v1048, 7
    %v1050 = vsub.s32 %v1047, %v1049
    %v1051 = vrot.slane %v1023, %v1050
    %v1052 = vcombine.high %v1030, %v1030
    %v1053 = vcombine.high %v1037, %v1037
    %v1054 = vcombine.high %v1044, %v1044
    %v1055 = vcombine.high %v1051, %v1051
    %v1056 = vlaneseq
    %v1057 = vshrl.u32 %v1056, 7
    %v1058 = vsub.s32 0, %v1057
    %v1059 = vrot.slane %v401, %v1058
    %1061 = vbcast.lane.b32.xlu0 %v1059, 256
    %v1062 = vpop.permute.xlu0 %1061
    %s1064 = sor.u32 256, 8
    %1065 = vbcast.lane.b32.xlu0 %v1059, %s1064
    %v1066 = vpop.permute.xlu0 %1065
    %s1068 = sor.u32 256, 16
    %1069 = vbcast.lane.b32.xlu0 %v1059, %s1068
    %v1070 = vpop.permute.xlu0 %1069
    %s1072 = sor.u32 256, 24
    %1073 = vbcast.lane.b32.xlu0 %v1059, %s1072
    %v1074 = vpop.permute.xlu0 %1073
    %s1076 = sor.u32 256, 32
    %1077 = vbcast.lane.b32.xlu0 %v1059, %s1076
    %v1078 = vpop.permute.xlu0 %1077
    %s1080 = sor.u32 256, 40
    %1081 = vbcast.lane.b32.xlu0 %v1059, %s1080
    %v1082 = vpop.permute.xlu0 %1081
    %v1083 = vlaneseq
    %v1084 = vshrl.u32 %v1083, 7
    %v1085 = vsub.s32 1, %v1084
    %v1086 = vrot.slane %v401, %v1085
    %1088 = vbcast.lane.b32.xlu0 %v1086, 256
    %v1089 = vpop.permute.xlu0 %1088
    %s1091 = sor.u32 256, 8
    %1092 = vbcast.lane.b32.xlu0 %v1086, %s1091
    %v1093 = vpop.permute.xlu0 %1092
    %s1095 = sor.u32 256, 16
    %1096 = vbcast.lane.b32.xlu0 %v1086, %s1095
    %v1097 = vpop.permute.xlu0 %1096
    %s1099 = sor.u32 256, 24
    %1100 = vbcast.lane.b32.xlu0 %v1086, %s1099
    %v1101 = vpop.permute.xlu0 %1100
    %s1103 = sor.u32 256, 32
    %1104 = vbcast.lane.b32.xlu0 %v1086, %s1103
    %v1105 = vpop.permute.xlu0 %1104
    %s1107 = sor.u32 256, 40
    %1108 = vbcast.lane.b32.xlu0 %v1086, %s1107
    %v1109 = vpop.permute.xlu0 %1108
    %v1110 = vlaneseq
    %v1111 = vshrl.u32 %v1110, 7
    %v1112 = vsub.s32 2, %v1111
    %v1113 = vrot.slane %v401, %v1112
    %1115 = vbcast.lane.b32.xlu0 %v1113, 256
    %v1116 = vpop.permute.xlu0 %1115
    %s1118 = sor.u32 256, 8
    %1119 = vbcast.lane.b32.xlu0 %v1113, %s1118
    %v1120 = vpop.permute.xlu0 %1119
    %s1122 = sor.u32 256, 16
    %1123 = vbcast.lane.b32.xlu0 %v1113, %s1122
    %v1124 = vpop.permute.xlu0 %1123
    %s1126 = sor.u32 256, 24
    %1127 = vbcast.lane.b32.xlu0 %v1113, %s1126
    %v1128 = vpop.permute.xlu0 %1127
    %s1130 = sor.u32 256, 32
    %1131 = vbcast.lane.b32.xlu0 %v1113, %s1130
    %v1132 = vpop.permute.xlu0 %1131
    %s1134 = sor.u32 256, 40
    %1135 = vbcast.lane.b32.xlu0 %v1113, %s1134
    %v1136 = vpop.permute.xlu0 %1135
    %v1137 = vlaneseq
    %v1138 = vshrl.u32 %v1137, 7
    %v1139 = vsub.s32 3, %v1138
    %v1140 = vrot.slane %v401, %v1139
    %1142 = vbcast.lane.b32.xlu0 %v1140, 256
    %v1143 = vpop.permute.xlu0 %1142
    %s1145 = sor.u32 256, 8
    %1146 = vbcast.lane.b32.xlu0 %v1140, %s1145
    %v1147 = vpop.permute.xlu0 %1146
    %s1149 = sor.u32 256, 16
    %1150 = vbcast.lane.b32.xlu0 %v1140, %s1149
    %v1151 = vpop.permute.xlu0 %1150
    %s1153 = sor.u32 256, 24
    %1154 = vbcast.lane.b32.xlu0 %v1140, %s1153
    %v1155 = vpop.permute.xlu0 %1154
    %s1157 = sor.u32 256, 32
    %1158 = vbcast.lane.b32.xlu0 %v1140, %s1157
    %v1159 = vpop.permute.xlu0 %1158
    %s1161 = sor.u32 256, 40
    %1162 = vbcast.lane.b32.xlu0 %v1140, %s1161
    %v1163 = vpop.permute.xlu0 %1162
    %v1164 = vlaneseq
    %v1165 = vshrl.u32 %v1164, 7
    %v1166 = vsub.s32 4, %v1165
    %v1167 = vrot.slane %v401, %v1166
    %1169 = vbcast.lane.b32.xlu0 %v1167, 256
    %v1170 = vpop.permute.xlu0 %1169
    %s1172 = sor.u32 256, 8
    %1173 = vbcast.lane.b32.xlu0 %v1167, %s1172
    %v1174 = vpop.permute.xlu0 %1173
    %s1176 = sor.u32 256, 16
    %1177 = vbcast.lane.b32.xlu0 %v1167, %s1176
    %v1178 = vpop.permute.xlu0 %1177
    %s1180 = sor.u32 256, 24
    %1181 = vbcast.lane.b32.xlu0 %v1167, %s1180
    %v1182 = vpop.permute.xlu0 %1181
    %s1184 = sor.u32 256, 32
    %1185 = vbcast.lane.b32.xlu0 %v1167, %s1184
    %v1186 = vpop.permute.xlu0 %1185
    %s1188 = sor.u32 256, 40
    %1189 = vbcast.lane.b32.xlu0 %v1167, %s1188
    %v1190 = vpop.permute.xlu0 %1189
    %v1191 = vlaneseq
    %v1192 = vshrl.u32 %v1191, 7
    %v1193 = vsub.s32 5, %v1192
    %v1194 = vrot.slane %v401, %v1193
    %1196 = vbcast.lane.b32.xlu0 %v1194, 256
    %v1197 = vpop.permute.xlu0 %1196
    %s1199 = sor.u32 256, 8
    %1200 = vbcast.lane.b32.xlu0 %v1194, %s1199
    %v1201 = vpop.permute.xlu0 %1200
    %s1203 = sor.u32 256, 16
    %1204 = vbcast.lane.b32.xlu0 %v1194, %s1203
    %v1205 = vpop.permute.xlu0 %1204
    %s1207 = sor.u32 256, 24
    %1208 = vbcast.lane.b32.xlu0 %v1194, %s1207
    %v1209 = vpop.permute.xlu0 %1208
    %s1211 = sor.u32 256, 32
    %1212 = vbcast.lane.b32.xlu0 %v1194, %s1211
    %v1213 = vpop.permute.xlu0 %1212
    %s1215 = sor.u32 256, 40
    %1216 = vbcast.lane.b32.xlu0 %v1194, %s1215
    %v1217 = vpop.permute.xlu0 %1216
    %v1218 = vlaneseq
    %v1219 = vshrl.u32 %v1218, 7
    %v1220 = vsub.s32 6, %v1219
    %v1221 = vrot.slane %v401, %v1220
    %1223 = vbcast.lane.b32.xlu0 %v1221, 256
    %v1224 = vpop.permute.xlu0 %1223
    %s1226 = sor.u32 256, 8
    %1227 = vbcast.lane.b32.xlu0 %v1221, %s1226
    %v1228 = vpop.permute.xlu0 %1227
    %s1230 = sor.u32 256, 16
    %1231 = vbcast.lane.b32.xlu0 %v1221, %s1230
    %v1232 = vpop.permute.xlu0 %1231
    %s1234 = sor.u32 256, 24
    %1235 = vbcast.lane.b32.xlu0 %v1221, %s1234
    %v1236 = vpop.permute.xlu0 %1235
    %s1238 = sor.u32 256, 32
    %1239 = vbcast.lane.b32.xlu0 %v1221, %s1238
    %v1240 = vpop.permute.xlu0 %1239
    %s1242 = sor.u32 256, 40
    %1243 = vbcast.lane.b32.xlu0 %v1221, %s1242
    %v1244 = vpop.permute.xlu0 %1243
    %v1245 = vlaneseq
    %v1246 = vshrl.u32 %v1245, 7
    %v1247 = vsub.s32 7, %v1246
    %v1248 = vrot.slane %v401, %v1247
    %1250 = vbcast.lane.b32.xlu0 %v1248, 256
    %v1251 = vpop.permute.xlu0 %1250
    %s1253 = sor.u32 256, 8
    %1254 = vbcast.lane.b32.xlu0 %v1248, %s1253
    %v1255 = vpop.permute.xlu0 %1254
    %s1257 = sor.u32 256, 16
    %1258 = vbcast.lane.b32.xlu0 %v1248, %s1257
    %v1259 = vpop.permute.xlu0 %1258
    %s1261 = sor.u32 256, 24
    %1262 = vbcast.lane.b32.xlu0 %v1248, %s1261
    %v1263 = vpop.permute.xlu0 %1262
    %s1265 = sor.u32 256, 32
    %1266 = vbcast.lane.b32.xlu0 %v1248, %s1265
    %v1267 = vpop.permute.xlu0 %1266
    %s1269 = sor.u32 256, 40
    %1270 = vbcast.lane.b32.xlu0 %v1248, %s1269
    %v1271 = vpop.permute.xlu0 %1270
    %v1272 = vlaneseq
    %v1273 = vshrl.u32 %v1272, 7
    %v1274 = vsub.s32 0, %v1273
    %v1275 = vrot.slane %v1030, %v1274
    %v1276 = vlaneseq
    %v1277 = vshrl.u32 %v1276, 7
    %v1278 = vsub.s32 0, %v1277
    %v1279 = vrot.slane %v1044, %v1278
    %v1280 = vlaneseq
    %v1281 = vshrl.u32 %v1280, 7
    %v1282 = vsub.s32 0, %v1281
    %v1283 = vrot.slane %v1052, %v1282
    %v1284 = vlaneseq
    %v1285 = vshrl.u32 %v1284, 7
    %v1286 = vsub.s32 0, %v1285
    %v1287 = vrot.slane %v1054, %v1286
    %v1288 = vlaneseq
    %v1289 = vshrl.u32 %v1288, 7
    %v1290 = vsub.s32 0, %v1289
    %v1291 = vrot.slane %v1037, %v1290
    %v1292 = vlaneseq
    %v1293 = vshrl.u32 %v1292, 7
    %v1294 = vsub.s32 0, %v1293
    %v1295 = vrot.slane %v1051, %v1294
    %v1296 = vlaneseq
    %v1297 = vshrl.u32 %v1296, 7
    %v1298 = vsub.s32 0, %v1297
    %v1299 = vrot.slane %v1053, %v1298
    %v1300 = vlaneseq
    %v1301 = vshrl.u32 %v1300, 7
    %v1302 = vsub.s32 0, %v1301
    %v1303 = vrot.slane %v1055, %v1302
    %v1312 = vsub.f32 %v1275, %v1062
    %v1313 = vsub.f32 %v1275, %v1066
    %v1314 = vsub.f32 %v1275, %v1070
    %v1315 = vsub.f32 %v1275, %v1074
    %v1316 = vsub.f32 %v1275, %v1078
    %v1317 = vsub.f32 %v1275, %v1082
    %v1318 = vsub.f32 %v1279, %v1089
    %v1319 = vsub.f32 %v1279, %v1093
    %v1320 = vsub.f32 %v1279, %v1097
    %v1321 = vsub.f32 %v1279, %v1101
    %v1322 = vsub.f32 %v1279, %v1105
    %v1323 = vsub.f32 %v1279, %v1109
    %v1324 = vsub.f32 %v1283, %v1116
    %v1325 = vsub.f32 %v1283, %v1120
    %v1326 = vsub.f32 %v1283, %v1124
    %v1327 = vsub.f32 %v1283, %v1128
    %v1328 = vsub.f32 %v1283, %v1132
    %v1329 = vsub.f32 %v1283, %v1136
    %v1330 = vsub.f32 %v1287, %v1143
    %v1331 = vsub.f32 %v1287, %v1147
    %v1332 = vsub.f32 %v1287, %v1151
    %v1333 = vsub.f32 %v1287, %v1155
    %v1334 = vsub.f32 %v1287, %v1159
    %v1335 = vsub.f32 %v1287, %v1163
    %v1336 = vsub.f32 %v1291, %v1170
    %v1337 = vsub.f32 %v1291, %v1174
    %v1338 = vsub.f32 %v1291, %v1178
    %v1339 = vsub.f32 %v1291, %v1182
    %v1340 = vsub.f32 %v1291, %v1186
    %v1341 = vsub.f32 %v1291, %v1190
    %v1342 = vsub.f32 %v1295, %v1197
    %v1343 = vsub.f32 %v1295, %v1201
    %v1344 = vsub.f32 %v1295, %v1205
    %v1345 = vsub.f32 %v1295, %v1209
    %v1346 = vsub.f32 %v1295, %v1213
    %v1347 = vsub.f32 %v1295, %v1217
    %v1348 = vsub.f32 %v1299, %v1224
    %v1349 = vsub.f32 %v1299, %v1228
    %v1350 = vsub.f32 %v1299, %v1232
    %v1351 = vsub.f32 %v1299, %v1236
    %v1352 = vsub.f32 %v1299, %v1240
    %v1353 = vsub.f32 %v1299, %v1244
    %v1354 = vsub.f32 %v1303, %v1251
    %v1355 = vsub.f32 %v1303, %v1255
    %v1356 = vsub.f32 %v1303, %v1259
    %v1357 = vsub.f32 %v1303, %v1263
    %v1358 = vsub.f32 %v1303, %v1267
    %v1359 = vsub.f32 %v1303, %v1271
    %v1360 = vmax.f32 %v1312, 0.0
    %v1361 = vmax.f32 %v1313, 0.0
    %v1362 = vmax.f32 %v1314, 0.0
    %v1363 = vmax.f32 %v1315, 0.0
    %v1364 = vmax.f32 %v1316, 0.0
    %v1365 = vmax.f32 %v1317, 0.0
    %v1366 = vmax.f32 %v1318, 0.0
    %v1367 = vmax.f32 %v1319, 0.0
    %v1368 = vmax.f32 %v1320, 0.0
    %v1369 = vmax.f32 %v1321, 0.0
    %v1370 = vmax.f32 %v1322, 0.0
    %v1371 = vmax.f32 %v1323, 0.0
    %v1372 = vmax.f32 %v1324, 0.0
    %v1373 = vmax.f32 %v1325, 0.0
    %v1374 = vmax.f32 %v1326, 0.0
    %v1375 = vmax.f32 %v1327, 0.0
    %v1376 = vmax.f32 %v1328, 0.0
    %v1377 = vmax.f32 %v1329, 0.0
    %v1378 = vmax.f32 %v1330, 0.0
    %v1379 = vmax.f32 %v1331, 0.0
    %v1380 = vmax.f32 %v1332, 0.0
    %v1381 = vmax.f32 %v1333, 0.0
    %v1382 = vmax.f32 %v1334, 0.0
    %v1383 = vmax.f32 %v1335, 0.0
    %v1384 = vmax.f32 %v1336, 0.0
    %v1385 = vmax.f32 %v1337, 0.0
    %v1386 = vmax.f32 %v1338, 0.0
    %v1387 = vmax.f32 %v1339, 0.0
    %v1388 = vmax.f32 %v1340, 0.0
    %v1389 = vmax.f32 %v1341, 0.0
    %v1390 = vmax.f32 %v1342, 0.0
    %v1391 = vmax.f32 %v1343, 0.0
    %v1392 = vmax.f32 %v1344, 0.0
    %v1393 = vmax.f32 %v1345, 0.0
    %v1394 = vmax.f32 %v1346, 0.0
    %v1395 = vmax.f32 %v1347, 0.0
    %v1396 = vmax.f32 %v1348, 0.0
    %v1397 = vmax.f32 %v1349, 0.0
    %v1398 = vmax.f32 %v1350, 0.0
    %v1399 = vmax.f32 %v1351, 0.0
    %v1400 = vmax.f32 %v1352, 0.0
    %v1401 = vmax.f32 %v1353, 0.0
    %v1402 = vmax.f32 %v1354, 0.0
    %v1403 = vmax.f32 %v1355, 0.0
    %v1404 = vmax.f32 %v1356, 0.0
    %v1405 = vmax.f32 %v1357, 0.0
    %v1406 = vmax.f32 %v1358, 0.0
    %v1407 = vmax.f32 %v1359, 0.0
    %v1408 = vsel %vm270, %v1360, 0.0
    %v1409 = vsel %vm270, %v1361, 0.0
    %v1410 = vadd.f32 %v1408, %v1409
    %v1411 = vsel %vm270, %v1362, 0.0
    %v1412 = vadd.f32 %v1410, %v1411
    %v1413 = vsel %vm270, %v1363, 0.0
    %v1414 = vadd.f32 %v1412, %v1413
    %v1415 = vsel %vm270, %v1364, 0.0
    %v1416 = vadd.f32 %v1414, %v1415
    %v1417 = vsel %vm270, %v1365, 0.0
    %v1418 = vadd.f32 %v1416, %v1417
    %v1419 = vrot.slane %v1418, 4
    %v1420 = vadd.f32 %v1418, %v1419
    %v1421 = vrot.slane %v1420, 2
    %v1422 = vadd.f32 %v1420, %v1421
    %v1423 = vrot.slane %v1422, 1
    %v1424 = vadd.f32 %v1422, %v1423
    %v1425 = vsel %vm270, %v1366, 0.0
    %v1426 = vsel %vm270, %v1367, 0.0
    %v1427 = vadd.f32 %v1425, %v1426
    %v1428 = vsel %vm270, %v1368, 0.0
    %v1429 = vadd.f32 %v1427, %v1428
    %v1430 = vsel %vm270, %v1369, 0.0
    %v1431 = vadd.f32 %v1429, %v1430
    %v1432 = vsel %vm270, %v1370, 0.0
    %v1433 = vadd.f32 %v1431, %v1432
    %v1434 = vsel %vm270, %v1371, 0.0
    %v1435 = vadd.f32 %v1433, %v1434
    %v1436 = vrot.slane %v1435, 4
    %v1437 = vadd.f32 %v1435, %v1436
    %v1438 = vrot.slane %v1437, 2
    %v1439 = vadd.f32 %v1437, %v1438
    %v1440 = vrot.slane %v1439, 1
    %v1441 = vadd.f32 %v1439, %v1440
    %v1442 = vsel %vm270, %v1372, 0.0
    %v1443 = vsel %vm270, %v1373, 0.0
    %v1444 = vadd.f32 %v1442, %v1443
    %v1445 = vsel %vm270, %v1374, 0.0
    %v1446 = vadd.f32 %v1444, %v1445
    %v1447 = vsel %vm270, %v1375, 0.0
    %v1448 = vadd.f32 %v1446, %v1447
    %v1449 = vsel %vm270, %v1376, 0.0
    %v1450 = vadd.f32 %v1448, %v1449
    %v1451 = vsel %vm270, %v1377, 0.0
    %v1452 = vadd.f32 %v1450, %v1451
    %v1453 = vrot.slane %v1452, 4
    %v1454 = vadd.f32 %v1452, %v1453
    %v1455 = vrot.slane %v1454, 2
    %v1456 = vadd.f32 %v1454, %v1455
    %v1457 = vrot.slane %v1456, 1
    %v1458 = vadd.f32 %v1456, %v1457
    %v1459 = vsel %vm270, %v1378, 0.0
    %v1460 = vsel %vm270, %v1379, 0.0
    %v1461 = vadd.f32 %v1459, %v1460
    %v1462 = vsel %vm270, %v1380, 0.0
    %v1463 = vadd.f32 %v1461, %v1462
    %v1464 = vsel %vm270, %v1381, 0.0
    %v1465 = vadd.f32 %v1463, %v1464
    %v1466 = vsel %vm270, %v1382, 0.0
    %v1467 = vadd.f32 %v1465, %v1466
    %v1468 = vsel %vm270, %v1383, 0.0
    %v1469 = vadd.f32 %v1467, %v1468
    %v1470 = vrot.slane %v1469, 4
    %v1471 = vadd.f32 %v1469, %v1470
    %v1472 = vrot.slane %v1471, 2
    %v1473 = vadd.f32 %v1471, %v1472
    %v1474 = vrot.slane %v1473, 1
    %v1475 = vadd.f32 %v1473, %v1474
    %v1476 = vsel %vm270, %v1384, 0.0
    %v1477 = vsel %vm270, %v1385, 0.0
    %v1478 = vadd.f32 %v1476, %v1477
    %v1479 = vsel %vm270, %v1386, 0.0
    %v1480 = vadd.f32 %v1478, %v1479
    %v1481 = vsel %vm270, %v1387, 0.0
    %v1482 = vadd.f32 %v1480, %v1481
    %v1483 = vsel %vm270, %v1388, 0.0
    %v1484 = vadd.f32 %v1482, %v1483
    %v1485 = vsel %vm270, %v1389, 0.0
    %v1486 = vadd.f32 %v1484, %v1485
    %v1487 = vrot.slane %v1486, 4
    %v1488 = vadd.f32 %v1486, %v1487
    %v1489 = vrot.slane %v1488, 2
    %v1490 = vadd.f32 %v1488, %v1489
    %v1491 = vrot.slane %v1490, 1
    %v1492 = vadd.f32 %v1490, %v1491
    %v1493 = vsel %vm270, %v1390, 0.0
    %v1494 = vsel %vm270, %v1391, 0.0
    %v1495 = vadd.f32 %v1493, %v1494
    %v1496 = vsel %vm270, %v1392, 0.0
    %v1497 = vadd.f32 %v1495, %v1496
    %v1498 = vsel %vm270, %v1393, 0.0
    %v1499 = vadd.f32 %v1497, %v1498
    %v1500 = vsel %vm270, %v1394, 0.0
    %v1501 = vadd.f32 %v1499, %v1500
    %v1502 = vsel %vm270, %v1395, 0.0
    %v1503 = vadd.f32 %v1501, %v1502
    %v1504 = vrot.slane %v1503, 4
    %v1505 = vadd.f32 %v1503, %v1504
    %v1506 = vrot.slane %v1505, 2
    %v1507 = vadd.f32 %v1505, %v1506
    %v1508 = vrot.slane %v1507, 1
    %v1509 = vadd.f32 %v1507, %v1508
    %v1510 = vsel %vm270, %v1396, 0.0
    %v1511 = vsel %vm270, %v1397, 0.0
    %v1512 = vadd.f32 %v1510, %v1511
    %v1513 = vsel %vm270, %v1398, 0.0
    %v1514 = vadd.f32 %v1512, %v1513
    %v1515 = vsel %vm270, %v1399, 0.0
    %v1516 = vadd.f32 %v1514, %v1515
    %v1517 = vsel %vm270, %v1400, 0.0
    %v1518 = vadd.f32 %v1516, %v1517
    %v1519 = vsel %vm270, %v1401, 0.0
    %v1520 = vadd.f32 %v1518, %v1519
    %v1521 = vrot.slane %v1520, 4
    %v1522 = vadd.f32 %v1520, %v1521
    %v1523 = vrot.slane %v1522, 2
    %v1524 = vadd.f32 %v1522, %v1523
    %v1525 = vrot.slane %v1524, 1
    %v1526 = vadd.f32 %v1524, %v1525
    %v1527 = vsel %vm270, %v1402, 0.0
    %v1528 = vsel %vm270, %v1403, 0.0
    %v1529 = vadd.f32 %v1527, %v1528
    %v1530 = vsel %vm270, %v1404, 0.0
    %v1531 = vadd.f32 %v1529, %v1530
    %v1532 = vsel %vm270, %v1405, 0.0
    %v1533 = vadd.f32 %v1531, %v1532
    %v1534 = vsel %vm270, %v1406, 0.0
    %v1535 = vadd.f32 %v1533, %v1534
    %v1536 = vsel %vm270, %v1407, 0.0
    %v1537 = vadd.f32 %v1535, %v1536
    %v1538 = vrot.slane %v1537, 4
    %v1539 = vadd.f32 %v1537, %v1538
    %v1540 = vrot.slane %v1539, 2
    %v1541 = vadd.f32 %v1539, %v1540
    %v1542 = vrot.slane %v1541, 1
    %v1543 = vadd.f32 %v1541, %v1542
    %v1545 = vrot.slane %v395, 1
    %v1546 = vrot.slane %v395, 2
    %v1547 = vrot.slane %v395, 3
    %v1548 = vrot.slane %v395, 4
    %v1549 = vrot.slane %v395, 5
    %v1550 = vrot.slane %v395, 6
    %v1551 = vrot.slane %v395, 7
    %v1560 = vmul.f32 %v1424, %v395
    %v1561 = vmul.f32 %v1441, %v1545
    %v1562 = vmul.f32 %v1458, %v1546
    %v1563 = vmul.f32 %v1475, %v1547
    %v1564 = vmul.f32 %v1492, %v1548
    %v1565 = vmul.f32 %v1509, %v1549
    %v1566 = vmul.f32 %v1526, %v1550
    %v1567 = vmul.f32 %v1543, %v1551
    %v1576 = vrot.slane %v1561, 7
    %v1577 = vsel %vm977, %v1576, %v1560
    %v1578 = vrot.slane %v1562, 6
    %v1579 = vsel %vm980, %v1578, %v1577
    %v1580 = vrot.slane %v1563, 5
    %v1581 = vsel %vm983, %v1580, %v1579
    %v1582 = vrot.slane %v1564, 4
    %v1583 = vsel %vm986, %v1582, %v1581
    %v1584 = vrot.slane %v1565, 3
    %v1585 = vsel %vm989, %v1584, %v1583
    %v1586 = vrot.slane %v1566, 2
    %v1587 = vsel %vm992, %v1586, %v1585
    %v1588 = vrot.slane %v1567, 1
    %v1589 = vsel %vm995, %v1588, %v1587
    %v1591 = vsel %vm270, %v1589, 0.0
    %v1592 = vrot.slane %v1591, 4
    %v1593 = vadd.f32 %v1591, %v1592
    %v1594 = vrot.slane %v1593, 2
    %v1595 = vadd.f32 %v1593, %v1594
    %v1596 = vrot.slane %v1595, 1
    %v1597 = vadd.f32 %v1595, %v1596
    %v1598 = vadd.f32 %v1005, %v1597
    %v1600 = vcombine.high %v390, %v390
    %v1602 = vunpack.c.l.s4 1966171168
    %v1603 = vunpack.c.0.s8 %v1602
    %v1604 = vlaneseq
    %v1605 = vshrl.u32 %v1604, 7
    %v1606 = vsub.s32 %v1603, %v1605
    %v1607 = vrot.slane %v390, %v1606
    %v1609 = vunpack.c.l.s4 1966171168
    %v1610 = vunpack.c.0.s8 %v1609
    %v1611 = vlaneseq
    %v1612 = vshrl.u32 %v1611, 7
    %v1613 = vsub.s32 %v1610, %v1612
    %v1614 = vrot.slane %v1600, %v1613
    %v1615 = vcombine.high %v1607, %v1607
    %v1616 = vcombine.high %v1614, %v1614
    %v1618 = vunpack.c.l.s4 1966171168
    %v1619 = vunpack.c.0.s8 %v1618
    %v1620 = vlaneseq
    %v1621 = vshrl.u32 %v1620, 7
    %v1622 = vsub.s32 %v1619, %v1621
    %v1623 = vrot.slane %v1607, %v1622
    %v1625 = vunpack.c.l.s4 1966171168
    %v1626 = vunpack.c.0.s8 %v1625
    %v1627 = vlaneseq
    %v1628 = vshrl.u32 %v1627, 7
    %v1629 = vsub.s32 %v1626, %v1628
    %v1630 = vrot.slane %v1614, %v1629
    %v1632 = vunpack.c.l.s4 1966171168
    %v1633 = vunpack.c.0.s8 %v1632
    %v1634 = vlaneseq
    %v1635 = vshrl.u32 %v1634, 7
    %v1636 = vsub.s32 %v1633, %v1635
    %v1637 = vrot.slane %v1615, %v1636
    %v1639 = vunpack.c.l.s4 1966171168
    %v1640 = vunpack.c.0.s8 %v1639
    %v1641 = vlaneseq
    %v1642 = vshrl.u32 %v1641, 7
    %v1643 = vsub.s32 %v1640, %v1642
    %v1644 = vrot.slane %v1616, %v1643
    %v1645 = vcombine.high %v1623, %v1623
    %v1646 = vcombine.high %v1630, %v1630
    %v1647 = vcombine.high %v1637, %v1637
    %v1648 = vcombine.high %v1644, %v1644
    %v1649 = vlaneseq
    %v1650 = vshrl.u32 %v1649, 7
    %v1651 = vsub.s32 0, %v1650
    %v1652 = vrot.slane %v402, %v1651
    %1654 = vbcast.lane.b32.xlu0 %v1652, 256
    %v1655 = vpop.permute.xlu0 %1654
    %s1657 = sor.u32 256, 8
    %1658 = vbcast.lane.b32.xlu0 %v1652, %s1657
    %v1659 = vpop.permute.xlu0 %1658
    %s1661 = sor.u32 256, 16
    %1662 = vbcast.lane.b32.xlu0 %v1652, %s1661
    %v1663 = vpop.permute.xlu0 %1662
    %s1665 = sor.u32 256, 24
    %1666 = vbcast.lane.b32.xlu0 %v1652, %s1665
    %v1667 = vpop.permute.xlu0 %1666
    %s1669 = sor.u32 256, 32
    %1670 = vbcast.lane.b32.xlu0 %v1652, %s1669
    %v1671 = vpop.permute.xlu0 %1670
    %s1673 = sor.u32 256, 40
    %1674 = vbcast.lane.b32.xlu0 %v1652, %s1673
    %v1675 = vpop.permute.xlu0 %1674
    %v1676 = vlaneseq
    %v1677 = vshrl.u32 %v1676, 7
    %v1678 = vsub.s32 1, %v1677
    %v1679 = vrot.slane %v402, %v1678
    %1681 = vbcast.lane.b32.xlu0 %v1679, 256
    %v1682 = vpop.permute.xlu0 %1681
    %s1684 = sor.u32 256, 8
    %1685 = vbcast.lane.b32.xlu0 %v1679, %s1684
    %v1686 = vpop.permute.xlu0 %1685
    %s1688 = sor.u32 256, 16
    %1689 = vbcast.lane.b32.xlu0 %v1679, %s1688
    %v1690 = vpop.permute.xlu0 %1689
    %s1692 = sor.u32 256, 24
    %1693 = vbcast.lane.b32.xlu0 %v1679, %s1692
    %v1694 = vpop.permute.xlu0 %1693
    %s1696 = sor.u32 256, 32
    %1697 = vbcast.lane.b32.xlu0 %v1679, %s1696
    %v1698 = vpop.permute.xlu0 %1697
    %s1700 = sor.u32 256, 40
    %1701 = vbcast.lane.b32.xlu0 %v1679, %s1700
    %v1702 = vpop.permute.xlu0 %1701
    %v1703 = vlaneseq
    %v1704 = vshrl.u32 %v1703, 7
    %v1705 = vsub.s32 2, %v1704
    %v1706 = vrot.slane %v402, %v1705
    %1708 = vbcast.lane.b32.xlu0 %v1706, 256
    %v1709 = vpop.permute.xlu0 %1708
    %s1711 = sor.u32 256, 8
    %1712 = vbcast.lane.b32.xlu0 %v1706, %s1711
    %v1713 = vpop.permute.xlu0 %1712
    %s1715 = sor.u32 256, 16
    %1716 = vbcast.lane.b32.xlu0 %v1706, %s1715
    %v1717 = vpop.permute.xlu0 %1716
    %s1719 = sor.u32 256, 24
    %1720 = vbcast.lane.b32.xlu0 %v1706, %s1719
    %v1721 = vpop.permute.xlu0 %1720
    %s1723 = sor.u32 256, 32
    %1724 = vbcast.lane.b32.xlu0 %v1706, %s1723
    %v1725 = vpop.permute.xlu0 %1724
    %s1727 = sor.u32 256, 40
    %1728 = vbcast.lane.b32.xlu0 %v1706, %s1727
    %v1729 = vpop.permute.xlu0 %1728
    %v1730 = vlaneseq
    %v1731 = vshrl.u32 %v1730, 7
    %v1732 = vsub.s32 3, %v1731
    %v1733 = vrot.slane %v402, %v1732
    %1735 = vbcast.lane.b32.xlu0 %v1733, 256
    %v1736 = vpop.permute.xlu0 %1735
    %s1738 = sor.u32 256, 8
    %1739 = vbcast.lane.b32.xlu0 %v1733, %s1738
    %v1740 = vpop.permute.xlu0 %1739
    %s1742 = sor.u32 256, 16
    %1743 = vbcast.lane.b32.xlu0 %v1733, %s1742
    %v1744 = vpop.permute.xlu0 %1743
    %s1746 = sor.u32 256, 24
    %1747 = vbcast.lane.b32.xlu0 %v1733, %s1746
    %v1748 = vpop.permute.xlu0 %1747
    %s1750 = sor.u32 256, 32
    %1751 = vbcast.lane.b32.xlu0 %v1733, %s1750
    %v1752 = vpop.permute.xlu0 %1751
    %s1754 = sor.u32 256, 40
    %1755 = vbcast.lane.b32.xlu0 %v1733, %s1754
    %v1756 = vpop.permute.xlu0 %1755
    %v1757 = vlaneseq
    %v1758 = vshrl.u32 %v1757, 7
    %v1759 = vsub.s32 4, %v1758
    %v1760 = vrot.slane %v402, %v1759
    %1762 = vbcast.lane.b32.xlu0 %v1760, 256
    %v1763 = vpop.permute.xlu0 %1762
    %s1765 = sor.u32 256, 8
    %1766 = vbcast.lane.b32.xlu0 %v1760, %s1765
    %v1767 = vpop.permute.xlu0 %1766
    %s1769 = sor.u32 256, 16
    %1770 = vbcast.lane.b32.xlu0 %v1760, %s1769
    %v1771 = vpop.permute.xlu0 %1770
    %s1773 = sor.u32 256, 24
    %1774 = vbcast.lane.b32.xlu0 %v1760, %s1773
    %v1775 = vpop.permute.xlu0 %1774
    %s1777 = sor.u32 256, 32
    %1778 = vbcast.lane.b32.xlu0 %v1760, %s1777
    %v1779 = vpop.permute.xlu0 %1778
    %s1781 = sor.u32 256, 40
    %1782 = vbcast.lane.b32.xlu0 %v1760, %s1781
    %v1783 = vpop.permute.xlu0 %1782
    %v1784 = vlaneseq
    %v1785 = vshrl.u32 %v1784, 7
    %v1786 = vsub.s32 5, %v1785
    %v1787 = vrot.slane %v402, %v1786
    %1789 = vbcast.lane.b32.xlu0 %v1787, 256
    %v1790 = vpop.permute.xlu0 %1789
    %s1792 = sor.u32 256, 8
    %1793 = vbcast.lane.b32.xlu0 %v1787, %s1792
    %v1794 = vpop.permute.xlu0 %1793
    %s1796 = sor.u32 256, 16
    %1797 = vbcast.lane.b32.xlu0 %v1787, %s1796
    %v1798 = vpop.permute.xlu0 %1797
    %s1800 = sor.u32 256, 24
    %1801 = vbcast.lane.b32.xlu0 %v1787, %s1800
    %v1802 = vpop.permute.xlu0 %1801
    %s1804 = sor.u32 256, 32
    %1805 = vbcast.lane.b32.xlu0 %v1787, %s1804
    %v1806 = vpop.permute.xlu0 %1805
    %s1808 = sor.u32 256, 40
    %1809 = vbcast.lane.b32.xlu0 %v1787, %s1808
    %v1810 = vpop.permute.xlu0 %1809
    %v1811 = vlaneseq
    %v1812 = vshrl.u32 %v1811, 7
    %v1813 = vsub.s32 6, %v1812
    %v1814 = vrot.slane %v402, %v1813
    %1816 = vbcast.lane.b32.xlu0 %v1814, 256
    %v1817 = vpop.permute.xlu0 %1816
    %s1819 = sor.u32 256, 8
    %1820 = vbcast.lane.b32.xlu0 %v1814, %s1819
    %v1821 = vpop.permute.xlu0 %1820
    %s1823 = sor.u32 256, 16
    %1824 = vbcast.lane.b32.xlu0 %v1814, %s1823
    %v1825 = vpop.permute.xlu0 %1824
    %s1827 = sor.u32 256, 24
    %1828 = vbcast.lane.b32.xlu0 %v1814, %s1827
    %v1829 = vpop.permute.xlu0 %1828
    %s1831 = sor.u32 256, 32
    %1832 = vbcast.lane.b32.xlu0 %v1814, %s1831
    %v1833 = vpop.permute.xlu0 %1832
    %s1835 = sor.u32 256, 40
    %1836 = vbcast.lane.b32.xlu0 %v1814, %s1835
    %v1837 = vpop.permute.xlu0 %1836
    %v1838 = vlaneseq
    %v1839 = vshrl.u32 %v1838, 7
    %v1840 = vsub.s32 7, %v1839
    %v1841 = vrot.slane %v402, %v1840
    %1843 = vbcast.lane.b32.xlu0 %v1841, 256
    %v1844 = vpop.permute.xlu0 %1843
    %s1846 = sor.u32 256, 8
    %1847 = vbcast.lane.b32.xlu0 %v1841, %s1846
    %v1848 = vpop.permute.xlu0 %1847
    %s1850 = sor.u32 256, 16
    %1851 = vbcast.lane.b32.xlu0 %v1841, %s1850
    %v1852 = vpop.permute.xlu0 %1851
    %s1854 = sor.u32 256, 24
    %1855 = vbcast.lane.b32.xlu0 %v1841, %s1854
    %v1856 = vpop.permute.xlu0 %1855
    %s1858 = sor.u32 256, 32
    %1859 = vbcast.lane.b32.xlu0 %v1841, %s1858
    %v1860 = vpop.permute.xlu0 %1859
    %s1862 = sor.u32 256, 40
    %1863 = vbcast.lane.b32.xlu0 %v1841, %s1862
    %v1864 = vpop.permute.xlu0 %1863
    %v1865 = vlaneseq
    %v1866 = vshrl.u32 %v1865, 7
    %v1867 = vsub.s32 0, %v1866
    %v1868 = vrot.slane %v1623, %v1867
    %v1869 = vlaneseq
    %v1870 = vshrl.u32 %v1869, 7
    %v1871 = vsub.s32 0, %v1870
    %v1872 = vrot.slane %v1637, %v1871
    %v1873 = vlaneseq
    %v1874 = vshrl.u32 %v1873, 7
    %v1875 = vsub.s32 0, %v1874
    %v1876 = vrot.slane %v1645, %v1875
    %v1877 = vlaneseq
    %v1878 = vshrl.u32 %v1877, 7
    %v1879 = vsub.s32 0, %v1878
    %v1880 = vrot.slane %v1647, %v1879
    %v1881 = vlaneseq
    %v1882 = vshrl.u32 %v1881, 7
    %v1883 = vsub.s32 0, %v1882
    %v1884 = vrot.slane %v1630, %v1883
    %v1885 = vlaneseq
    %v1886 = vshrl.u32 %v1885, 7
    %v1887 = vsub.s32 0, %v1886
    %v1888 = vrot.slane %v1644, %v1887
    %v1889 = vlaneseq
    %v1890 = vshrl.u32 %v1889, 7
    %v1891 = vsub.s32 0, %v1890
    %v1892 = vrot.slane %v1646, %v1891
    %v1893 = vlaneseq
    %v1894 = vshrl.u32 %v1893, 7
    %v1895 = vsub.s32 0, %v1894
    %v1896 = vrot.slane %v1648, %v1895
    %v1905 = vsub.f32 %v1868, %v1655
    %v1906 = vsub.f32 %v1868, %v1659
    %v1907 = vsub.f32 %v1868, %v1663
    %v1908 = vsub.f32 %v1868, %v1667
    %v1909 = vsub.f32 %v1868, %v1671
    %v1910 = vsub.f32 %v1868, %v1675
    %v1911 = vsub.f32 %v1872, %v1682
    %v1912 = vsub.f32 %v1872, %v1686
    %v1913 = vsub.f32 %v1872, %v1690
    %v1914 = vsub.f32 %v1872, %v1694
    %v1915 = vsub.f32 %v1872, %v1698
    %v1916 = vsub.f32 %v1872, %v1702
    %v1917 = vsub.f32 %v1876, %v1709
    %v1918 = vsub.f32 %v1876, %v1713
    %v1919 = vsub.f32 %v1876, %v1717
    %v1920 = vsub.f32 %v1876, %v1721
    %v1921 = vsub.f32 %v1876, %v1725
    %v1922 = vsub.f32 %v1876, %v1729
    %v1923 = vsub.f32 %v1880, %v1736
    %v1924 = vsub.f32 %v1880, %v1740
    %v1925 = vsub.f32 %v1880, %v1744
    %v1926 = vsub.f32 %v1880, %v1748
    %v1927 = vsub.f32 %v1880, %v1752
    %v1928 = vsub.f32 %v1880, %v1756
    %v1929 = vsub.f32 %v1884, %v1763
    %v1930 = vsub.f32 %v1884, %v1767
    %v1931 = vsub.f32 %v1884, %v1771
    %v1932 = vsub.f32 %v1884, %v1775
    %v1933 = vsub.f32 %v1884, %v1779
    %v1934 = vsub.f32 %v1884, %v1783
    %v1935 = vsub.f32 %v1888, %v1790
    %v1936 = vsub.f32 %v1888, %v1794
    %v1937 = vsub.f32 %v1888, %v1798
    %v1938 = vsub.f32 %v1888, %v1802
    %v1939 = vsub.f32 %v1888, %v1806
    %v1940 = vsub.f32 %v1888, %v1810
    %v1941 = vsub.f32 %v1892, %v1817
    %v1942 = vsub.f32 %v1892, %v1821
    %v1943 = vsub.f32 %v1892, %v1825
    %v1944 = vsub.f32 %v1892, %v1829
    %v1945 = vsub.f32 %v1892, %v1833
    %v1946 = vsub.f32 %v1892, %v1837
    %v1947 = vsub.f32 %v1896, %v1844
    %v1948 = vsub.f32 %v1896, %v1848
    %v1949 = vsub.f32 %v1896, %v1852
    %v1950 = vsub.f32 %v1896, %v1856
    %v1951 = vsub.f32 %v1896, %v1860
    %v1952 = vsub.f32 %v1896, %v1864
    %v1953 = vmax.f32 %v1905, 0.0
    %v1954 = vmax.f32 %v1906, 0.0
    %v1955 = vmax.f32 %v1907, 0.0
    %v1956 = vmax.f32 %v1908, 0.0
    %v1957 = vmax.f32 %v1909, 0.0
    %v1958 = vmax.f32 %v1910, 0.0
    %v1959 = vmax.f32 %v1911, 0.0
    %v1960 = vmax.f32 %v1912, 0.0
    %v1961 = vmax.f32 %v1913, 0.0
    %v1962 = vmax.f32 %v1914, 0.0
    %v1963 = vmax.f32 %v1915, 0.0
    %v1964 = vmax.f32 %v1916, 0.0
    %v1965 = vmax.f32 %v1917, 0.0
    %v1966 = vmax.f32 %v1918, 0.0
    %v1967 = vmax.f32 %v1919, 0.0
    %v1968 = vmax.f32 %v1920, 0.0
    %v1969 = vmax.f32 %v1921, 0.0
    %v1970 = vmax.f32 %v1922, 0.0
    %v1971 = vmax.f32 %v1923, 0.0
    %v1972 = vmax.f32 %v1924, 0.0
    %v1973 = vmax.f32 %v1925, 0.0
    %v1974 = vmax.f32 %v1926, 0.0
    %v1975 = vmax.f32 %v1927, 0.0
    %v1976 = vmax.f32 %v1928, 0.0
    %v1977 = vmax.f32 %v1929, 0.0
    %v1978 = vmax.f32 %v1930, 0.0
    %v1979 = vmax.f32 %v1931, 0.0
    %v1980 = vmax.f32 %v1932, 0.0
    %v1981 = vmax.f32 %v1933, 0.0
    %v1982 = vmax.f32 %v1934, 0.0
    %v1983 = vmax.f32 %v1935, 0.0
    %v1984 = vmax.f32 %v1936, 0.0
    %v1985 = vmax.f32 %v1937, 0.0
    %v1986 = vmax.f32 %v1938, 0.0
    %v1987 = vmax.f32 %v1939, 0.0
    %v1988 = vmax.f32 %v1940, 0.0
    %v1989 = vmax.f32 %v1941, 0.0
    %v1990 = vmax.f32 %v1942, 0.0
    %v1991 = vmax.f32 %v1943, 0.0
    %v1992 = vmax.f32 %v1944, 0.0
    %v1993 = vmax.f32 %v1945, 0.0
    %v1994 = vmax.f32 %v1946, 0.0
    %v1995 = vmax.f32 %v1947, 0.0
    %v1996 = vmax.f32 %v1948, 0.0
    %v1997 = vmax.f32 %v1949, 0.0
    %v1998 = vmax.f32 %v1950, 0.0
    %v1999 = vmax.f32 %v1951, 0.0
    %v2000 = vmax.f32 %v1952, 0.0
    %v2001 = vsel %vm270, %v1953, 0.0
    %v2002 = vsel %vm270, %v1954, 0.0
    %v2003 = vadd.f32 %v2001, %v2002
    %v2004 = vsel %vm270, %v1955, 0.0
    %v2005 = vadd.f32 %v2003, %v2004
    %v2006 = vsel %vm270, %v1956, 0.0
    %v2007 = vadd.f32 %v2005, %v2006
    %v2008 = vsel %vm270, %v1957, 0.0
    %v2009 = vadd.f32 %v2007, %v2008
    %v2010 = vsel %vm270, %v1958, 0.0
    %v2011 = vadd.f32 %v2009, %v2010
    %v2012 = vrot.slane %v2011, 4
    %v2013 = vadd.f32 %v2011, %v2012
    %v2014 = vrot.slane %v2013, 2
    %v2015 = vadd.f32 %v2013, %v2014
    %v2016 = vrot.slane %v2015, 1
    %v2017 = vadd.f32 %v2015, %v2016
    %v2018 = vsel %vm270, %v1959, 0.0
    %v2019 = vsel %vm270, %v1960, 0.0
    %v2020 = vadd.f32 %v2018, %v2019
    %v2021 = vsel %vm270, %v1961, 0.0
    %v2022 = vadd.f32 %v2020, %v2021
    %v2023 = vsel %vm270, %v1962, 0.0
    %v2024 = vadd.f32 %v2022, %v2023
    %v2025 = vsel %vm270, %v1963, 0.0
    %v2026 = vadd.f32 %v2024, %v2025
    %v2027 = vsel %vm270, %v1964, 0.0
    %v2028 = vadd.f32 %v2026, %v2027
    %v2029 = vrot.slane %v2028, 4
    %v2030 = vadd.f32 %v2028, %v2029
    %v2031 = vrot.slane %v2030, 2
    %v2032 = vadd.f32 %v2030, %v2031
    %v2033 = vrot.slane %v2032, 1
    %v2034 = vadd.f32 %v2032, %v2033
    %v2035 = vsel %vm270, %v1965, 0.0
    %v2036 = vsel %vm270, %v1966, 0.0
    %v2037 = vadd.f32 %v2035, %v2036
    %v2038 = vsel %vm270, %v1967, 0.0
    %v2039 = vadd.f32 %v2037, %v2038
    %v2040 = vsel %vm270, %v1968, 0.0
    %v2041 = vadd.f32 %v2039, %v2040
    %v2042 = vsel %vm270, %v1969, 0.0
    %v2043 = vadd.f32 %v2041, %v2042
    %v2044 = vsel %vm270, %v1970, 0.0
    %v2045 = vadd.f32 %v2043, %v2044
    %v2046 = vrot.slane %v2045, 4
    %v2047 = vadd.f32 %v2045, %v2046
    %v2048 = vrot.slane %v2047, 2
    %v2049 = vadd.f32 %v2047, %v2048
    %v2050 = vrot.slane %v2049, 1
    %v2051 = vadd.f32 %v2049, %v2050
    %v2052 = vsel %vm270, %v1971, 0.0
    %v2053 = vsel %vm270, %v1972, 0.0
    %v2054 = vadd.f32 %v2052, %v2053
    %v2055 = vsel %vm270, %v1973, 0.0
    %v2056 = vadd.f32 %v2054, %v2055
    %v2057 = vsel %vm270, %v1974, 0.0
    %v2058 = vadd.f32 %v2056, %v2057
    %v2059 = vsel %vm270, %v1975, 0.0
    %v2060 = vadd.f32 %v2058, %v2059
    %v2061 = vsel %vm270, %v1976, 0.0
    %v2062 = vadd.f32 %v2060, %v2061
    %v2063 = vrot.slane %v2062, 4
    %v2064 = vadd.f32 %v2062, %v2063
    %v2065 = vrot.slane %v2064, 2
    %v2066 = vadd.f32 %v2064, %v2065
    %v2067 = vrot.slane %v2066, 1
    %v2068 = vadd.f32 %v2066, %v2067
    %v2069 = vsel %vm270, %v1977, 0.0
    %v2070 = vsel %vm270, %v1978, 0.0
    %v2071 = vadd.f32 %v2069, %v2070
    %v2072 = vsel %vm270, %v1979, 0.0
    %v2073 = vadd.f32 %v2071, %v2072
    %v2074 = vsel %vm270, %v1980, 0.0
    %v2075 = vadd.f32 %v2073, %v2074
    %v2076 = vsel %vm270, %v1981, 0.0
    %v2077 = vadd.f32 %v2075, %v2076
    %v2078 = vsel %vm270, %v1982, 0.0
    %v2079 = vadd.f32 %v2077, %v2078
    %v2080 = vrot.slane %v2079, 4
    %v2081 = vadd.f32 %v2079, %v2080
    %v2082 = vrot.slane %v2081, 2
    %v2083 = vadd.f32 %v2081, %v2082
    %v2084 = vrot.slane %v2083, 1
    %v2085 = vadd.f32 %v2083, %v2084
    %v2086 = vsel %vm270, %v1983, 0.0
    %v2087 = vsel %vm270, %v1984, 0.0
    %v2088 = vadd.f32 %v2086, %v2087
    %v2089 = vsel %vm270, %v1985, 0.0
    %v2090 = vadd.f32 %v2088, %v2089
    %v2091 = vsel %vm270, %v1986, 0.0
    %v2092 = vadd.f32 %v2090, %v2091
    %v2093 = vsel %vm270, %v1987, 0.0
    %v2094 = vadd.f32 %v2092, %v2093
    %v2095 = vsel %vm270, %v1988, 0.0
    %v2096 = vadd.f32 %v2094, %v2095
    %v2097 = vrot.slane %v2096, 4
    %v2098 = vadd.f32 %v2096, %v2097
    %v2099 = vrot.slane %v2098, 2
    %v2100 = vadd.f32 %v2098, %v2099
    %v2101 = vrot.slane %v2100, 1
    %v2102 = vadd.f32 %v2100, %v2101
    %v2103 = vsel %vm270, %v1989, 0.0
    %v2104 = vsel %vm270, %v1990, 0.0
    %v2105 = vadd.f32 %v2103, %v2104
    %v2106 = vsel %vm270, %v1991, 0.0
    %v2107 = vadd.f32 %v2105, %v2106
    %v2108 = vsel %vm270, %v1992, 0.0
    %v2109 = vadd.f32 %v2107, %v2108
    %v2110 = vsel %vm270, %v1993, 0.0
    %v2111 = vadd.f32 %v2109, %v2110
    %v2112 = vsel %vm270, %v1994, 0.0
    %v2113 = vadd.f32 %v2111, %v2112
    %v2114 = vrot.slane %v2113, 4
    %v2115 = vadd.f32 %v2113, %v2114
    %v2116 = vrot.slane %v2115, 2
    %v2117 = vadd.f32 %v2115, %v2116
    %v2118 = vrot.slane %v2117, 1
    %v2119 = vadd.f32 %v2117, %v2118
    %v2120 = vsel %vm270, %v1995, 0.0
    %v2121 = vsel %vm270, %v1996, 0.0
    %v2122 = vadd.f32 %v2120, %v2121
    %v2123 = vsel %vm270, %v1997, 0.0
    %v2124 = vadd.f32 %v2122, %v2123
    %v2125 = vsel %vm270, %v1998, 0.0
    %v2126 = vadd.f32 %v2124, %v2125
    %v2127 = vsel %vm270, %v1999, 0.0
    %v2128 = vadd.f32 %v2126, %v2127
    %v2129 = vsel %vm270, %v2000, 0.0
    %v2130 = vadd.f32 %v2128, %v2129
    %v2131 = vrot.slane %v2130, 4
    %v2132 = vadd.f32 %v2130, %v2131
    %v2133 = vrot.slane %v2132, 2
    %v2134 = vadd.f32 %v2132, %v2133
    %v2135 = vrot.slane %v2134, 1
    %v2136 = vadd.f32 %v2134, %v2135
    %v2138 = vrot.slane %v396, 1
    %v2139 = vrot.slane %v396, 2
    %v2140 = vrot.slane %v396, 3
    %v2141 = vrot.slane %v396, 4
    %v2142 = vrot.slane %v396, 5
    %v2143 = vrot.slane %v396, 6
    %v2144 = vrot.slane %v396, 7
    %v2153 = vmul.f32 %v2017, %v396
    %v2154 = vmul.f32 %v2034, %v2138
    %v2155 = vmul.f32 %v2051, %v2139
    %v2156 = vmul.f32 %v2068, %v2140
    %v2157 = vmul.f32 %v2085, %v2141
    %v2158 = vmul.f32 %v2102, %v2142
    %v2159 = vmul.f32 %v2119, %v2143
    %v2160 = vmul.f32 %v2136, %v2144
    %v2169 = vrot.slane %v2154, 7
    %v2170 = vsel %vm977, %v2169, %v2153
    %v2171 = vrot.slane %v2155, 6
    %v2172 = vsel %vm980, %v2171, %v2170
    %v2173 = vrot.slane %v2156, 5
    %v2174 = vsel %vm983, %v2173, %v2172
    %v2175 = vrot.slane %v2157, 4
    %v2176 = vsel %vm986, %v2175, %v2174
    %v2177 = vrot.slane %v2158, 3
    %v2178 = vsel %vm989, %v2177, %v2176
    %v2179 = vrot.slane %v2159, 2
    %v2180 = vsel %vm992, %v2179, %v2178
    %v2181 = vrot.slane %v2160, 1
    %v2182 = vsel %vm995, %v2181, %v2180
    %v2184 = vsel %vm270, %v2182, 0.0
    %v2185 = vrot.slane %v2184, 4
    %v2186 = vadd.f32 %v2184, %v2185
    %v2187 = vrot.slane %v2186, 2
    %v2188 = vadd.f32 %v2186, %v2187
    %v2189 = vrot.slane %v2188, 1
    %v2190 = vadd.f32 %v2188, %v2189
    %v2191 = vadd.f32 %v1598, %v2190
    %v2193 = vcombine.high %v391, %v391
    %v2195 = vunpack.c.l.s4 1966171168
    %v2196 = vunpack.c.0.s8 %v2195
    %v2197 = vlaneseq
    %v2198 = vshrl.u32 %v2197, 7
    %v2199 = vsub.s32 %v2196, %v2198
    %v2200 = vrot.slane %v391, %v2199
    %v2202 = vunpack.c.l.s4 1966171168
    %v2203 = vunpack.c.0.s8 %v2202
    %v2204 = vlaneseq
    %v2205 = vshrl.u32 %v2204, 7
    %v2206 = vsub.s32 %v2203, %v2205
    %v2207 = vrot.slane %v2193, %v2206
    %v2208 = vcombine.high %v2200, %v2200
    %v2209 = vcombine.high %v2207, %v2207
    %v2211 = vunpack.c.l.s4 1966171168
    %v2212 = vunpack.c.0.s8 %v2211
    %v2213 = vlaneseq
    %v2214 = vshrl.u32 %v2213, 7
    %v2215 = vsub.s32 %v2212, %v2214
    %v2216 = vrot.slane %v2200, %v2215
    %v2218 = vunpack.c.l.s4 1966171168
    %v2219 = vunpack.c.0.s8 %v2218
    %v2220 = vlaneseq
    %v2221 = vshrl.u32 %v2220, 7
    %v2222 = vsub.s32 %v2219, %v2221
    %v2223 = vrot.slane %v2207, %v2222
    %v2225 = vunpack.c.l.s4 1966171168
    %v2226 = vunpack.c.0.s8 %v2225
    %v2227 = vlaneseq
    %v2228 = vshrl.u32 %v2227, 7
    %v2229 = vsub.s32 %v2226, %v2228
    %v2230 = vrot.slane %v2208, %v2229
    %v2232 = vunpack.c.l.s4 1966171168
    %v2233 = vunpack.c.0.s8 %v2232
    %v2234 = vlaneseq
    %v2235 = vshrl.u32 %v2234, 7
    %v2236 = vsub.s32 %v2233, %v2235
    %v2237 = vrot.slane %v2209, %v2236
    %v2238 = vcombine.high %v2216, %v2216
    %v2239 = vcombine.high %v2223, %v2223
    %v2240 = vcombine.high %v2230, %v2230
    %v2241 = vcombine.high %v2237, %v2237
    %v2242 = vlaneseq
    %v2243 = vshrl.u32 %v2242, 7
    %v2244 = vsub.s32 0, %v2243
    %v2245 = vrot.slane %v403, %v2244
    %2247 = vbcast.lane.b32.xlu0 %v2245, 256
    %v2248 = vpop.permute.xlu0 %2247
    %s2250 = sor.u32 256, 8
    %2251 = vbcast.lane.b32.xlu0 %v2245, %s2250
    %v2252 = vpop.permute.xlu0 %2251
    %s2254 = sor.u32 256, 16
    %2255 = vbcast.lane.b32.xlu0 %v2245, %s2254
    %v2256 = vpop.permute.xlu0 %2255
    %s2258 = sor.u32 256, 24
    %2259 = vbcast.lane.b32.xlu0 %v2245, %s2258
    %v2260 = vpop.permute.xlu0 %2259
    %s2262 = sor.u32 256, 32
    %2263 = vbcast.lane.b32.xlu0 %v2245, %s2262
    %v2264 = vpop.permute.xlu0 %2263
    %s2266 = sor.u32 256, 40
    %2267 = vbcast.lane.b32.xlu0 %v2245, %s2266
    %v2268 = vpop.permute.xlu0 %2267
    %v2269 = vlaneseq
    %v2270 = vshrl.u32 %v2269, 7
    %v2271 = vsub.s32 1, %v2270
    %v2272 = vrot.slane %v403, %v2271
    %2274 = vbcast.lane.b32.xlu0 %v2272, 256
    %v2275 = vpop.permute.xlu0 %2274
    %s2277 = sor.u32 256, 8
    %2278 = vbcast.lane.b32.xlu0 %v2272, %s2277
    %v2279 = vpop.permute.xlu0 %2278
    %s2281 = sor.u32 256, 16
    %2282 = vbcast.lane.b32.xlu0 %v2272, %s2281
    %v2283 = vpop.permute.xlu0 %2282
    %s2285 = sor.u32 256, 24
    %2286 = vbcast.lane.b32.xlu0 %v2272, %s2285
    %v2287 = vpop.permute.xlu0 %2286
    %s2289 = sor.u32 256, 32
    %2290 = vbcast.lane.b32.xlu0 %v2272, %s2289
    %v2291 = vpop.permute.xlu0 %2290
    %s2293 = sor.u32 256, 40
    %2294 = vbcast.lane.b32.xlu0 %v2272, %s2293
    %v2295 = vpop.permute.xlu0 %2294
    %v2296 = vlaneseq
    %v2297 = vshrl.u32 %v2296, 7
    %v2298 = vsub.s32 2, %v2297
    %v2299 = vrot.slane %v403, %v2298
    %2301 = vbcast.lane.b32.xlu0 %v2299, 256
    %v2302 = vpop.permute.xlu0 %2301
    %s2304 = sor.u32 256, 8
    %2305 = vbcast.lane.b32.xlu0 %v2299, %s2304
    %v2306 = vpop.permute.xlu0 %2305
    %s2308 = sor.u32 256, 16
    %2309 = vbcast.lane.b32.xlu0 %v2299, %s2308
    %v2310 = vpop.permute.xlu0 %2309
    %s2312 = sor.u32 256, 24
    %2313 = vbcast.lane.b32.xlu0 %v2299, %s2312
    %v2314 = vpop.permute.xlu0 %2313
    %s2316 = sor.u32 256, 32
    %2317 = vbcast.lane.b32.xlu0 %v2299, %s2316
    %v2318 = vpop.permute.xlu0 %2317
    %s2320 = sor.u32 256, 40
    %2321 = vbcast.lane.b32.xlu0 %v2299, %s2320
    %v2322 = vpop.permute.xlu0 %2321
    %v2323 = vlaneseq
    %v2324 = vshrl.u32 %v2323, 7
    %v2325 = vsub.s32 3, %v2324
    %v2326 = vrot.slane %v403, %v2325
    %2328 = vbcast.lane.b32.xlu0 %v2326, 256
    %v2329 = vpop.permute.xlu0 %2328
    %s2331 = sor.u32 256, 8
    %2332 = vbcast.lane.b32.xlu0 %v2326, %s2331
    %v2333 = vpop.permute.xlu0 %2332
    %s2335 = sor.u32 256, 16
    %2336 = vbcast.lane.b32.xlu0 %v2326, %s2335
    %v2337 = vpop.permute.xlu0 %2336
    %s2339 = sor.u32 256, 24
    %2340 = vbcast.lane.b32.xlu0 %v2326, %s2339
    %v2341 = vpop.permute.xlu0 %2340
    %s2343 = sor.u32 256, 32
    %2344 = vbcast.lane.b32.xlu0 %v2326, %s2343
    %v2345 = vpop.permute.xlu0 %2344
    %s2347 = sor.u32 256, 40
    %2348 = vbcast.lane.b32.xlu0 %v2326, %s2347
    %v2349 = vpop.permute.xlu0 %2348
    %v2350 = vlaneseq
    %v2351 = vshrl.u32 %v2350, 7
    %v2352 = vsub.s32 4, %v2351
    %v2353 = vrot.slane %v403, %v2352
    %2355 = vbcast.lane.b32.xlu0 %v2353, 256
    %v2356 = vpop.permute.xlu0 %2355
    %s2358 = sor.u32 256, 8
    %2359 = vbcast.lane.b32.xlu0 %v2353, %s2358
    %v2360 = vpop.permute.xlu0 %2359
    %s2362 = sor.u32 256, 16
    %2363 = vbcast.lane.b32.xlu0 %v2353, %s2362
    %v2364 = vpop.permute.xlu0 %2363
    %s2366 = sor.u32 256, 24
    %2367 = vbcast.lane.b32.xlu0 %v2353, %s2366
    %v2368 = vpop.permute.xlu0 %2367
    %s2370 = sor.u32 256, 32
    %2371 = vbcast.lane.b32.xlu0 %v2353, %s2370
    %v2372 = vpop.permute.xlu0 %2371
    %s2374 = sor.u32 256, 40
    %2375 = vbcast.lane.b32.xlu0 %v2353, %s2374
    %v2376 = vpop.permute.xlu0 %2375
    %v2377 = vlaneseq
    %v2378 = vshrl.u32 %v2377, 7
    %v2379 = vsub.s32 5, %v2378
    %v2380 = vrot.slane %v403, %v2379
    %2382 = vbcast.lane.b32.xlu0 %v2380, 256
    %v2383 = vpop.permute.xlu0 %2382
    %s2385 = sor.u32 256, 8
    %2386 = vbcast.lane.b32.xlu0 %v2380, %s2385
    %v2387 = vpop.permute.xlu0 %2386
    %s2389 = sor.u32 256, 16
    %2390 = vbcast.lane.b32.xlu0 %v2380, %s2389
    %v2391 = vpop.permute.xlu0 %2390
    %s2393 = sor.u32 256, 24
    %2394 = vbcast.lane.b32.xlu0 %v2380, %s2393
    %v2395 = vpop.permute.xlu0 %2394
    %s2397 = sor.u32 256, 32
    %2398 = vbcast.lane.b32.xlu0 %v2380, %s2397
    %v2399 = vpop.permute.xlu0 %2398
    %s2401 = sor.u32 256, 40
    %2402 = vbcast.lane.b32.xlu0 %v2380, %s2401
    %v2403 = vpop.permute.xlu0 %2402
    %v2404 = vlaneseq
    %v2405 = vshrl.u32 %v2404, 7
    %v2406 = vsub.s32 6, %v2405
    %v2407 = vrot.slane %v403, %v2406
    %2409 = vbcast.lane.b32.xlu0 %v2407, 256
    %v2410 = vpop.permute.xlu0 %2409
    %s2412 = sor.u32 256, 8
    %2413 = vbcast.lane.b32.xlu0 %v2407, %s2412
    %v2414 = vpop.permute.xlu0 %2413
    %s2416 = sor.u32 256, 16
    %2417 = vbcast.lane.b32.xlu0 %v2407, %s2416
    %v2418 = vpop.permute.xlu0 %2417
    %s2420 = sor.u32 256, 24
    %2421 = vbcast.lane.b32.xlu0 %v2407, %s2420
    %v2422 = vpop.permute.xlu0 %2421
    %s2424 = sor.u32 256, 32
    %2425 = vbcast.lane.b32.xlu0 %v2407, %s2424
    %v2426 = vpop.permute.xlu0 %2425
    %s2428 = sor.u32 256, 40
    %2429 = vbcast.lane.b32.xlu0 %v2407, %s2428
    %v2430 = vpop.permute.xlu0 %2429
    %v2431 = vlaneseq
    %v2432 = vshrl.u32 %v2431, 7
    %v2433 = vsub.s32 7, %v2432
    %v2434 = vrot.slane %v403, %v2433
    %2436 = vbcast.lane.b32.xlu0 %v2434, 256
    %v2437 = vpop.permute.xlu0 %2436
    %s2439 = sor.u32 256, 8
    %2440 = vbcast.lane.b32.xlu0 %v2434, %s2439
    %v2441 = vpop.permute.xlu0 %2440
    %s2443 = sor.u32 256, 16
    %2444 = vbcast.lane.b32.xlu0 %v2434, %s2443
    %v2445 = vpop.permute.xlu0 %2444
    %s2447 = sor.u32 256, 24
    %2448 = vbcast.lane.b32.xlu0 %v2434, %s2447
    %v2449 = vpop.permute.xlu0 %2448
    %s2451 = sor.u32 256, 32
    %2452 = vbcast.lane.b32.xlu0 %v2434, %s2451
    %v2453 = vpop.permute.xlu0 %2452
    %s2455 = sor.u32 256, 40
    %2456 = vbcast.lane.b32.xlu0 %v2434, %s2455
    %v2457 = vpop.permute.xlu0 %2456
    %v2458 = vlaneseq
    %v2459 = vshrl.u32 %v2458, 7
    %v2460 = vsub.s32 0, %v2459
    %v2461 = vrot.slane %v2216, %v2460
    %v2462 = vlaneseq
    %v2463 = vshrl.u32 %v2462, 7
    %v2464 = vsub.s32 0, %v2463
    %v2465 = vrot.slane %v2230, %v2464
    %v2466 = vlaneseq
    %v2467 = vshrl.u32 %v2466, 7
    %v2468 = vsub.s32 0, %v2467
    %v2469 = vrot.slane %v2238, %v2468
    %v2470 = vlaneseq
    %v2471 = vshrl.u32 %v2470, 7
    %v2472 = vsub.s32 0, %v2471
    %v2473 = vrot.slane %v2240, %v2472
    %v2474 = vlaneseq
    %v2475 = vshrl.u32 %v2474, 7
    %v2476 = vsub.s32 0, %v2475
    %v2477 = vrot.slane %v2223, %v2476
    %v2478 = vlaneseq
    %v2479 = vshrl.u32 %v2478, 7
    %v2480 = vsub.s32 0, %v2479
    %v2481 = vrot.slane %v2237, %v2480
    %v2482 = vlaneseq
    %v2483 = vshrl.u32 %v2482, 7
    %v2484 = vsub.s32 0, %v2483
    %v2485 = vrot.slane %v2239, %v2484
    %v2486 = vlaneseq
    %v2487 = vshrl.u32 %v2486, 7
    %v2488 = vsub.s32 0, %v2487
    %v2489 = vrot.slane %v2241, %v2488
    %v2498 = vsub.f32 %v2461, %v2248
    %v2499 = vsub.f32 %v2461, %v2252
    %v2500 = vsub.f32 %v2461, %v2256
    %v2501 = vsub.f32 %v2461, %v2260
    %v2502 = vsub.f32 %v2461, %v2264
    %v2503 = vsub.f32 %v2461, %v2268
    %v2504 = vsub.f32 %v2465, %v2275
    %v2505 = vsub.f32 %v2465, %v2279
    %v2506 = vsub.f32 %v2465, %v2283
    %v2507 = vsub.f32 %v2465, %v2287
    %v2508 = vsub.f32 %v2465, %v2291
    %v2509 = vsub.f32 %v2465, %v2295
    %v2510 = vsub.f32 %v2469, %v2302
    %v2511 = vsub.f32 %v2469, %v2306
    %v2512 = vsub.f32 %v2469, %v2310
    %v2513 = vsub.f32 %v2469, %v2314
    %v2514 = vsub.f32 %v2469, %v2318
    %v2515 = vsub.f32 %v2469, %v2322
    %v2516 = vsub.f32 %v2473, %v2329
    %v2517 = vsub.f32 %v2473, %v2333
    %v2518 = vsub.f32 %v2473, %v2337
    %v2519 = vsub.f32 %v2473, %v2341
    %v2520 = vsub.f32 %v2473, %v2345
    %v2521 = vsub.f32 %v2473, %v2349
    %v2522 = vsub.f32 %v2477, %v2356
    %v2523 = vsub.f32 %v2477, %v2360
    %v2524 = vsub.f32 %v2477, %v2364
    %v2525 = vsub.f32 %v2477, %v2368
    %v2526 = vsub.f32 %v2477, %v2372
    %v2527 = vsub.f32 %v2477, %v2376
    %v2528 = vsub.f32 %v2481, %v2383
    %v2529 = vsub.f32 %v2481, %v2387
    %v2530 = vsub.f32 %v2481, %v2391
    %v2531 = vsub.f32 %v2481, %v2395
    %v2532 = vsub.f32 %v2481, %v2399
    %v2533 = vsub.f32 %v2481, %v2403
    %v2534 = vsub.f32 %v2485, %v2410
    %v2535 = vsub.f32 %v2485, %v2414
    %v2536 = vsub.f32 %v2485, %v2418
    %v2537 = vsub.f32 %v2485, %v2422
    %v2538 = vsub.f32 %v2485, %v2426
    %v2539 = vsub.f32 %v2485, %v2430
    %v2540 = vsub.f32 %v2489, %v2437
    %v2541 = vsub.f32 %v2489, %v2441
    %v2542 = vsub.f32 %v2489, %v2445
    %v2543 = vsub.f32 %v2489, %v2449
    %v2544 = vsub.f32 %v2489, %v2453
    %v2545 = vsub.f32 %v2489, %v2457
    %v2546 = vmax.f32 %v2498, 0.0
    %v2547 = vmax.f32 %v2499, 0.0
    %v2548 = vmax.f32 %v2500, 0.0
    %v2549 = vmax.f32 %v2501, 0.0
    %v2550 = vmax.f32 %v2502, 0.0
    %v2551 = vmax.f32 %v2503, 0.0
    %v2552 = vmax.f32 %v2504, 0.0
    %v2553 = vmax.f32 %v2505, 0.0
    %v2554 = vmax.f32 %v2506, 0.0
    %v2555 = vmax.f32 %v2507, 0.0
    %v2556 = vmax.f32 %v2508, 0.0
    %v2557 = vmax.f32 %v2509, 0.0
    %v2558 = vmax.f32 %v2510, 0.0
    %v2559 = vmax.f32 %v2511, 0.0
    %v2560 = vmax.f32 %v2512, 0.0
    %v2561 = vmax.f32 %v2513, 0.0
    %v2562 = vmax.f32 %v2514, 0.0
    %v2563 = vmax.f32 %v2515, 0.0
    %v2564 = vmax.f32 %v2516, 0.0
    %v2565 = vmax.f32 %v2517, 0.0
    %v2566 = vmax.f32 %v2518, 0.0
    %v2567 = vmax.f32 %v2519, 0.0
    %v2568 = vmax.f32 %v2520, 0.0
    %v2569 = vmax.f32 %v2521, 0.0
    %v2570 = vmax.f32 %v2522, 0.0
    %v2571 = vmax.f32 %v2523, 0.0
    %v2572 = vmax.f32 %v2524, 0.0
    %v2573 = vmax.f32 %v2525, 0.0
    %v2574 = vmax.f32 %v2526, 0.0
    %v2575 = vmax.f32 %v2527, 0.0
    %v2576 = vmax.f32 %v2528, 0.0
    %v2577 = vmax.f32 %v2529, 0.0
    %v2578 = vmax.f32 %v2530, 0.0
    %v2579 = vmax.f32 %v2531, 0.0
    %v2580 = vmax.f32 %v2532, 0.0
    %v2581 = vmax.f32 %v2533, 0.0
    %v2582 = vmax.f32 %v2534, 0.0
    %v2583 = vmax.f32 %v2535, 0.0
    %v2584 = vmax.f32 %v2536, 0.0
    %v2585 = vmax.f32 %v2537, 0.0
    %v2586 = vmax.f32 %v2538, 0.0
    %v2587 = vmax.f32 %v2539, 0.0
    %v2588 = vmax.f32 %v2540, 0.0
    %v2589 = vmax.f32 %v2541, 0.0
    %v2590 = vmax.f32 %v2542, 0.0
    %v2591 = vmax.f32 %v2543, 0.0
    %v2592 = vmax.f32 %v2544, 0.0
    %v2593 = vmax.f32 %v2545, 0.0
    %v2594 = vsel %vm270, %v2546, 0.0
    %v2595 = vsel %vm270, %v2547, 0.0
    %v2596 = vadd.f32 %v2594, %v2595
    %v2597 = vsel %vm270, %v2548, 0.0
    %v2598 = vadd.f32 %v2596, %v2597
    %v2599 = vsel %vm270, %v2549, 0.0
    %v2600 = vadd.f32 %v2598, %v2599
    %v2601 = vsel %vm270, %v2550, 0.0
    %v2602 = vadd.f32 %v2600, %v2601
    %v2603 = vsel %vm270, %v2551, 0.0
    %v2604 = vadd.f32 %v2602, %v2603
    %v2605 = vrot.slane %v2604, 4
    %v2606 = vadd.f32 %v2604, %v2605
    %v2607 = vrot.slane %v2606, 2
    %v2608 = vadd.f32 %v2606, %v2607
    %v2609 = vrot.slane %v2608, 1
    %v2610 = vadd.f32 %v2608, %v2609
    %v2611 = vsel %vm270, %v2552, 0.0
    %v2612 = vsel %vm270, %v2553, 0.0
    %v2613 = vadd.f32 %v2611, %v2612
    %v2614 = vsel %vm270, %v2554, 0.0
    %v2615 = vadd.f32 %v2613, %v2614
    %v2616 = vsel %vm270, %v2555, 0.0
    %v2617 = vadd.f32 %v2615, %v2616
    %v2618 = vsel %vm270, %v2556, 0.0
    %v2619 = vadd.f32 %v2617, %v2618
    %v2620 = vsel %vm270, %v2557, 0.0
    %v2621 = vadd.f32 %v2619, %v2620
    %v2622 = vrot.slane %v2621, 4
    %v2623 = vadd.f32 %v2621, %v2622
    %v2624 = vrot.slane %v2623, 2
    %v2625 = vadd.f32 %v2623, %v2624
    %v2626 = vrot.slane %v2625, 1
    %v2627 = vadd.f32 %v2625, %v2626
    %v2628 = vsel %vm270, %v2558, 0.0
    %v2629 = vsel %vm270, %v2559, 0.0
    %v2630 = vadd.f32 %v2628, %v2629
    %v2631 = vsel %vm270, %v2560, 0.0
    %v2632 = vadd.f32 %v2630, %v2631
    %v2633 = vsel %vm270, %v2561, 0.0
    %v2634 = vadd.f32 %v2632, %v2633
    %v2635 = vsel %vm270, %v2562, 0.0
    %v2636 = vadd.f32 %v2634, %v2635
    %v2637 = vsel %vm270, %v2563, 0.0
    %v2638 = vadd.f32 %v2636, %v2637
    %v2639 = vrot.slane %v2638, 4
    %v2640 = vadd.f32 %v2638, %v2639
    %v2641 = vrot.slane %v2640, 2
    %v2642 = vadd.f32 %v2640, %v2641
    %v2643 = vrot.slane %v2642, 1
    %v2644 = vadd.f32 %v2642, %v2643
    %v2645 = vsel %vm270, %v2564, 0.0
    %v2646 = vsel %vm270, %v2565, 0.0
    %v2647 = vadd.f32 %v2645, %v2646
    %v2648 = vsel %vm270, %v2566, 0.0
    %v2649 = vadd.f32 %v2647, %v2648
    %v2650 = vsel %vm270, %v2567, 0.0
    %v2651 = vadd.f32 %v2649, %v2650
    %v2652 = vsel %vm270, %v2568, 0.0
    %v2653 = vadd.f32 %v2651, %v2652
    %v2654 = vsel %vm270, %v2569, 0.0
    %v2655 = vadd.f32 %v2653, %v2654
    %v2656 = vrot.slane %v2655, 4
    %v2657 = vadd.f32 %v2655, %v2656
    %v2658 = vrot.slane %v2657, 2
    %v2659 = vadd.f32 %v2657, %v2658
    %v2660 = vrot.slane %v2659, 1
    %v2661 = vadd.f32 %v2659, %v2660
    %v2662 = vsel %vm270, %v2570, 0.0
    %v2663 = vsel %vm270, %v2571, 0.0
    %v2664 = vadd.f32 %v2662, %v2663
    %v2665 = vsel %vm270, %v2572, 0.0
    %v2666 = vadd.f32 %v2664, %v2665
    %v2667 = vsel %vm270, %v2573, 0.0
    %v2668 = vadd.f32 %v2666, %v2667
    %v2669 = vsel %vm270, %v2574, 0.0
    %v2670 = vadd.f32 %v2668, %v2669
    %v2671 = vsel %vm270, %v2575, 0.0
    %v2672 = vadd.f32 %v2670, %v2671
    %v2673 = vrot.slane %v2672, 4
    %v2674 = vadd.f32 %v2672, %v2673
    %v2675 = vrot.slane %v2674, 2
    %v2676 = vadd.f32 %v2674, %v2675
    %v2677 = vrot.slane %v2676, 1
    %v2678 = vadd.f32 %v2676, %v2677
    %v2679 = vsel %vm270, %v2576, 0.0
    %v2680 = vsel %vm270, %v2577, 0.0
    %v2681 = vadd.f32 %v2679, %v2680
    %v2682 = vsel %vm270, %v2578, 0.0
    %v2683 = vadd.f32 %v2681, %v2682
    %v2684 = vsel %vm270, %v2579, 0.0
    %v2685 = vadd.f32 %v2683, %v2684
    %v2686 = vsel %vm270, %v2580, 0.0
    %v2687 = vadd.f32 %v2685, %v2686
    %v2688 = vsel %vm270, %v2581, 0.0
    %v2689 = vadd.f32 %v2687, %v2688
    %v2690 = vrot.slane %v2689, 4
    %v2691 = vadd.f32 %v2689, %v2690
    %v2692 = vrot.slane %v2691, 2
    %v2693 = vadd.f32 %v2691, %v2692
    %v2694 = vrot.slane %v2693, 1
    %v2695 = vadd.f32 %v2693, %v2694
    %v2696 = vsel %vm270, %v2582, 0.0
    %v2697 = vsel %vm270, %v2583, 0.0
    %v2698 = vadd.f32 %v2696, %v2697
    %v2699 = vsel %vm270, %v2584, 0.0
    %v2700 = vadd.f32 %v2698, %v2699
    %v2701 = vsel %vm270, %v2585, 0.0
    %v2702 = vadd.f32 %v2700, %v2701
    %v2703 = vsel %vm270, %v2586, 0.0
    %v2704 = vadd.f32 %v2702, %v2703
    %v2705 = vsel %vm270, %v2587, 0.0
    %v2706 = vadd.f32 %v2704, %v2705
    %v2707 = vrot.slane %v2706, 4
    %v2708 = vadd.f32 %v2706, %v2707
    %v2709 = vrot.slane %v2708, 2
    %v2710 = vadd.f32 %v2708, %v2709
    %v2711 = vrot.slane %v2710, 1
    %v2712 = vadd.f32 %v2710, %v2711
    %v2713 = vsel %vm270, %v2588, 0.0
    %v2714 = vsel %vm270, %v2589, 0.0
    %v2715 = vadd.f32 %v2713, %v2714
    %v2716 = vsel %vm270, %v2590, 0.0
    %v2717 = vadd.f32 %v2715, %v2716
    %v2718 = vsel %vm270, %v2591, 0.0
    %v2719 = vadd.f32 %v2717, %v2718
    %v2720 = vsel %vm270, %v2592, 0.0
    %v2721 = vadd.f32 %v2719, %v2720
    %v2722 = vsel %vm270, %v2593, 0.0
    %v2723 = vadd.f32 %v2721, %v2722
    %v2724 = vrot.slane %v2723, 4
    %v2725 = vadd.f32 %v2723, %v2724
    %v2726 = vrot.slane %v2725, 2
    %v2727 = vadd.f32 %v2725, %v2726
    %v2728 = vrot.slane %v2727, 1
    %v2729 = vadd.f32 %v2727, %v2728
    %v2731 = vrot.slane %v397, 1
    %v2732 = vrot.slane %v397, 2
    %v2733 = vrot.slane %v397, 3
    %v2734 = vrot.slane %v397, 4
    %v2735 = vrot.slane %v397, 5
    %v2736 = vrot.slane %v397, 6
    %v2737 = vrot.slane %v397, 7
    %v2746 = vmul.f32 %v2610, %v397
    %v2747 = vmul.f32 %v2627, %v2731
    %v2748 = vmul.f32 %v2644, %v2732
    %v2749 = vmul.f32 %v2661, %v2733
    %v2750 = vmul.f32 %v2678, %v2734
    %v2751 = vmul.f32 %v2695, %v2735
    %v2752 = vmul.f32 %v2712, %v2736
    %v2753 = vmul.f32 %v2729, %v2737
    %v2762 = vrot.slane %v2747, 7
    %v2763 = vsel %vm977, %v2762, %v2746
    %v2764 = vrot.slane %v2748, 6
    %v2765 = vsel %vm980, %v2764, %v2763
    %v2766 = vrot.slane %v2749, 5
    %v2767 = vsel %vm983, %v2766, %v2765
    %v2768 = vrot.slane %v2750, 4
    %v2769 = vsel %vm986, %v2768, %v2767
    %v2770 = vrot.slane %v2751, 3
    %v2771 = vsel %vm989, %v2770, %v2769
    %v2772 = vrot.slane %v2752, 2
    %v2773 = vsel %vm992, %v2772, %v2771
    %v2774 = vrot.slane %v2753, 1
    %v2775 = vsel %vm995, %v2774, %v2773
    %v2777 = vsel %vm270, %v2775, 0.0
    %v2778 = vrot.slane %v2777, 4
    %v2779 = vadd.f32 %v2777, %v2778
    %v2780 = vrot.slane %v2779, 2
    %v2781 = vadd.f32 %v2779, %v2780
    %v2782 = vrot.slane %v2781, 1
    %v2783 = vadd.f32 %v2781, %v2782
    %v2784 = vadd.f32 %v2191, %v2783
    %v2786 = vcombine.high %v392, %v392
    %v2788 = vunpack.c.l.s4 1966171168
    %v2789 = vunpack.c.0.s8 %v2788
    %v2790 = vlaneseq
    %v2791 = vshrl.u32 %v2790, 7
    %v2792 = vsub.s32 %v2789, %v2791
    %v2793 = vrot.slane %v392, %v2792
    %v2795 = vunpack.c.l.s4 1966171168
    %v2796 = vunpack.c.0.s8 %v2795
    %v2797 = vlaneseq
    %v2798 = vshrl.u32 %v2797, 7
    %v2799 = vsub.s32 %v2796, %v2798
    %v2800 = vrot.slane %v2786, %v2799
    %v2801 = vcombine.high %v2793, %v2793
    %v2802 = vcombine.high %v2800, %v2800
    %v2804 = vunpack.c.l.s4 1966171168
    %v2805 = vunpack.c.0.s8 %v2804
    %v2806 = vlaneseq
    %v2807 = vshrl.u32 %v2806, 7
    %v2808 = vsub.s32 %v2805, %v2807
    %v2809 = vrot.slane %v2793, %v2808
    %v2811 = vunpack.c.l.s4 1966171168
    %v2812 = vunpack.c.0.s8 %v2811
    %v2813 = vlaneseq
    %v2814 = vshrl.u32 %v2813, 7
    %v2815 = vsub.s32 %v2812, %v2814
    %v2816 = vrot.slane %v2800, %v2815
    %v2818 = vunpack.c.l.s4 1966171168
    %v2819 = vunpack.c.0.s8 %v2818
    %v2820 = vlaneseq
    %v2821 = vshrl.u32 %v2820, 7
    %v2822 = vsub.s32 %v2819, %v2821
    %v2823 = vrot.slane %v2801, %v2822
    %v2825 = vunpack.c.l.s4 1966171168
    %v2826 = vunpack.c.0.s8 %v2825
    %v2827 = vlaneseq
    %v2828 = vshrl.u32 %v2827, 7
    %v2829 = vsub.s32 %v2826, %v2828
    %v2830 = vrot.slane %v2802, %v2829
    %v2831 = vcombine.high %v2809, %v2809
    %v2832 = vcombine.high %v2816, %v2816
    %v2833 = vcombine.high %v2823, %v2823
    %v2834 = vcombine.high %v2830, %v2830
    %v2835 = vlaneseq
    %v2836 = vshrl.u32 %v2835, 7
    %v2837 = vsub.s32 0, %v2836
    %v2838 = vrot.slane %v404, %v2837
    %2840 = vbcast.lane.b32.xlu0 %v2838, 256
    %v2841 = vpop.permute.xlu0 %2840
    %s2843 = sor.u32 256, 8
    %2844 = vbcast.lane.b32.xlu0 %v2838, %s2843
    %v2845 = vpop.permute.xlu0 %2844
    %s2847 = sor.u32 256, 16
    %2848 = vbcast.lane.b32.xlu0 %v2838, %s2847
    %v2849 = vpop.permute.xlu0 %2848
    %s2851 = sor.u32 256, 24
    %2852 = vbcast.lane.b32.xlu0 %v2838, %s2851
    %v2853 = vpop.permute.xlu0 %2852
    %s2855 = sor.u32 256, 32
    %2856 = vbcast.lane.b32.xlu0 %v2838, %s2855
    %v2857 = vpop.permute.xlu0 %2856
    %s2859 = sor.u32 256, 40
    %2860 = vbcast.lane.b32.xlu0 %v2838, %s2859
    %v2861 = vpop.permute.xlu0 %2860
    %v2862 = vlaneseq
    %v2863 = vshrl.u32 %v2862, 7
    %v2864 = vsub.s32 1, %v2863
    %v2865 = vrot.slane %v404, %v2864
    %2867 = vbcast.lane.b32.xlu0 %v2865, 256
    %v2868 = vpop.permute.xlu0 %2867
    %s2870 = sor.u32 256, 8
    %2871 = vbcast.lane.b32.xlu0 %v2865, %s2870
    %v2872 = vpop.permute.xlu0 %2871
    %s2874 = sor.u32 256, 16
    %2875 = vbcast.lane.b32.xlu0 %v2865, %s2874
    %v2876 = vpop.permute.xlu0 %2875
    %s2878 = sor.u32 256, 24
    %2879 = vbcast.lane.b32.xlu0 %v2865, %s2878
    %v2880 = vpop.permute.xlu0 %2879
    %s2882 = sor.u32 256, 32
    %2883 = vbcast.lane.b32.xlu0 %v2865, %s2882
    %v2884 = vpop.permute.xlu0 %2883
    %s2886 = sor.u32 256, 40
    %2887 = vbcast.lane.b32.xlu0 %v2865, %s2886
    %v2888 = vpop.permute.xlu0 %2887
    %v2889 = vlaneseq
    %v2890 = vshrl.u32 %v2889, 7
    %v2891 = vsub.s32 2, %v2890
    %v2892 = vrot.slane %v404, %v2891
    %2894 = vbcast.lane.b32.xlu0 %v2892, 256
    %v2895 = vpop.permute.xlu0 %2894
    %s2897 = sor.u32 256, 8
    %2898 = vbcast.lane.b32.xlu0 %v2892, %s2897
    %v2899 = vpop.permute.xlu0 %2898
    %s2901 = sor.u32 256, 16
    %2902 = vbcast.lane.b32.xlu0 %v2892, %s2901
    %v2903 = vpop.permute.xlu0 %2902
    %s2905 = sor.u32 256, 24
    %2906 = vbcast.lane.b32.xlu0 %v2892, %s2905
    %v2907 = vpop.permute.xlu0 %2906
    %s2909 = sor.u32 256, 32
    %2910 = vbcast.lane.b32.xlu0 %v2892, %s2909
    %v2911 = vpop.permute.xlu0 %2910
    %s2913 = sor.u32 256, 40
    %2914 = vbcast.lane.b32.xlu0 %v2892, %s2913
    %v2915 = vpop.permute.xlu0 %2914
    %v2916 = vlaneseq
    %v2917 = vshrl.u32 %v2916, 7
    %v2918 = vsub.s32 3, %v2917
    %v2919 = vrot.slane %v404, %v2918
    %2921 = vbcast.lane.b32.xlu0 %v2919, 256
    %v2922 = vpop.permute.xlu0 %2921
    %s2924 = sor.u32 256, 8
    %2925 = vbcast.lane.b32.xlu0 %v2919, %s2924
    %v2926 = vpop.permute.xlu0 %2925
    %s2928 = sor.u32 256, 16
    %2929 = vbcast.lane.b32.xlu0 %v2919, %s2928
    %v2930 = vpop.permute.xlu0 %2929
    %s2932 = sor.u32 256, 24
    %2933 = vbcast.lane.b32.xlu0 %v2919, %s2932
    %v2934 = vpop.permute.xlu0 %2933
    %s2936 = sor.u32 256, 32
    %2937 = vbcast.lane.b32.xlu0 %v2919, %s2936
    %v2938 = vpop.permute.xlu0 %2937
    %s2940 = sor.u32 256, 40
    %2941 = vbcast.lane.b32.xlu0 %v2919, %s2940
    %v2942 = vpop.permute.xlu0 %2941
    %v2943 = vlaneseq
    %v2944 = vshrl.u32 %v2943, 7
    %v2945 = vsub.s32 4, %v2944
    %v2946 = vrot.slane %v404, %v2945
    %2948 = vbcast.lane.b32.xlu0 %v2946, 256
    %v2949 = vpop.permute.xlu0 %2948
    %s2951 = sor.u32 256, 8
    %2952 = vbcast.lane.b32.xlu0 %v2946, %s2951
    %v2953 = vpop.permute.xlu0 %2952
    %s2955 = sor.u32 256, 16
    %2956 = vbcast.lane.b32.xlu0 %v2946, %s2955
    %v2957 = vpop.permute.xlu0 %2956
    %s2959 = sor.u32 256, 24
    %2960 = vbcast.lane.b32.xlu0 %v2946, %s2959
    %v2961 = vpop.permute.xlu0 %2960
    %s2963 = sor.u32 256, 32
    %2964 = vbcast.lane.b32.xlu0 %v2946, %s2963
    %v2965 = vpop.permute.xlu0 %2964
    %s2967 = sor.u32 256, 40
    %2968 = vbcast.lane.b32.xlu0 %v2946, %s2967
    %v2969 = vpop.permute.xlu0 %2968
    %v2970 = vlaneseq
    %v2971 = vshrl.u32 %v2970, 7
    %v2972 = vsub.s32 5, %v2971
    %v2973 = vrot.slane %v404, %v2972
    %2975 = vbcast.lane.b32.xlu0 %v2973, 256
    %v2976 = vpop.permute.xlu0 %2975
    %s2978 = sor.u32 256, 8
    %2979 = vbcast.lane.b32.xlu0 %v2973, %s2978
    %v2980 = vpop.permute.xlu0 %2979
    %s2982 = sor.u32 256, 16
    %2983 = vbcast.lane.b32.xlu0 %v2973, %s2982
    %v2984 = vpop.permute.xlu0 %2983
    %s2986 = sor.u32 256, 24
    %2987 = vbcast.lane.b32.xlu0 %v2973, %s2986
    %v2988 = vpop.permute.xlu0 %2987
    %s2990 = sor.u32 256, 32
    %2991 = vbcast.lane.b32.xlu0 %v2973, %s2990
    %v2992 = vpop.permute.xlu0 %2991
    %s2994 = sor.u32 256, 40
    %2995 = vbcast.lane.b32.xlu0 %v2973, %s2994
    %v2996 = vpop.permute.xlu0 %2995
    %v2997 = vlaneseq
    %v2998 = vshrl.u32 %v2997, 7
    %v2999 = vsub.s32 6, %v2998
    %v3000 = vrot.slane %v404, %v2999
    %3002 = vbcast.lane.b32.xlu0 %v3000, 256
    %v3003 = vpop.permute.xlu0 %3002
    %s3005 = sor.u32 256, 8
    %3006 = vbcast.lane.b32.xlu0 %v3000, %s3005
    %v3007 = vpop.permute.xlu0 %3006
    %s3009 = sor.u32 256, 16
    %3010 = vbcast.lane.b32.xlu0 %v3000, %s3009
    %v3011 = vpop.permute.xlu0 %3010
    %s3013 = sor.u32 256, 24
    %3014 = vbcast.lane.b32.xlu0 %v3000, %s3013
    %v3015 = vpop.permute.xlu0 %3014
    %s3017 = sor.u32 256, 32
    %3018 = vbcast.lane.b32.xlu0 %v3000, %s3017
    %v3019 = vpop.permute.xlu0 %3018
    %s3021 = sor.u32 256, 40
    %3022 = vbcast.lane.b32.xlu0 %v3000, %s3021
    %v3023 = vpop.permute.xlu0 %3022
    %v3024 = vlaneseq
    %v3025 = vshrl.u32 %v3024, 7
    %v3026 = vsub.s32 7, %v3025
    %v3027 = vrot.slane %v404, %v3026
    %3029 = vbcast.lane.b32.xlu0 %v3027, 256
    %v3030 = vpop.permute.xlu0 %3029
    %s3032 = sor.u32 256, 8
    %3033 = vbcast.lane.b32.xlu0 %v3027, %s3032
    %v3034 = vpop.permute.xlu0 %3033
    %s3036 = sor.u32 256, 16
    %3037 = vbcast.lane.b32.xlu0 %v3027, %s3036
    %v3038 = vpop.permute.xlu0 %3037
    %s3040 = sor.u32 256, 24
    %3041 = vbcast.lane.b32.xlu0 %v3027, %s3040
    %v3042 = vpop.permute.xlu0 %3041
    %s3044 = sor.u32 256, 32
    %3045 = vbcast.lane.b32.xlu0 %v3027, %s3044
    %v3046 = vpop.permute.xlu0 %3045
    %s3048 = sor.u32 256, 40
    %3049 = vbcast.lane.b32.xlu0 %v3027, %s3048
    %v3050 = vpop.permute.xlu0 %3049
    %v3051 = vlaneseq
    %v3052 = vshrl.u32 %v3051, 7
    %v3053 = vsub.s32 0, %v3052
    %v3054 = vrot.slane %v2809, %v3053
    %v3055 = vlaneseq
    %v3056 = vshrl.u32 %v3055, 7
    %v3057 = vsub.s32 0, %v3056
    %v3058 = vrot.slane %v2823, %v3057
    %v3059 = vlaneseq
    %v3060 = vshrl.u32 %v3059, 7
    %v3061 = vsub.s32 0, %v3060
    %v3062 = vrot.slane %v2831, %v3061
    %v3063 = vlaneseq
    %v3064 = vshrl.u32 %v3063, 7
    %v3065 = vsub.s32 0, %v3064
    %v3066 = vrot.slane %v2833, %v3065
    %v3067 = vlaneseq
    %v3068 = vshrl.u32 %v3067, 7
    %v3069 = vsub.s32 0, %v3068
    %v3070 = vrot.slane %v2816, %v3069
    %v3071 = vlaneseq
    %v3072 = vshrl.u32 %v3071, 7
    %v3073 = vsub.s32 0, %v3072
    %v3074 = vrot.slane %v2830, %v3073
    %v3075 = vlaneseq
    %v3076 = vshrl.u32 %v3075, 7
    %v3077 = vsub.s32 0, %v3076
    %v3078 = vrot.slane %v2832, %v3077
    %v3079 = vlaneseq
    %v3080 = vshrl.u32 %v3079, 7
    %v3081 = vsub.s32 0, %v3080
    %v3082 = vrot.slane %v2834, %v3081
    %v3091 = vsub.f32 %v3054, %v2841
    %v3092 = vsub.f32 %v3054, %v2845
    %v3093 = vsub.f32 %v3054, %v2849
    %v3094 = vsub.f32 %v3054, %v2853
    %v3095 = vsub.f32 %v3054, %v2857
    %v3096 = vsub.f32 %v3054, %v2861
    %v3097 = vsub.f32 %v3058, %v2868
    %v3098 = vsub.f32 %v3058, %v2872
    %v3099 = vsub.f32 %v3058, %v2876
    %v3100 = vsub.f32 %v3058, %v2880
    %v3101 = vsub.f32 %v3058, %v2884
    %v3102 = vsub.f32 %v3058, %v2888
    %v3103 = vsub.f32 %v3062, %v2895
    %v3104 = vsub.f32 %v3062, %v2899
    %v3105 = vsub.f32 %v3062, %v2903
    %v3106 = vsub.f32 %v3062, %v2907
    %v3107 = vsub.f32 %v3062, %v2911
    %v3108 = vsub.f32 %v3062, %v2915
    %v3109 = vsub.f32 %v3066, %v2922
    %v3110 = vsub.f32 %v3066, %v2926
    %v3111 = vsub.f32 %v3066, %v2930
    %v3112 = vsub.f32 %v3066, %v2934
    %v3113 = vsub.f32 %v3066, %v2938
    %v3114 = vsub.f32 %v3066, %v2942
    %v3115 = vsub.f32 %v3070, %v2949
    %v3116 = vsub.f32 %v3070, %v2953
    %v3117 = vsub.f32 %v3070, %v2957
    %v3118 = vsub.f32 %v3070, %v2961
    %v3119 = vsub.f32 %v3070, %v2965
    %v3120 = vsub.f32 %v3070, %v2969
    %v3121 = vsub.f32 %v3074, %v2976
    %v3122 = vsub.f32 %v3074, %v2980
    %v3123 = vsub.f32 %v3074, %v2984
    %v3124 = vsub.f32 %v3074, %v2988
    %v3125 = vsub.f32 %v3074, %v2992
    %v3126 = vsub.f32 %v3074, %v2996
    %v3127 = vsub.f32 %v3078, %v3003
    %v3128 = vsub.f32 %v3078, %v3007
    %v3129 = vsub.f32 %v3078, %v3011
    %v3130 = vsub.f32 %v3078, %v3015
    %v3131 = vsub.f32 %v3078, %v3019
    %v3132 = vsub.f32 %v3078, %v3023
    %v3133 = vsub.f32 %v3082, %v3030
    %v3134 = vsub.f32 %v3082, %v3034
    %v3135 = vsub.f32 %v3082, %v3038
    %v3136 = vsub.f32 %v3082, %v3042
    %v3137 = vsub.f32 %v3082, %v3046
    %v3138 = vsub.f32 %v3082, %v3050
    %v3139 = vmax.f32 %v3091, 0.0
    %v3140 = vmax.f32 %v3092, 0.0
    %v3141 = vmax.f32 %v3093, 0.0
    %v3142 = vmax.f32 %v3094, 0.0
    %v3143 = vmax.f32 %v3095, 0.0
    %v3144 = vmax.f32 %v3096, 0.0
    %v3145 = vmax.f32 %v3097, 0.0
    %v3146 = vmax.f32 %v3098, 0.0
    %v3147 = vmax.f32 %v3099, 0.0
    %v3148 = vmax.f32 %v3100, 0.0
    %v3149 = vmax.f32 %v3101, 0.0
    %v3150 = vmax.f32 %v3102, 0.0
    %v3151 = vmax.f32 %v3103, 0.0
    %v3152 = vmax.f32 %v3104, 0.0
    %v3153 = vmax.f32 %v3105, 0.0
    %v3154 = vmax.f32 %v3106, 0.0
    %v3155 = vmax.f32 %v3107, 0.0
    %v3156 = vmax.f32 %v3108, 0.0
    %v3157 = vmax.f32 %v3109, 0.0
    %v3158 = vmax.f32 %v3110, 0.0
    %v3159 = vmax.f32 %v3111, 0.0
    %v3160 = vmax.f32 %v3112, 0.0
    %v3161 = vmax.f32 %v3113, 0.0
    %v3162 = vmax.f32 %v3114, 0.0
    %v3163 = vmax.f32 %v3115, 0.0
    %v3164 = vmax.f32 %v3116, 0.0
    %v3165 = vmax.f32 %v3117, 0.0
    %v3166 = vmax.f32 %v3118, 0.0
    %v3167 = vmax.f32 %v3119, 0.0
    %v3168 = vmax.f32 %v3120, 0.0
    %v3169 = vmax.f32 %v3121, 0.0
    %v3170 = vmax.f32 %v3122, 0.0
    %v3171 = vmax.f32 %v3123, 0.0
    %v3172 = vmax.f32 %v3124, 0.0
    %v3173 = vmax.f32 %v3125, 0.0
    %v3174 = vmax.f32 %v3126, 0.0
    %v3175 = vmax.f32 %v3127, 0.0
    %v3176 = vmax.f32 %v3128, 0.0
    %v3177 = vmax.f32 %v3129, 0.0
    %v3178 = vmax.f32 %v3130, 0.0
    %v3179 = vmax.f32 %v3131, 0.0
    %v3180 = vmax.f32 %v3132, 0.0
    %v3181 = vmax.f32 %v3133, 0.0
    %v3182 = vmax.f32 %v3134, 0.0
    %v3183 = vmax.f32 %v3135, 0.0
    %v3184 = vmax.f32 %v3136, 0.0
    %v3185 = vmax.f32 %v3137, 0.0
    %v3186 = vmax.f32 %v3138, 0.0
    %v3187 = vsel %vm270, %v3139, 0.0
    %v3188 = vsel %vm270, %v3140, 0.0
    %v3189 = vadd.f32 %v3187, %v3188
    %v3190 = vsel %vm270, %v3141, 0.0
    %v3191 = vadd.f32 %v3189, %v3190
    %v3192 = vsel %vm270, %v3142, 0.0
    %v3193 = vadd.f32 %v3191, %v3192
    %v3194 = vsel %vm270, %v3143, 0.0
    %v3195 = vadd.f32 %v3193, %v3194
    %v3196 = vsel %vm270, %v3144, 0.0
    %v3197 = vadd.f32 %v3195, %v3196
    %v3198 = vrot.slane %v3197, 4
    %v3199 = vadd.f32 %v3197, %v3198
    %v3200 = vrot.slane %v3199, 2
    %v3201 = vadd.f32 %v3199, %v3200
    %v3202 = vrot.slane %v3201, 1
    %v3203 = vadd.f32 %v3201, %v3202
    %v3204 = vsel %vm270, %v3145, 0.0
    %v3205 = vsel %vm270, %v3146, 0.0
    %v3206 = vadd.f32 %v3204, %v3205
    %v3207 = vsel %vm270, %v3147, 0.0
    %v3208 = vadd.f32 %v3206, %v3207
    %v3209 = vsel %vm270, %v3148, 0.0
    %v3210 = vadd.f32 %v3208, %v3209
    %v3211 = vsel %vm270, %v3149, 0.0
    %v3212 = vadd.f32 %v3210, %v3211
    %v3213 = vsel %vm270, %v3150, 0.0
    %v3214 = vadd.f32 %v3212, %v3213
    %v3215 = vrot.slane %v3214, 4
    %v3216 = vadd.f32 %v3214, %v3215
    %v3217 = vrot.slane %v3216, 2
    %v3218 = vadd.f32 %v3216, %v3217
    %v3219 = vrot.slane %v3218, 1
    %v3220 = vadd.f32 %v3218, %v3219
    %v3221 = vsel %vm270, %v3151, 0.0
    %v3222 = vsel %vm270, %v3152, 0.0
    %v3223 = vadd.f32 %v3221, %v3222
    %v3224 = vsel %vm270, %v3153, 0.0
    %v3225 = vadd.f32 %v3223, %v3224
    %v3226 = vsel %vm270, %v3154, 0.0
    %v3227 = vadd.f32 %v3225, %v3226
    %v3228 = vsel %vm270, %v3155, 0.0
    %v3229 = vadd.f32 %v3227, %v3228
    %v3230 = vsel %vm270, %v3156, 0.0
    %v3231 = vadd.f32 %v3229, %v3230
    %v3232 = vrot.slane %v3231, 4
    %v3233 = vadd.f32 %v3231, %v3232
    %v3234 = vrot.slane %v3233, 2
    %v3235 = vadd.f32 %v3233, %v3234
    %v3236 = vrot.slane %v3235, 1
    %v3237 = vadd.f32 %v3235, %v3236
    %v3238 = vsel %vm270, %v3157, 0.0
    %v3239 = vsel %vm270, %v3158, 0.0
    %v3240 = vadd.f32 %v3238, %v3239
    %v3241 = vsel %vm270, %v3159, 0.0
    %v3242 = vadd.f32 %v3240, %v3241
    %v3243 = vsel %vm270, %v3160, 0.0
    %v3244 = vadd.f32 %v3242, %v3243
    %v3245 = vsel %vm270, %v3161, 0.0
    %v3246 = vadd.f32 %v3244, %v3245
    %v3247 = vsel %vm270, %v3162, 0.0
    %v3248 = vadd.f32 %v3246, %v3247
    %v3249 = vrot.slane %v3248, 4
    %v3250 = vadd.f32 %v3248, %v3249
    %v3251 = vrot.slane %v3250, 2
    %v3252 = vadd.f32 %v3250, %v3251
    %v3253 = vrot.slane %v3252, 1
    %v3254 = vadd.f32 %v3252, %v3253
    %v3255 = vsel %vm270, %v3163, 0.0
    %v3256 = vsel %vm270, %v3164, 0.0
    %v3257 = vadd.f32 %v3255, %v3256
    %v3258 = vsel %vm270, %v3165, 0.0
    %v3259 = vadd.f32 %v3257, %v3258
    %v3260 = vsel %vm270, %v3166, 0.0
    %v3261 = vadd.f32 %v3259, %v3260
    %v3262 = vsel %vm270, %v3167, 0.0
    %v3263 = vadd.f32 %v3261, %v3262
    %v3264 = vsel %vm270, %v3168, 0.0
    %v3265 = vadd.f32 %v3263, %v3264
    %v3266 = vrot.slane %v3265, 4
    %v3267 = vadd.f32 %v3265, %v3266
    %v3268 = vrot.slane %v3267, 2
    %v3269 = vadd.f32 %v3267, %v3268
    %v3270 = vrot.slane %v3269, 1
    %v3271 = vadd.f32 %v3269, %v3270
    %v3272 = vsel %vm270, %v3169, 0.0
    %v3273 = vsel %vm270, %v3170, 0.0
    %v3274 = vadd.f32 %v3272, %v3273
    %v3275 = vsel %vm270, %v3171, 0.0
    %v3276 = vadd.f32 %v3274, %v3275
    %v3277 = vsel %vm270, %v3172, 0.0
    %v3278 = vadd.f32 %v3276, %v3277
    %v3279 = vsel %vm270, %v3173, 0.0
    %v3280 = vadd.f32 %v3278, %v3279
    %v3281 = vsel %vm270, %v3174, 0.0
    %v3282 = vadd.f32 %v3280, %v3281
    %v3283 = vrot.slane %v3282, 4
    %v3284 = vadd.f32 %v3282, %v3283
    %v3285 = vrot.slane %v3284, 2
    %v3286 = vadd.f32 %v3284, %v3285
    %v3287 = vrot.slane %v3286, 1
    %v3288 = vadd.f32 %v3286, %v3287
    %v3289 = vsel %vm270, %v3175, 0.0
    %v3290 = vsel %vm270, %v3176, 0.0
    %v3291 = vadd.f32 %v3289, %v3290
    %v3292 = vsel %vm270, %v3177, 0.0
    %v3293 = vadd.f32 %v3291, %v3292
    %v3294 = vsel %vm270, %v3178, 0.0
    %v3295 = vadd.f32 %v3293, %v3294
    %v3296 = vsel %vm270, %v3179, 0.0
    %v3297 = vadd.f32 %v3295, %v3296
    %v3298 = vsel %vm270, %v3180, 0.0
    %v3299 = vadd.f32 %v3297, %v3298
    %v3300 = vrot.slane %v3299, 4
    %v3301 = vadd.f32 %v3299, %v3300
    %v3302 = vrot.slane %v3301, 2
    %v3303 = vadd.f32 %v3301, %v3302
    %v3304 = vrot.slane %v3303, 1
    %v3305 = vadd.f32 %v3303, %v3304
    %v3306 = vsel %vm270, %v3181, 0.0
    %v3307 = vsel %vm270, %v3182, 0.0
    %v3308 = vadd.f32 %v3306, %v3307
    %v3309 = vsel %vm270, %v3183, 0.0
    %v3310 = vadd.f32 %v3308, %v3309
    %v3311 = vsel %vm270, %v3184, 0.0
    %v3312 = vadd.f32 %v3310, %v3311
    %v3313 = vsel %vm270, %v3185, 0.0
    %v3314 = vadd.f32 %v3312, %v3313
    %v3315 = vsel %vm270, %v3186, 0.0
    %v3316 = vadd.f32 %v3314, %v3315
    %v3317 = vrot.slane %v3316, 4
    %v3318 = vadd.f32 %v3316, %v3317
    %v3319 = vrot.slane %v3318, 2
    %v3320 = vadd.f32 %v3318, %v3319
    %v3321 = vrot.slane %v3320, 1
    %v3322 = vadd.f32 %v3320, %v3321
    %v3324 = vrot.slane %v398, 1
    %v3325 = vrot.slane %v398, 2
    %v3326 = vrot.slane %v398, 3
    %v3327 = vrot.slane %v398, 4
    %v3328 = vrot.slane %v398, 5
    %v3329 = vrot.slane %v398, 6
    %v3330 = vrot.slane %v398, 7
    %v3339 = vmul.f32 %v3203, %v398
    %v3340 = vmul.f32 %v3220, %v3324
    %v3341 = vmul.f32 %v3237, %v3325
    %v3342 = vmul.f32 %v3254, %v3326
    %v3343 = vmul.f32 %v3271, %v3327
    %v3344 = vmul.f32 %v3288, %v3328
    %v3345 = vmul.f32 %v3305, %v3329
    %v3346 = vmul.f32 %v3322, %v3330
    %v3355 = vrot.slane %v3340, 7
    %v3356 = vsel %vm977, %v3355, %v3339
    %v3357 = vrot.slane %v3341, 6
    %v3358 = vsel %vm980, %v3357, %v3356
    %v3359 = vrot.slane %v3342, 5
    %v3360 = vsel %vm983, %v3359, %v3358
    %v3361 = vrot.slane %v3343, 4
    %v3362 = vsel %vm986, %v3361, %v3360
    %v3363 = vrot.slane %v3344, 3
    %v3364 = vsel %vm989, %v3363, %v3362
    %v3365 = vrot.slane %v3345, 2
    %v3366 = vsel %vm992, %v3365, %v3364
    %v3367 = vrot.slane %v3346, 1
    %v3368 = vsel %vm995, %v3367, %v3366
    %v3370 = vsel %vm270, %v3368, 0.0
    %v3371 = vrot.slane %v3370, 4
    %v3372 = vadd.f32 %v3370, %v3371
    %v3373 = vrot.slane %v3372, 2
    %v3374 = vadd.f32 %v3372, %v3373
    %v3375 = vrot.slane %v3374, 1
    %v3376 = vadd.f32 %v3374, %v3375
    %v3377 = vadd.f32 %v2784, %v3376
    %v3379 = vcombine.high %v393, %v393
    %v3381 = vunpack.c.l.s4 1966171168
    %v3382 = vunpack.c.0.s8 %v3381
    %v3383 = vlaneseq
    %v3384 = vshrl.u32 %v3383, 7
    %v3385 = vsub.s32 %v3382, %v3384
    %v3386 = vrot.slane %v393, %v3385
    %v3388 = vunpack.c.l.s4 1966171168
    %v3389 = vunpack.c.0.s8 %v3388
    %v3390 = vlaneseq
    %v3391 = vshrl.u32 %v3390, 7
    %v3392 = vsub.s32 %v3389, %v3391
    %v3393 = vrot.slane %v3379, %v3392
    %v3394 = vcombine.high %v3386, %v3386
    %v3395 = vcombine.high %v3393, %v3393
    %v3397 = vunpack.c.l.s4 1966171168
    %v3398 = vunpack.c.0.s8 %v3397
    %v3399 = vlaneseq
    %v3400 = vshrl.u32 %v3399, 7
    %v3401 = vsub.s32 %v3398, %v3400
    %v3402 = vrot.slane %v3386, %v3401
    %v3404 = vunpack.c.l.s4 1966171168
    %v3405 = vunpack.c.0.s8 %v3404
    %v3406 = vlaneseq
    %v3407 = vshrl.u32 %v3406, 7
    %v3408 = vsub.s32 %v3405, %v3407
    %v3409 = vrot.slane %v3393, %v3408
    %v3411 = vunpack.c.l.s4 1966171168
    %v3412 = vunpack.c.0.s8 %v3411
    %v3413 = vlaneseq
    %v3414 = vshrl.u32 %v3413, 7
    %v3415 = vsub.s32 %v3412, %v3414
    %v3416 = vrot.slane %v3394, %v3415
    %v3418 = vunpack.c.l.s4 1966171168
    %v3419 = vunpack.c.0.s8 %v3418
    %v3420 = vlaneseq
    %v3421 = vshrl.u32 %v3420, 7
    %v3422 = vsub.s32 %v3419, %v3421
    %v3423 = vrot.slane %v3395, %v3422
    %v3424 = vcombine.high %v3402, %v3402
    %v3425 = vcombine.high %v3409, %v3409
    %v3426 = vcombine.high %v3416, %v3416
    %v3427 = vcombine.high %v3423, %v3423
    %v3428 = vlaneseq
    %v3429 = vshrl.u32 %v3428, 7
    %v3430 = vsub.s32 0, %v3429
    %v3431 = vrot.slane %v405, %v3430
    %3433 = vbcast.lane.b32.xlu0 %v3431, 256
    %v3434 = vpop.permute.xlu0 %3433
    %s3436 = sor.u32 256, 8
    %3437 = vbcast.lane.b32.xlu0 %v3431, %s3436
    %v3438 = vpop.permute.xlu0 %3437
    %s3440 = sor.u32 256, 16
    %3441 = vbcast.lane.b32.xlu0 %v3431, %s3440
    %v3442 = vpop.permute.xlu0 %3441
    %s3444 = sor.u32 256, 24
    %3445 = vbcast.lane.b32.xlu0 %v3431, %s3444
    %v3446 = vpop.permute.xlu0 %3445
    %s3448 = sor.u32 256, 32
    %3449 = vbcast.lane.b32.xlu0 %v3431, %s3448
    %v3450 = vpop.permute.xlu0 %3449
    %s3452 = sor.u32 256, 40
    %3453 = vbcast.lane.b32.xlu0 %v3431, %s3452
    %v3454 = vpop.permute.xlu0 %3453
    %v3455 = vlaneseq
    %v3456 = vshrl.u32 %v3455, 7
    %v3457 = vsub.s32 1, %v3456
    %v3458 = vrot.slane %v405, %v3457
    %3460 = vbcast.lane.b32.xlu0 %v3458, 256
    %v3461 = vpop.permute.xlu0 %3460
    %s3463 = sor.u32 256, 8
    %3464 = vbcast.lane.b32.xlu0 %v3458, %s3463
    %v3465 = vpop.permute.xlu0 %3464
    %s3467 = sor.u32 256, 16
    %3468 = vbcast.lane.b32.xlu0 %v3458, %s3467
    %v3469 = vpop.permute.xlu0 %3468
    %s3471 = sor.u32 256, 24
    %3472 = vbcast.lane.b32.xlu0 %v3458, %s3471
    %v3473 = vpop.permute.xlu0 %3472
    %s3475 = sor.u32 256, 32
    %3476 = vbcast.lane.b32.xlu0 %v3458, %s3475
    %v3477 = vpop.permute.xlu0 %3476
    %s3479 = sor.u32 256, 40
    %3480 = vbcast.lane.b32.xlu0 %v3458, %s3479
    %v3481 = vpop.permute.xlu0 %3480
    %v3482 = vlaneseq
    %v3483 = vshrl.u32 %v3482, 7
    %v3484 = vsub.s32 2, %v3483
    %v3485 = vrot.slane %v405, %v3484
    %3487 = vbcast.lane.b32.xlu0 %v3485, 256
    %v3488 = vpop.permute.xlu0 %3487
    %s3490 = sor.u32 256, 8
    %3491 = vbcast.lane.b32.xlu0 %v3485, %s3490
    %v3492 = vpop.permute.xlu0 %3491
    %s3494 = sor.u32 256, 16
    %3495 = vbcast.lane.b32.xlu0 %v3485, %s3494
    %v3496 = vpop.permute.xlu0 %3495
    %s3498 = sor.u32 256, 24
    %3499 = vbcast.lane.b32.xlu0 %v3485, %s3498
    %v3500 = vpop.permute.xlu0 %3499
    %s3502 = sor.u32 256, 32
    %3503 = vbcast.lane.b32.xlu0 %v3485, %s3502
    %v3504 = vpop.permute.xlu0 %3503
    %s3506 = sor.u32 256, 40
    %3507 = vbcast.lane.b32.xlu0 %v3485, %s3506
    %v3508 = vpop.permute.xlu0 %3507
    %v3509 = vlaneseq
    %v3510 = vshrl.u32 %v3509, 7
    %v3511 = vsub.s32 3, %v3510
    %v3512 = vrot.slane %v405, %v3511
    %3514 = vbcast.lane.b32.xlu0 %v3512, 256
    %v3515 = vpop.permute.xlu0 %3514
    %s3517 = sor.u32 256, 8
    %3518 = vbcast.lane.b32.xlu0 %v3512, %s3517
    %v3519 = vpop.permute.xlu0 %3518
    %s3521 = sor.u32 256, 16
    %3522 = vbcast.lane.b32.xlu0 %v3512, %s3521
    %v3523 = vpop.permute.xlu0 %3522
    %s3525 = sor.u32 256, 24
    %3526 = vbcast.lane.b32.xlu0 %v3512, %s3525
    %v3527 = vpop.permute.xlu0 %3526
    %s3529 = sor.u32 256, 32
    %3530 = vbcast.lane.b32.xlu0 %v3512, %s3529
    %v3531 = vpop.permute.xlu0 %3530
    %s3533 = sor.u32 256, 40
    %3534 = vbcast.lane.b32.xlu0 %v3512, %s3533
    %v3535 = vpop.permute.xlu0 %3534
    %v3536 = vlaneseq
    %v3537 = vshrl.u32 %v3536, 7
    %v3538 = vsub.s32 4, %v3537
    %v3539 = vrot.slane %v405, %v3538
    %3541 = vbcast.lane.b32.xlu0 %v3539, 256
    %v3542 = vpop.permute.xlu0 %3541
    %s3544 = sor.u32 256, 8
    %3545 = vbcast.lane.b32.xlu0 %v3539, %s3544
    %v3546 = vpop.permute.xlu0 %3545
    %s3548 = sor.u32 256, 16
    %3549 = vbcast.lane.b32.xlu0 %v3539, %s3548
    %v3550 = vpop.permute.xlu0 %3549
    %s3552 = sor.u32 256, 24
    %3553 = vbcast.lane.b32.xlu0 %v3539, %s3552
    %v3554 = vpop.permute.xlu0 %3553
    %s3556 = sor.u32 256, 32
    %3557 = vbcast.lane.b32.xlu0 %v3539, %s3556
    %v3558 = vpop.permute.xlu0 %3557
    %s3560 = sor.u32 256, 40
    %3561 = vbcast.lane.b32.xlu0 %v3539, %s3560
    %v3562 = vpop.permute.xlu0 %3561
    %v3563 = vlaneseq
    %v3564 = vshrl.u32 %v3563, 7
    %v3565 = vsub.s32 5, %v3564
    %v3566 = vrot.slane %v405, %v3565
    %3568 = vbcast.lane.b32.xlu0 %v3566, 256
    %v3569 = vpop.permute.xlu0 %3568
    %s3571 = sor.u32 256, 8
    %3572 = vbcast.lane.b32.xlu0 %v3566, %s3571
    %v3573 = vpop.permute.xlu0 %3572
    %s3575 = sor.u32 256, 16
    %3576 = vbcast.lane.b32.xlu0 %v3566, %s3575
    %v3577 = vpop.permute.xlu0 %3576
    %s3579 = sor.u32 256, 24
    %3580 = vbcast.lane.b32.xlu0 %v3566, %s3579
    %v3581 = vpop.permute.xlu0 %3580
    %s3583 = sor.u32 256, 32
    %3584 = vbcast.lane.b32.xlu0 %v3566, %s3583
    %v3585 = vpop.permute.xlu0 %3584
    %s3587 = sor.u32 256, 40
    %3588 = vbcast.lane.b32.xlu0 %v3566, %s3587
    %v3589 = vpop.permute.xlu0 %3588
    %v3590 = vlaneseq
    %v3591 = vshrl.u32 %v3590, 7
    %v3592 = vsub.s32 6, %v3591
    %v3593 = vrot.slane %v405, %v3592
    %3595 = vbcast.lane.b32.xlu0 %v3593, 256
    %v3596 = vpop.permute.xlu0 %3595
    %s3598 = sor.u32 256, 8
    %3599 = vbcast.lane.b32.xlu0 %v3593, %s3598
    %v3600 = vpop.permute.xlu0 %3599
    %s3602 = sor.u32 256, 16
    %3603 = vbcast.lane.b32.xlu0 %v3593, %s3602
    %v3604 = vpop.permute.xlu0 %3603
    %s3606 = sor.u32 256, 24
    %3607 = vbcast.lane.b32.xlu0 %v3593, %s3606
    %v3608 = vpop.permute.xlu0 %3607
    %s3610 = sor.u32 256, 32
    %3611 = vbcast.lane.b32.xlu0 %v3593, %s3610
    %v3612 = vpop.permute.xlu0 %3611
    %s3614 = sor.u32 256, 40
    %3615 = vbcast.lane.b32.xlu0 %v3593, %s3614
    %v3616 = vpop.permute.xlu0 %3615
    %v3617 = vlaneseq
    %v3618 = vshrl.u32 %v3617, 7
    %v3619 = vsub.s32 7, %v3618
    %v3620 = vrot.slane %v405, %v3619
    %3622 = vbcast.lane.b32.xlu0 %v3620, 256
    %v3623 = vpop.permute.xlu0 %3622
    %s3625 = sor.u32 256, 8
    %3626 = vbcast.lane.b32.xlu0 %v3620, %s3625
    %v3627 = vpop.permute.xlu0 %3626
    %s3629 = sor.u32 256, 16
    %3630 = vbcast.lane.b32.xlu0 %v3620, %s3629
    %v3631 = vpop.permute.xlu0 %3630
    %s3633 = sor.u32 256, 24
    %3634 = vbcast.lane.b32.xlu0 %v3620, %s3633
    %v3635 = vpop.permute.xlu0 %3634
    %s3637 = sor.u32 256, 32
    %3638 = vbcast.lane.b32.xlu0 %v3620, %s3637
    %v3639 = vpop.permute.xlu0 %3638
    %s3641 = sor.u32 256, 40
    %3642 = vbcast.lane.b32.xlu0 %v3620, %s3641
    %v3643 = vpop.permute.xlu0 %3642
    %v3644 = vlaneseq
    %v3645 = vshrl.u32 %v3644, 7
    %v3646 = vsub.s32 0, %v3645
    %v3647 = vrot.slane %v3402, %v3646
    %v3648 = vlaneseq
    %v3649 = vshrl.u32 %v3648, 7
    %v3650 = vsub.s32 0, %v3649
    %v3651 = vrot.slane %v3416, %v3650
    %v3652 = vlaneseq
    %v3653 = vshrl.u32 %v3652, 7
    %v3654 = vsub.s32 0, %v3653
    %v3655 = vrot.slane %v3424, %v3654
    %v3656 = vlaneseq
    %v3657 = vshrl.u32 %v3656, 7
    %v3658 = vsub.s32 0, %v3657
    %v3659 = vrot.slane %v3426, %v3658
    %v3660 = vlaneseq
    %v3661 = vshrl.u32 %v3660, 7
    %v3662 = vsub.s32 0, %v3661
    %v3663 = vrot.slane %v3409, %v3662
    %v3664 = vlaneseq
    %v3665 = vshrl.u32 %v3664, 7
    %v3666 = vsub.s32 0, %v3665
    %v3667 = vrot.slane %v3423, %v3666
    %v3668 = vlaneseq
    %v3669 = vshrl.u32 %v3668, 7
    %v3670 = vsub.s32 0, %v3669
    %v3671 = vrot.slane %v3425, %v3670
    %v3672 = vlaneseq
    %v3673 = vshrl.u32 %v3672, 7
    %v3674 = vsub.s32 0, %v3673
    %v3675 = vrot.slane %v3427, %v3674
    %v3684 = vsub.f32 %v3647, %v3434
    %v3685 = vsub.f32 %v3647, %v3438
    %v3686 = vsub.f32 %v3647, %v3442
    %v3687 = vsub.f32 %v3647, %v3446
    %v3688 = vsub.f32 %v3647, %v3450
    %v3689 = vsub.f32 %v3647, %v3454
    %v3690 = vsub.f32 %v3651, %v3461
    %v3691 = vsub.f32 %v3651, %v3465
    %v3692 = vsub.f32 %v3651, %v3469
    %v3693 = vsub.f32 %v3651, %v3473
    %v3694 = vsub.f32 %v3651, %v3477
    %v3695 = vsub.f32 %v3651, %v3481
    %v3696 = vsub.f32 %v3655, %v3488
    %v3697 = vsub.f32 %v3655, %v3492
    %v3698 = vsub.f32 %v3655, %v3496
    %v3699 = vsub.f32 %v3655, %v3500
    %v3700 = vsub.f32 %v3655, %v3504
    %v3701 = vsub.f32 %v3655, %v3508
    %v3702 = vsub.f32 %v3659, %v3515
    %v3703 = vsub.f32 %v3659, %v3519
    %v3704 = vsub.f32 %v3659, %v3523
    %v3705 = vsub.f32 %v3659, %v3527
    %v3706 = vsub.f32 %v3659, %v3531
    %v3707 = vsub.f32 %v3659, %v3535
    %v3708 = vsub.f32 %v3663, %v3542
    %v3709 = vsub.f32 %v3663, %v3546
    %v3710 = vsub.f32 %v3663, %v3550
    %v3711 = vsub.f32 %v3663, %v3554
    %v3712 = vsub.f32 %v3663, %v3558
    %v3713 = vsub.f32 %v3663, %v3562
    %v3714 = vsub.f32 %v3667, %v3569
    %v3715 = vsub.f32 %v3667, %v3573
    %v3716 = vsub.f32 %v3667, %v3577
    %v3717 = vsub.f32 %v3667, %v3581
    %v3718 = vsub.f32 %v3667, %v3585
    %v3719 = vsub.f32 %v3667, %v3589
    %v3720 = vsub.f32 %v3671, %v3596
    %v3721 = vsub.f32 %v3671, %v3600
    %v3722 = vsub.f32 %v3671, %v3604
    %v3723 = vsub.f32 %v3671, %v3608
    %v3724 = vsub.f32 %v3671, %v3612
    %v3725 = vsub.f32 %v3671, %v3616
    %v3726 = vsub.f32 %v3675, %v3623
    %v3727 = vsub.f32 %v3675, %v3627
    %v3728 = vsub.f32 %v3675, %v3631
    %v3729 = vsub.f32 %v3675, %v3635
    %v3730 = vsub.f32 %v3675, %v3639
    %v3731 = vsub.f32 %v3675, %v3643
    %v3732 = vmax.f32 %v3684, 0.0
    %v3733 = vmax.f32 %v3685, 0.0
    %v3734 = vmax.f32 %v3686, 0.0
    %v3735 = vmax.f32 %v3687, 0.0
    %v3736 = vmax.f32 %v3688, 0.0
    %v3737 = vmax.f32 %v3689, 0.0
    %v3738 = vmax.f32 %v3690, 0.0
    %v3739 = vmax.f32 %v3691, 0.0
    %v3740 = vmax.f32 %v3692, 0.0
    %v3741 = vmax.f32 %v3693, 0.0
    %v3742 = vmax.f32 %v3694, 0.0
    %v3743 = vmax.f32 %v3695, 0.0
    %v3744 = vmax.f32 %v3696, 0.0
    %v3745 = vmax.f32 %v3697, 0.0
    %v3746 = vmax.f32 %v3698, 0.0
    %v3747 = vmax.f32 %v3699, 0.0
    %v3748 = vmax.f32 %v3700, 0.0
    %v3749 = vmax.f32 %v3701, 0.0
    %v3750 = vmax.f32 %v3702, 0.0
    %v3751 = vmax.f32 %v3703, 0.0
    %v3752 = vmax.f32 %v3704, 0.0
    %v3753 = vmax.f32 %v3705, 0.0
    %v3754 = vmax.f32 %v3706, 0.0
    %v3755 = vmax.f32 %v3707, 0.0
    %v3756 = vmax.f32 %v3708, 0.0
    %v3757 = vmax.f32 %v3709, 0.0
    %v3758 = vmax.f32 %v3710, 0.0
    %v3759 = vmax.f32 %v3711, 0.0
    %v3760 = vmax.f32 %v3712, 0.0
    %v3761 = vmax.f32 %v3713, 0.0
    %v3762 = vmax.f32 %v3714, 0.0
    %v3763 = vmax.f32 %v3715, 0.0
    %v3764 = vmax.f32 %v3716, 0.0
    %v3765 = vmax.f32 %v3717, 0.0
    %v3766 = vmax.f32 %v3718, 0.0
    %v3767 = vmax.f32 %v3719, 0.0
    %v3768 = vmax.f32 %v3720, 0.0
    %v3769 = vmax.f32 %v3721, 0.0
    %v3770 = vmax.f32 %v3722, 0.0
    %v3771 = vmax.f32 %v3723, 0.0
    %v3772 = vmax.f32 %v3724, 0.0
    %v3773 = vmax.f32 %v3725, 0.0
    %v3774 = vmax.f32 %v3726, 0.0
    %v3775 = vmax.f32 %v3727, 0.0
    %v3776 = vmax.f32 %v3728, 0.0
    %v3777 = vmax.f32 %v3729, 0.0
    %v3778 = vmax.f32 %v3730, 0.0
    %v3779 = vmax.f32 %v3731, 0.0
    %v3780 = vsel %vm270, %v3732, 0.0
    %v3781 = vsel %vm270, %v3733, 0.0
    %v3782 = vadd.f32 %v3780, %v3781
    %v3783 = vsel %vm270, %v3734, 0.0
    %v3784 = vadd.f32 %v3782, %v3783
    %v3785 = vsel %vm270, %v3735, 0.0
    %v3786 = vadd.f32 %v3784, %v3785
    %v3787 = vsel %vm270, %v3736, 0.0
    %v3788 = vadd.f32 %v3786, %v3787
    %v3789 = vsel %vm270, %v3737, 0.0
    %v3790 = vadd.f32 %v3788, %v3789
    %v3791 = vrot.slane %v3790, 4
    %v3792 = vadd.f32 %v3790, %v3791
    %v3793 = vrot.slane %v3792, 2
    %v3794 = vadd.f32 %v3792, %v3793
    %v3795 = vrot.slane %v3794, 1
    %v3796 = vadd.f32 %v3794, %v3795
    %v3797 = vsel %vm270, %v3738, 0.0
    %v3798 = vsel %vm270, %v3739, 0.0
    %v3799 = vadd.f32 %v3797, %v3798
    %v3800 = vsel %vm270, %v3740, 0.0
    %v3801 = vadd.f32 %v3799, %v3800
    %v3802 = vsel %vm270, %v3741, 0.0
    %v3803 = vadd.f32 %v3801, %v3802
    %v3804 = vsel %vm270, %v3742, 0.0
    %v3805 = vadd.f32 %v3803, %v3804
    %v3806 = vsel %vm270, %v3743, 0.0
    %v3807 = vadd.f32 %v3805, %v3806
    %v3808 = vrot.slane %v3807, 4
    %v3809 = vadd.f32 %v3807, %v3808
    %v3810 = vrot.slane %v3809, 2
    %v3811 = vadd.f32 %v3809, %v3810
    %v3812 = vrot.slane %v3811, 1
    %v3813 = vadd.f32 %v3811, %v3812
    %v3814 = vsel %vm270, %v3744, 0.0
    %v3815 = vsel %vm270, %v3745, 0.0
    %v3816 = vadd.f32 %v3814, %v3815
    %v3817 = vsel %vm270, %v3746, 0.0
    %v3818 = vadd.f32 %v3816, %v3817
    %v3819 = vsel %vm270, %v3747, 0.0
    %v3820 = vadd.f32 %v3818, %v3819
    %v3821 = vsel %vm270, %v3748, 0.0
    %v3822 = vadd.f32 %v3820, %v3821
    %v3823 = vsel %vm270, %v3749, 0.0
    %v3824 = vadd.f32 %v3822, %v3823
    %v3825 = vrot.slane %v3824, 4
    %v3826 = vadd.f32 %v3824, %v3825
    %v3827 = vrot.slane %v3826, 2
    %v3828 = vadd.f32 %v3826, %v3827
    %v3829 = vrot.slane %v3828, 1
    %v3830 = vadd.f32 %v3828, %v3829
    %v3831 = vsel %vm270, %v3750, 0.0
    %v3832 = vsel %vm270, %v3751, 0.0
    %v3833 = vadd.f32 %v3831, %v3832
    %v3834 = vsel %vm270, %v3752, 0.0
    %v3835 = vadd.f32 %v3833, %v3834
    %v3836 = vsel %vm270, %v3753, 0.0
    %v3837 = vadd.f32 %v3835, %v3836
    %v3838 = vsel %vm270, %v3754, 0.0
    %v3839 = vadd.f32 %v3837, %v3838
    %v3840 = vsel %vm270, %v3755, 0.0
    %v3841 = vadd.f32 %v3839, %v3840
    %v3842 = vrot.slane %v3841, 4
    %v3843 = vadd.f32 %v3841, %v3842
    %v3844 = vrot.slane %v3843, 2
    %v3845 = vadd.f32 %v3843, %v3844
    %v3846 = vrot.slane %v3845, 1
    %v3847 = vadd.f32 %v3845, %v3846
    %v3848 = vsel %vm270, %v3756, 0.0
    %v3849 = vsel %vm270, %v3757, 0.0
    %v3850 = vadd.f32 %v3848, %v3849
    %v3851 = vsel %vm270, %v3758, 0.0
    %v3852 = vadd.f32 %v3850, %v3851
    %v3853 = vsel %vm270, %v3759, 0.0
    %v3854 = vadd.f32 %v3852, %v3853
    %v3855 = vsel %vm270, %v3760, 0.0
    %v3856 = vadd.f32 %v3854, %v3855
    %v3857 = vsel %vm270, %v3761, 0.0
    %v3858 = vadd.f32 %v3856, %v3857
    %v3859 = vrot.slane %v3858, 4
    %v3860 = vadd.f32 %v3858, %v3859
    %v3861 = vrot.slane %v3860, 2
    %v3862 = vadd.f32 %v3860, %v3861
    %v3863 = vrot.slane %v3862, 1
    %v3864 = vadd.f32 %v3862, %v3863
    %v3865 = vsel %vm270, %v3762, 0.0
    %v3866 = vsel %vm270, %v3763, 0.0
    %v3867 = vadd.f32 %v3865, %v3866
    %v3868 = vsel %vm270, %v3764, 0.0
    %v3869 = vadd.f32 %v3867, %v3868
    %v3870 = vsel %vm270, %v3765, 0.0
    %v3871 = vadd.f32 %v3869, %v3870
    %v3872 = vsel %vm270, %v3766, 0.0
    %v3873 = vadd.f32 %v3871, %v3872
    %v3874 = vsel %vm270, %v3767, 0.0
    %v3875 = vadd.f32 %v3873, %v3874
    %v3876 = vrot.slane %v3875, 4
    %v3877 = vadd.f32 %v3875, %v3876
    %v3878 = vrot.slane %v3877, 2
    %v3879 = vadd.f32 %v3877, %v3878
    %v3880 = vrot.slane %v3879, 1
    %v3881 = vadd.f32 %v3879, %v3880
    %v3882 = vsel %vm270, %v3768, 0.0
    %v3883 = vsel %vm270, %v3769, 0.0
    %v3884 = vadd.f32 %v3882, %v3883
    %v3885 = vsel %vm270, %v3770, 0.0
    %v3886 = vadd.f32 %v3884, %v3885
    %v3887 = vsel %vm270, %v3771, 0.0
    %v3888 = vadd.f32 %v3886, %v3887
    %v3889 = vsel %vm270, %v3772, 0.0
    %v3890 = vadd.f32 %v3888, %v3889
    %v3891 = vsel %vm270, %v3773, 0.0
    %v3892 = vadd.f32 %v3890, %v3891
    %v3893 = vrot.slane %v3892, 4
    %v3894 = vadd.f32 %v3892, %v3893
    %v3895 = vrot.slane %v3894, 2
    %v3896 = vadd.f32 %v3894, %v3895
    %v3897 = vrot.slane %v3896, 1
    %v3898 = vadd.f32 %v3896, %v3897
    %v3899 = vsel %vm270, %v3774, 0.0
    %v3900 = vsel %vm270, %v3775, 0.0
    %v3901 = vadd.f32 %v3899, %v3900
    %v3902 = vsel %vm270, %v3776, 0.0
    %v3903 = vadd.f32 %v3901, %v3902
    %v3904 = vsel %vm270, %v3777, 0.0
    %v3905 = vadd.f32 %v3903, %v3904
    %v3906 = vsel %vm270, %v3778, 0.0
    %v3907 = vadd.f32 %v3905, %v3906
    %v3908 = vsel %vm270, %v3779, 0.0
    %v3909 = vadd.f32 %v3907, %v3908
    %v3910 = vrot.slane %v3909, 4
    %v3911 = vadd.f32 %v3909, %v3910
    %v3912 = vrot.slane %v3911, 2
    %v3913 = vadd.f32 %v3911, %v3912
    %v3914 = vrot.slane %v3913, 1
    %v3915 = vadd.f32 %v3913, %v3914
    %v3917 = vrot.slane %v399, 1
    %v3918 = vrot.slane %v399, 2
    %v3919 = vrot.slane %v399, 3
    %v3920 = vrot.slane %v399, 4
    %v3921 = vrot.slane %v399, 5
    %v3922 = vrot.slane %v399, 6
    %v3923 = vrot.slane %v399, 7
    %v3932 = vmul.f32 %v3796, %v399
    %v3933 = vmul.f32 %v3813, %v3917
    %v3934 = vmul.f32 %v3830, %v3918
    %v3935 = vmul.f32 %v3847, %v3919
    %v3936 = vmul.f32 %v3864, %v3920
    %v3937 = vmul.f32 %v3881, %v3921
    %v3938 = vmul.f32 %v3898, %v3922
    %v3939 = vmul.f32 %v3915, %v3923
    %v3948 = vrot.slane %v3933, 7
    %v3949 = vsel %vm977, %v3948, %v3932
    %v3950 = vrot.slane %v3934, 6
    %v3951 = vsel %vm980, %v3950, %v3949
    %v3952 = vrot.slane %v3935, 5
    %v3953 = vsel %vm983, %v3952, %v3951
    %v3954 = vrot.slane %v3936, 4
    %v3955 = vsel %vm986, %v3954, %v3953
    %v3956 = vrot.slane %v3937, 3
    %v3957 = vsel %vm989, %v3956, %v3955
    %v3958 = vrot.slane %v3938, 2
    %v3959 = vsel %vm992, %v3958, %v3957
    %v3960 = vrot.slane %v3939, 1
    %v3961 = vsel %vm995, %v3960, %v3959
    %v3963 = vsel %vm270, %v3961, 0.0
    %v3964 = vrot.slane %v3963, 4
    %v3965 = vadd.f32 %v3963, %v3964
    %v3966 = vrot.slane %v3965, 2
    %v3967 = vadd.f32 %v3965, %v3966
    %v3968 = vrot.slane %v3967, 1
    %v3969 = vadd.f32 %v3967, %v3968
    %v3970 = vadd.f32 %v3377, %v3969
    %vm3971 = vcmask 385024
    %v3972 = vsel %vm3971, %v3970, 0.0
    %3973 = vadd.xlane.f32.xlu0 %v3972
    %v3974 = vpop.xlane.xlu0 %3973
    %v3975 = vrot.slane %v3974, 4
    %v3976 = vadd.f32 %v3974, %v3975
    %v3977 = vrot.slane %v3976, 2
    %v3978 = vadd.f32 %v3976, %v3977
    %v3979 = vrot.slane %v3978, 1
    %v3980 = vadd.f32 %v3978, %v3979
    %s3981 = vtos %v3980
    %s3982 = smax.f32 %s387, 1.0
    %v3983 = vstv %s3982
    %v3984 = vrcp.pop %v3983
    %s3985 = vtos %v3984
    %s3986 = smul.f32 %s3981, %s3985
    %s3987 = scalar_lea.smem [#allocation2], 0
    %3988 = sst [smem:[%s3987]] %s3986
    // Predicated region
    $region14: #{hinge_loss.1} parent=1 // pred_check
      _
    $region15: #{hinge_loss.1} parent=1 // pred_check_branch
      %3990 = sbr.rel (0) target = $region17
    $region16: #{hinge_loss.1} parent=1 // pred_region
      %s3992 = ssub.s32 16, 16
      %3993 = vsyncadd [#allocation3], %s3992
      %3996 = dma.smem_to_hbm [#allocation2], 16, %s3, [#allocation3]
    $region17: #{hinge_loss.1} parent=1 // pred_fallthru
      _
    // Predicated region
    $region18: #{hinge_loss.1} parent=1 // pred_check
      _
    $region19: #{hinge_loss.1} parent=1 // pred_check_branch
      %3998 = sbr.rel (0) target = $region21
    $region20: #{hinge_loss.1} parent=1 // pred_region
      %3999 = dma.done [#allocation3], 16
    $region21: #{hinge_loss.1} parent=1 // pred_fallthru
      _
    %4000 = sfence
    %4001 = vsyncpa [#allocation3], 1

</llo_original>
